<compile_context>
chip_gen: v5e
topology: v5e:2x2
jax: 0.10.0
libtpu: 0.0.40
codegen_flags: <defaults>
</compile_context>

<pallas_src>
import functools

import jax
import jax.numpy as jnp
from jax.experimental import pallas as pl
from jax.experimental.pallas import tpu as pltpu

_EPS = 1e-5  # nn.BatchNorm2d default eps


# ------------------------------- Pallas kernel ------------------------------ #

def _bottleneck_kernel(
    x_ref,                                   # (N, H, W, Cin)  f32, NHWC
    ws_ref, bs_ref, gs_ref, es_ref,          # skip  : 3x3/s   w (9Cin, Cout) bf16; b/gamma/beta (1, Cout) f32
    w1_ref, b1_ref, g1_ref, e1_ref,          # first : 1x1/1   w (Cin,  mid ) bf16
    w2_ref, b2_ref, g2_ref, e2_ref,          # second: 3x3/s   w (9mid, mid ) bf16
    w3_ref, b3_ref, g3_ref, e3_ref,          # third : 1x1/1   w (mid,  Cout) bf16
    o_ref,                                   # (Cout, N*Ho*Wo) f32  (lane-dense store)
    xpad_ref,                                # VMEM scratch (N, H+2, W+2, Cin) f32
    hpad_ref,                                # VMEM scratch (N, H+2, W+2, mid) f32
    *, stride, eps,
):
    N, H, W, Cin = x_ref.shape
    mid = w1_ref.shape[-1]
    Ho = (H - 1) // stride + 1               # k=3, pad=1
    Wo = (W - 1) // stride + 1
    Mi = N * H * W
    Mo = N * Ho * Wo

    def conv3x3(pad_ref, w_ref):
        # im2col: 9 shifted (strided) reads of the zero-padded input, lane-concat
        # into (N, Ho, Wo, 9*C), then ONE MXU matmul (Mo, 9C) @ (9C, Cout).
        taps = []
        for i in range(3):                   # static unroll over taps
            for j in range(3):
                if stride == 1:
                    taps.append(pad_ref[:, pl.ds(i, Ho), pl.ds(j, Wo), :])
                else:
                    taps.append(pad_ref[:, pl.ds(i, Ho, stride),
                                           pl.ds(j, Wo, stride), :])
        cols = jnp.concatenate(taps, axis=-1)
        cols = cols.reshape(Mo, cols.shape[-1]).astype(jnp.bfloat16)
        return jnp.dot(cols, w_ref[...], preferred_element_type=jnp.float32)

    def bn_relu(acc, b_ref, g_ref, e_ref, m):
        # conv bias -> BatchNorm2d (training mode: biased batch stats over all
        # N*H*W positions, one pass: var = E[x^2] - mean^2) -> ReLU, all in f32.
        acc = acc + b_ref[...]
        inv_m = 1.0 / m
        s1 = jnp.sum(acc, axis=0, keepdims=True)
        s2 = jnp.sum(acc * acc, axis=0, keepdims=True)
        mean = s1 * inv_m
        var = jnp.maximum(s2 * inv_m - mean * mean, 0.0)
        y = (acc - mean) * (g_ref[...] * jax.lax.rsqrt(var + eps)) + e_ref[...]
        return jnp.maximum(y, 0.0)

    x = x_ref[...]                                        # (N, H, W, Cin) f32

    # Zero-pad x inside VMEM for the 3x3 skip conv (no HBM pad round-trip).
    xpad_ref[...] = jnp.zeros(xpad_ref.shape, xpad_ref.dtype)
    xpad_ref[:, 1:H + 1, 1:W + 1, :] = x

    # skip branch: Conv2d(Cin, Cout, 3, stride, 1) + BN + ReLU
    skip = bn_relu(conv3x3(xpad_ref, ws_ref), bs_ref, gs_ref, es_ref, Mo)

    # first: Conv2d(Cin, mid, 1, 1, 0) + BN + ReLU  (1x1 conv == plain matmul)
    h1 = jnp.dot(x.reshape(Mi, Cin).astype(jnp.bfloat16), w1_ref[...],
                 preferred_element_type=jnp.float32)
    h1 = bn_relu(h1, b1_ref, g1_ref, e1_ref, Mi)          # (Mi, mid) f32

    # second: Conv2d(mid, mid, 3, stride, 1) + BN + ReLU  (pad h1 inside VMEM)
    hpad_ref[...] = jnp.zeros(hpad_ref.shape, hpad_ref.dtype)
    hpad_ref[:, 1:H + 1, 1:W + 1, :] = h1.reshape(N, H, W, mid)
    h2 = bn_relu(conv3x3(hpad_ref, w2_ref), b2_ref, g2_ref, e2_ref, Mo)

    # third: Conv2d(mid, Cout, 1, 1, 0) + BN + ReLU
    h3 = jnp.dot(h2.astype(jnp.bfloat16), w3_ref[...],
                 preferred_element_type=jnp.float32)
    h3 = bn_relu(h3, b3_ref, g3_ref, e3_ref, Mo)          # (Mo, Cout) f32

    # residual add + final ReLU; lane-dense (Cout, N*Ho*Wo) store (unmasked vst).
    out = jnp.maximum(h3 + skip, 0.0)
    o_ref[...] = jnp.transpose(out).astype(o_ref.dtype)


# ------------------------------- host wrapper ------------------------------- #

def resnet_bottleneck_forward(x_nchw, kparams, *, downsampling):
    """Forward pass of ResNet_BottleNeck as a single fused Pallas kernel."""
    stride = 2 if downsampling else 1
    N, Cin, H, W = x_nchw.shape
    mid = kparams["w1"].shape[-1]
    Cout = kparams["w3"].shape[-1]
    Ho = (H - 1) // stride + 1
    Wo = (W - 1) // stride + 1

    x = jnp.transpose(x_nchw, (0, 2, 3, 1))               # NCHW -> NHWC (channels on lanes)

    args = (
        x,
        kparams["ws"], kparams["bs"], kparams["gs"], kparams["es"],
        kparams["w1"], kparams["b1"], kparams["g1"], kparams["e1"],
        kparams["w2"], kparams["b2"], kparams["g2"], kparams["e2"],
        kparams["w3"], kparams["b3"], kparams["g3"], kparams["e3"],
    )
    vmem = pl.BlockSpec(memory_space=pltpu.MemorySpace.VMEM)

    out_t = pl.pallas_call(
        functools.partial(_bottleneck_kernel, stride=stride, eps=_EPS),
        out_shape=jax.ShapeDtypeStruct((Cout, N * Ho * Wo), x.dtype),
        in_specs=[vmem] * len(args),
        out_specs=vmem,
        scratch_shapes=[
            pltpu.VMEM((N, H + 2, W + 2, Cin), jnp.float32),   # padded x
            pltpu.VMEM((N, H + 2, W + 2, mid), jnp.float32),   # padded h1
        ],
        compiler_params=pltpu.CompilerParams(
            vmem_limit_bytes=32 * 1024 * 1024),                # below physical on v5e/v6e/v7x
    )(*args)

    # (Cout, N*Ho*Wo) -> (N, Cout, Ho, Wo)  (PyTorch NCHW)
    return jnp.transpose(out_t.reshape(Cout, N, Ho, Wo), (1, 0, 2, 3))


# -------------------------------- parameters -------------------------------- #

def init_params(key, in_channel, out_channel):
    """Deterministic synthetic parameters in PyTorch layouts (OIHW conv weights)."""
    mid = out_channel // 4

    def branch(k, cin, cout, ksize):
        k1, k2, k3, k4 = jax.random.split(k, 4)
        fan_in = cin * ksize * ksize
        w = jax.random.normal(k1, (cout, cin, ksize, ksize), jnp.float32) / jnp.sqrt(fan_in)
        b = 0.1 * jax.random.normal(k2, (cout,), jnp.float32)
        gamma = 1.0 + 0.1 * jax.random.normal(k3, (cout,), jnp.float32)
        beta = 0.1 * jax.random.normal(k4, (cout,), jnp.float32)
        return dict(w=w, b=b, gamma=gamma, beta=beta)

    ks, k1, k2, k3 = jax.random.split(key, 4)
    return dict(
        skip=branch(ks, in_channel, out_channel, 3),   # Conv2d(in, out, 3, s, 1)
        first=branch(k1, in_channel, mid, 1),          # Conv2d(in, out//4, 1, 1, 0)
        second=branch(k2, mid, mid, 3),                # Conv2d(out//4, out//4, 3, s, 1)
        third=branch(k3, mid, out_channel, 1),         # Conv2d(out//4, out, 1, 1, 0)
    )


def prepare_kernel_params(params):
    """One-time (out of the hot path) layout/dtype prep for the fused kernel.

    Conv weights: OIHW -> HWIO -> (K*K*Cin, Cout), pre-cast to bf16 (MXU inputs).
    Conv bias / BN gamma / BN beta: (1, C) f32 rows.
    """
    def conv_w(w_oihw):
        cout, cin, kh, kw = w_oihw.shape
        w = jnp.transpose(w_oihw, (2, 3, 1, 0))        # OIHW -> HWIO
        return w.reshape(kh * kw * cin, cout).astype(jnp.bfloat16)

    def row(v):
        return v.reshape(1, -1).astype(jnp.float32)

    out = {}
    for tag, name in (("s", "skip"), ("1", "first"), ("2", "second"), ("3", "third")):
        p = params[name]
        out["w" + tag] = conv_w(p["w"])
        out["b" + tag] = row(p["b"])
        out["g" + tag] = row(p["gamma"])
        out["e" + tag] = row(p["beta"])
    return out


# ----------------------------- pure-JAX reference ---------------------------- #

def _reference_block(x, w_oihw, b, gamma, beta, stride, padding, eps=_EPS):
    """Conv2d + training-mode BatchNorm2d + ReLU, with the conv evaluated at the
    same precision as the kernel (bf16 conv inputs, f32 accumulation)."""
    w = jnp.transpose(w_oihw, (2, 3, 1, 0)).astype(jnp.bfloat16)
    y = jax.lax.conv_general_dilated(
        x.astype(jnp.bfloat16), w, (stride, stride),
        [(padding, padding), (padding, padding)],
        dimension_numbers=("NHWC", "HWIO", "NHWC"),
        preferred_element_type=jnp.float32)
    y = y + b.reshape(1, 1, 1, -1)
    mean = jnp.mean(y, axis=(0, 1, 2), keepdims=True)
    var = jnp.mean(jnp.square(y - mean), axis=(0, 1, 2), keepdims=True)
    y = (y - mean) * (gamma.reshape(1, 1, 1, -1) * jax.lax.rsqrt(var + eps))
    y = y + beta.reshape(1, 1, 1, -1)
    return jnp.maximum(y, 0.0)


def _reference_forward(x_nchw, params, downsampling):
    stride = 2 if downsampling else 1
    x = jnp.transpose(x_nchw, (0, 2, 3, 1))
    p = params
    skip = _reference_block(x, p["skip"]["w"], p["skip"]["b"],
                            p["skip"]["gamma"], p["skip"]["beta"], stride, 1)
    h = _reference_block(x, p["first"]["w"], p["first"]["b"],
                         p["first"]["gamma"], p["first"]["beta"], 1, 0)
    h = _reference_block(h, p["second"]["w"], p["second"]["b"],
                         p["second"]["gamma"], p["second"]["beta"], stride, 1)
    h = _reference_block(h, p["third"]["w"], p["third"]["b"],
                         p["third"]["gamma"], p["third"]["beta"], 1, 0)
    out = jnp.maximum(h + skip, 0.0)
    return jnp.transpose(out, (0, 3, 1, 2))


# ----------------------------------- main ------------------------------------ #

if __name__ == "__main__":
    key = jax.random.PRNGKey(0)
    kx, kp = jax.random.split(key)

    in_channel, out_channel, downsampling = 8, 16, True
    x = jax.random.normal(kx, (2, in_channel, 16, 16), jnp.float32)  # NCHW, like PyTorch
    params = init_params(kp, in_channel, out_channel)
    kparams = prepare_kernel_params(params)        # hoisted out of the hot path

    fwd = jax.jit(functools.partial(resnet_bottleneck_forward,
                                    downsampling=downsampling))
    out = jax.block_until_ready(fwd(x, kparams))

    ref = _reference_forward(x, params, downsampling)
    assert out.shape == ref.shape, (out.shape, ref.shape)
    err = jnp.abs(out - ref)
    max_err = float(jnp.max(err))
    mean_err = float(jnp.mean(err))
    # Both kernel and reference feed bf16 to the matmul/conv units with f32
    # accumulation; a handful of intermediate activations can round to a
    # neighbouring bf16 value between the two implementations (one ulp), which
    # BN can amplify locally — hence the looser max-error bound vs. the tight
    # mean-error bound.
    assert mean_err < 1e-2, f"mean abs err too large: {mean_err}"
    assert max_err < 1e-1, f"max abs err too large: {max_err}"
    print("KERNEL_OK")
</pallas_src>

<mosaic_0001>
module attributes {stable_mosaic.version = 11 : i64} {
  func.func @_bottleneck_kernel(%arg0: memref<2x16x16x8xf32, #tpu.memory_space<vmem>>, %arg1: memref<72x16xbf16, #tpu.memory_space<vmem>>, %arg2: memref<1x16xf32, #tpu.memory_space<vmem>>, %arg3: memref<1x16xf32, #tpu.memory_space<vmem>>, %arg4: memref<1x16xf32, #tpu.memory_space<vmem>>, %arg5: memref<8x4xbf16, #tpu.memory_space<vmem>>, %arg6: memref<1x4xf32, #tpu.memory_space<vmem>>, %arg7: memref<1x4xf32, #tpu.memory_space<vmem>>, %arg8: memref<1x4xf32, #tpu.memory_space<vmem>>, %arg9: memref<36x4xbf16, #tpu.memory_space<vmem>>, %arg10: memref<1x4xf32, #tpu.memory_space<vmem>>, %arg11: memref<1x4xf32, #tpu.memory_space<vmem>>, %arg12: memref<1x4xf32, #tpu.memory_space<vmem>>, %arg13: memref<4x16xbf16, #tpu.memory_space<vmem>>, %arg14: memref<1x16xf32, #tpu.memory_space<vmem>>, %arg15: memref<1x16xf32, #tpu.memory_space<vmem>>, %arg16: memref<1x16xf32, #tpu.memory_space<vmem>>, %arg17: memref<16x128xf32, #tpu.memory_space<vmem>>, %arg18: memref<2x18x18x8xf32, #tpu.memory_space<vmem>>, %arg19: memref<2x18x18x4xf32, #tpu.memory_space<vmem>>) attributes {dimension_semantics = [], scalar_prefetch = 0 : i64, scratch_operands = 2 : i64, tpu.core_type = #tpu.core_type<tc>} {
    %c0 = arith.constant 0 : index
    %c0_0 = arith.constant 0 : index
    %c0_1 = arith.constant 0 : index
    %c0_2 = arith.constant 0 : index
    %0 = vector.load %arg0[%c0, %c0_0, %c0_1, %c0_2] : memref<2x16x16x8xf32, #tpu.memory_space<vmem>>, vector<2x16x16x8xf32>
    %cst = arith.constant 0.000000e+00 : f32
    %1 = vector.broadcast %cst : f32 to vector<2x18x18x8xf32>
    %c0_3 = arith.constant 0 : index
    %c0_4 = arith.constant 0 : index
    %c0_5 = arith.constant 0 : index
    %c0_6 = arith.constant 0 : index
    %2 = vector.load %arg18[%c0_3, %c0_4, %c0_5, %c0_6] : memref<2x18x18x8xf32, #tpu.memory_space<vmem>>, vector<2x18x18x8xf32>
    tpu.vector_store %arg18[%c0_3, %c0_4, %c0_5, %c0_6], %1 {strides = array<i32>} : memref<2x18x18x8xf32, #tpu.memory_space<vmem>>, vector<2x18x18x8xf32>,
    %c0_7 = arith.constant 0 : index
    %c1 = arith.constant 1 : index
    %c1_8 = arith.constant 1 : index
    %c0_9 = arith.constant 0 : index
    %3 = vector.load %arg18[%c0_7, %c1, %c1_8, %c0_9] : memref<2x18x18x8xf32, #tpu.memory_space<vmem>>, vector<2x16x16x8xf32>
    tpu.vector_store %arg18[%c0_7, %c1, %c1_8, %c0_9], %0 {strides = array<i32>} : memref<2x18x18x8xf32, #tpu.memory_space<vmem>>, vector<2x16x16x8xf32>,
    %c0_10 = arith.constant 0 : index
    %c0_11 = arith.constant 0 : index
    %c0_12 = arith.constant 0 : index
    %c0_13 = arith.constant 0 : index
    %4 = tpu.strided_load %arg18[%c0_10, %c0_11, %c0_12, %c0_13] {strides = array<i32: 1, 2, 2, 1>} : memref<2x18x18x8xf32, #tpu.memory_space<vmem>>, vector<2x8x8x8xf32>
    %c0_14 = arith.constant 0 : index
    %c0_15 = arith.constant 0 : index
    %c1_16 = arith.constant 1 : index
    %c0_17 = arith.constant 0 : index
    %5 = tpu.strided_load %arg18[%c0_14, %c0_15, %c1_16, %c0_17] {strides = array<i32: 1, 2, 2, 1>} : memref<2x18x18x8xf32, #tpu.memory_space<vmem>>, vector<2x8x8x8xf32>
    %c0_18 = arith.constant 0 : index
    %c0_19 = arith.constant 0 : index
    %c2 = arith.constant 2 : index
    %c0_20 = arith.constant 0 : index
    %6 = tpu.strided_load %arg18[%c0_18, %c0_19, %c2, %c0_20] {strides = array<i32: 1, 2, 2, 1>} : memref<2x18x18x8xf32, #tpu.memory_space<vmem>>, vector<2x8x8x8xf32>
    %c0_21 = arith.constant 0 : index
    %c1_22 = arith.constant 1 : index
    %c0_23 = arith.constant 0 : index
    %c0_24 = arith.constant 0 : index
    %7 = tpu.strided_load %arg18[%c0_21, %c1_22, %c0_23, %c0_24] {strides = array<i32: 1, 2, 2, 1>} : memref<2x18x18x8xf32, #tpu.memory_space<vmem>>, vector<2x8x8x8xf32>
    %c0_25 = arith.constant 0 : index
    %c1_26 = arith.constant 1 : index
    %c1_27 = arith.constant 1 : index
    %c0_28 = arith.constant 0 : index
    %8 = tpu.strided_load %arg18[%c0_25, %c1_26, %c1_27, %c0_28] {strides = array<i32: 1, 2, 2, 1>} : memref<2x18x18x8xf32, #tpu.memory_space<vmem>>, vector<2x8x8x8xf32>
    %c0_29 = arith.constant 0 : index
    %c1_30 = arith.constant 1 : index
    %c2_31 = arith.constant 2 : index
    %c0_32 = arith.constant 0 : index
    %9 = tpu.strided_load %arg18[%c0_29, %c1_30, %c2_31, %c0_32] {strides = array<i32: 1, 2, 2, 1>} : memref<2x18x18x8xf32, #tpu.memory_space<vmem>>, vector<2x8x8x8xf32>
    %c0_33 = arith.constant 0 : index
    %c2_34 = arith.constant 2 : index
    %c0_35 = arith.constant 0 : index
    %c0_36 = arith.constant 0 : index
    %10 = tpu.strided_load %arg18[%c0_33, %c2_34, %c0_35, %c0_36] {strides = array<i32: 1, 2, 2, 1>} : memref<2x18x18x8xf32, #tpu.memory_space<vmem>>, vector<2x8x8x8xf32>
    %c0_37 = arith.constant 0 : index
    %c2_38 = arith.constant 2 : index
    %c1_39 = arith.constant 1 : index
    %c0_40 = arith.constant 0 : index
    %11 = tpu.strided_load %arg18[%c0_37, %c2_38, %c1_39, %c0_40] {strides = array<i32: 1, 2, 2, 1>} : memref<2x18x18x8xf32, #tpu.memory_space<vmem>>, vector<2x8x8x8xf32>
    %c0_41 = arith.constant 0 : index
    %c2_42 = arith.constant 2 : index
    %c2_43 = arith.constant 2 : index
    %c0_44 = arith.constant 0 : index
    %12 = tpu.strided_load %arg18[%c0_41, %c2_42, %c2_43, %c0_44] {strides = array<i32: 1, 2, 2, 1>} : memref<2x18x18x8xf32, #tpu.memory_space<vmem>>, vector<2x8x8x8xf32>
    %13 = tpu.concatenate %4, %5, %6, %7, %8, %9, %10, %11, %12 in 3 : vector<2x8x8x8xf32>, vector<2x8x8x8xf32>, vector<2x8x8x8xf32>, vector<2x8x8x8xf32>, vector<2x8x8x8xf32>, vector<2x8x8x8xf32>, vector<2x8x8x8xf32>, vector<2x8x8x8xf32>, vector<2x8x8x8xf32> -> vector<2x8x8x72xf32>
    %14 = vector.shape_cast %13 : vector<2x8x8x72xf32> to vector<128x72xf32>
    %15 = arith.truncf %14 : vector<128x72xf32> to vector<128x72xbf16>
    %c0_45 = arith.constant 0 : index
    %c0_46 = arith.constant 0 : index
    %16 = vector.load %arg1[%c0_45, %c0_46] : memref<72x16xbf16, #tpu.memory_space<vmem>>, vector<72x16xbf16>
    %cst_47 = arith.constant dense<0.000000e+00> : vector<128x16xf32>
    %17 = tpu.matmul %15, %16, %cst_47 {dimension_numbers = #tpu.dot_dimension_numbers<[1], [0], [0], [1], [0, 0, 1, 1], [], []>} : vector<128x72xbf16>, vector<72x16xbf16>, vector<128x16xf32> -> vector<128x16xf32>
    %c0_48 = arith.constant 0 : index
    %c0_49 = arith.constant 0 : index
    %18 = vector.load %arg2[%c0_48, %c0_49] : memref<1x16xf32, #tpu.memory_space<vmem>>, vector<1x16xf32>
    %19 = vector.broadcast %18 : vector<1x16xf32> to vector<128x16xf32>
    %20 = arith.addf %17, %19 : vector<128x16xf32>
    %cst_50 = arith.constant dense<0.000000e+00> : vector<16xf32>
    %21 = vector.multi_reduction <add>, %20, %cst_50 [0] : vector<128x16xf32> to vector<16xf32>
    %22 = vector.shape_cast %21 : vector<16xf32> to vector<1x16xf32>
    %23 = arith.mulf %20, %20 : vector<128x16xf32>
    %cst_51 = arith.constant dense<0.000000e+00> : vector<16xf32>
    %24 = vector.multi_reduction <add>, %23, %cst_51 [0] : vector<128x16xf32> to vector<16xf32>
    %25 = vector.shape_cast %24 : vector<16xf32> to vector<1x16xf32>
    %cst_52 = arith.constant 7.812500e-03 : f32
    %26 = vector.broadcast %cst_52 : f32 to vector<1x16xf32>
    %27 = arith.mulf %22, %26 : vector<1x16xf32>
    %cst_53 = arith.constant 7.812500e-03 : f32
    %28 = vector.broadcast %cst_53 : f32 to vector<1x16xf32>
    %29 = arith.mulf %25, %28 : vector<1x16xf32>
    %30 = arith.mulf %27, %27 : vector<1x16xf32>
    %31 = arith.subf %29, %30 : vector<1x16xf32>
    %cst_54 = arith.constant 0.000000e+00 : f32
    %32 = vector.broadcast %cst_54 : f32 to vector<1x16xf32>
    %33 = arith.maximumf %31, %32 : vector<1x16xf32>
    %34 = vector.broadcast %27 : vector<1x16xf32> to vector<128x16xf32>
    %35 = arith.subf %20, %34 : vector<128x16xf32>
    %c0_55 = arith.constant 0 : index
    %c0_56 = arith.constant 0 : index
    %36 = vector.load %arg3[%c0_55, %c0_56] : memref<1x16xf32, #tpu.memory_space<vmem>>, vector<1x16xf32>
    %cst_57 = arith.constant 9.99999974E-6 : f32
    %37 = vector.broadcast %cst_57 : f32 to vector<1x16xf32>
    %38 = arith.addf %33, %37 : vector<1x16xf32>
    %39 = math.rsqrt %38 : vector<1x16xf32>
    %40 = arith.mulf %36, %39 : vector<1x16xf32>
    %41 = vector.broadcast %40 : vector<1x16xf32> to vector<128x16xf32>
    %42 = arith.mulf %35, %41 : vector<128x16xf32>
    %c0_58 = arith.constant 0 : index
    %c0_59 = arith.constant 0 : index
    %43 = vector.load %arg4[%c0_58, %c0_59] : memref<1x16xf32, #tpu.memory_space<vmem>>, vector<1x16xf32>
    %44 = vector.broadcast %43 : vector<1x16xf32> to vector<128x16xf32>
    %45 = arith.addf %42, %44 : vector<128x16xf32>
    %cst_60 = arith.constant 0.000000e+00 : f32
    %46 = vector.broadcast %cst_60 : f32 to vector<128x16xf32>
    %47 = arith.maximumf %45, %46 : vector<128x16xf32>
    %48 = vector.shape_cast %0 : vector<2x16x16x8xf32> to vector<512x8xf32>
    %49 = arith.truncf %48 : vector<512x8xf32> to vector<512x8xbf16>
    %c0_61 = arith.constant 0 : index
    %c0_62 = arith.constant 0 : index
    %50 = vector.load %arg5[%c0_61, %c0_62] : memref<8x4xbf16, #tpu.memory_space<vmem>>, vector<8x4xbf16>
    %cst_63 = arith.constant dense<0.000000e+00> : vector<512x4xf32>
    %51 = tpu.matmul %49, %50, %cst_63 {dimension_numbers = #tpu.dot_dimension_numbers<[1], [0], [0], [1], [0, 0, 1, 1], [], []>} : vector<512x8xbf16>, vector<8x4xbf16>, vector<512x4xf32> -> vector<512x4xf32>
    %c0_64 = arith.constant 0 : index
    %c0_65 = arith.constant 0 : index
    %52 = vector.load %arg6[%c0_64, %c0_65] : memref<1x4xf32, #tpu.memory_space<vmem>>, vector<1x4xf32>
    %53 = vector.broadcast %52 : vector<1x4xf32> to vector<512x4xf32>
    %54 = arith.addf %51, %53 : vector<512x4xf32>
    %cst_66 = arith.constant dense<0.000000e+00> : vector<4xf32>
    %55 = vector.multi_reduction <add>, %54, %cst_66 [0] : vector<512x4xf32> to vector<4xf32>
    %56 = vector.shape_cast %55 : vector<4xf32> to vector<1x4xf32>
    %57 = arith.mulf %54, %54 : vector<512x4xf32>
    %cst_67 = arith.constant dense<0.000000e+00> : vector<4xf32>
    %58 = vector.multi_reduction <add>, %57, %cst_67 [0] : vector<512x4xf32> to vector<4xf32>
    %59 = vector.shape_cast %58 : vector<4xf32> to vector<1x4xf32>
    %cst_68 = arith.constant 0.001953125 : f32
    %60 = vector.broadcast %cst_68 : f32 to vector<1x4xf32>
    %61 = arith.mulf %56, %60 : vector<1x4xf32>
    %cst_69 = arith.constant 0.001953125 : f32
    %62 = vector.broadcast %cst_69 : f32 to vector<1x4xf32>
    %63 = arith.mulf %59, %62 : vector<1x4xf32>
    %64 = arith.mulf %61, %61 : vector<1x4xf32>
    %65 = arith.subf %63, %64 : vector<1x4xf32>
    %cst_70 = arith.constant 0.000000e+00 : f32
    %66 = vector.broadcast %cst_70 : f32 to vector<1x4xf32>
    %67 = arith.maximumf %65, %66 : vector<1x4xf32>
    %68 = vector.broadcast %61 : vector<1x4xf32> to vector<512x4xf32>
    %69 = arith.subf %54, %68 : vector<512x4xf32>
    %c0_71 = arith.constant 0 : index
    %c0_72 = arith.constant 0 : index
    %70 = vector.load %arg7[%c0_71, %c0_72] : memref<1x4xf32, #tpu.memory_space<vmem>>, vector<1x4xf32>
    %cst_73 = arith.constant 9.99999974E-6 : f32
    %71 = vector.broadcast %cst_73 : f32 to vector<1x4xf32>
    %72 = arith.addf %67, %71 : vector<1x4xf32>
    %73 = math.rsqrt %72 : vector<1x4xf32>
    %74 = arith.mulf %70, %73 : vector<1x4xf32>
    %75 = vector.broadcast %74 : vector<1x4xf32> to vector<512x4xf32>
    %76 = arith.mulf %69, %75 : vector<512x4xf32>
    %c0_74 = arith.constant 0 : index
    %c0_75 = arith.constant 0 : index
    %77 = vector.load %arg8[%c0_74, %c0_75] : memref<1x4xf32, #tpu.memory_space<vmem>>, vector<1x4xf32>
    %78 = vector.broadcast %77 : vector<1x4xf32> to vector<512x4xf32>
    %79 = arith.addf %76, %78 : vector<512x4xf32>
    %cst_76 = arith.constant 0.000000e+00 : f32
    %80 = vector.broadcast %cst_76 : f32 to vector<512x4xf32>
    %81 = arith.maximumf %79, %80 : vector<512x4xf32>
    %cst_77 = arith.constant 0.000000e+00 : f32
    %82 = vector.broadcast %cst_77 : f32 to vector<2x18x18x4xf32>
    %c0_78 = arith.constant 0 : index
    %c0_79 = arith.constant 0 : index
    %c0_80 = arith.constant 0 : index
    %c0_81 = arith.constant 0 : index
    %83 = vector.load %arg19[%c0_78, %c0_79, %c0_80, %c0_81] : memref<2x18x18x4xf32, #tpu.memory_space<vmem>>, vector<2x18x18x4xf32>
    tpu.vector_store %arg19[%c0_78, %c0_79, %c0_80, %c0_81], %82 {strides = array<i32>} : memref<2x18x18x4xf32, #tpu.memory_space<vmem>>, vector<2x18x18x4xf32>,
    %84 = vector.shape_cast %81 : vector<512x4xf32> to vector<2x16x16x4xf32>
    %c0_82 = arith.constant 0 : index
    %c1_83 = arith.constant 1 : index
    %c1_84 = arith.constant 1 : index
    %c0_85 = arith.constant 0 : index
    %85 = vector.load %arg19[%c0_82, %c1_83, %c1_84, %c0_85] : memref<2x18x18x4xf32, #tpu.memory_space<vmem>>, vector<2x16x16x4xf32>
    tpu.vector_store %arg19[%c0_82, %c1_83, %c1_84, %c0_85], %84 {strides = array<i32>} : memref<2x18x18x4xf32, #tpu.memory_space<vmem>>, vector<2x16x16x4xf32>,
    %c0_86 = arith.constant 0 : index
    %c0_87 = arith.constant 0 : index
    %c0_88 = arith.constant 0 : index
    %c0_89 = arith.constant 0 : index
    %86 = tpu.strided_load %arg19[%c0_86, %c0_87, %c0_88, %c0_89] {strides = array<i32: 1, 2, 2, 1>} : memref<2x18x18x4xf32, #tpu.memory_space<vmem>>, vector<2x8x8x4xf32>
    %c0_90 = arith.constant 0 : index
    %c0_91 = arith.constant 0 : index
    %c1_92 = arith.constant 1 : index
    %c0_93 = arith.constant 0 : index
    %87 = tpu.strided_load %arg19[%c0_90, %c0_91, %c1_92, %c0_93] {strides = array<i32: 1, 2, 2, 1>} : memref<2x18x18x4xf32, #tpu.memory_space<vmem>>, vector<2x8x8x4xf32>
    %c0_94 = arith.constant 0 : index
    %c0_95 = arith.constant 0 : index
    %c2_96 = arith.constant 2 : index
    %c0_97 = arith.constant 0 : index
    %88 = tpu.strided_load %arg19[%c0_94, %c0_95, %c2_96, %c0_97] {strides = array<i32: 1, 2, 2, 1>} : memref<2x18x18x4xf32, #tpu.memory_space<vmem>>, vector<2x8x8x4xf32>
    %c0_98 = arith.constant 0 : index
    %c1_99 = arith.constant 1 : index
    %c0_100 = arith.constant 0 : index
    %c0_101 = arith.constant 0 : index
    %89 = tpu.strided_load %arg19[%c0_98, %c1_99, %c0_100, %c0_101] {strides = array<i32: 1, 2, 2, 1>} : memref<2x18x18x4xf32, #tpu.memory_space<vmem>>, vector<2x8x8x4xf32>
    %c0_102 = arith.constant 0 : index
    %c1_103 = arith.constant 1 : index
    %c1_104 = arith.constant 1 : index
    %c0_105 = arith.constant 0 : index
    %90 = tpu.strided_load %arg19[%c0_102, %c1_103, %c1_104, %c0_105] {strides = array<i32: 1, 2, 2, 1>} : memref<2x18x18x4xf32, #tpu.memory_space<vmem>>, vector<2x8x8x4xf32>
    %c0_106 = arith.constant 0 : index
    %c1_107 = arith.constant 1 : index
    %c2_108 = arith.constant 2 : index
    %c0_109 = arith.constant 0 : index
    %91 = tpu.strided_load %arg19[%c0_106, %c1_107, %c2_108, %c0_109] {strides = array<i32: 1, 2, 2, 1>} : memref<2x18x18x4xf32, #tpu.memory_space<vmem>>, vector<2x8x8x4xf32>
    %c0_110 = arith.constant 0 : index
    %c2_111 = arith.constant 2 : index
    %c0_112 = arith.constant 0 : index
    %c0_113 = arith.constant 0 : index
    %92 = tpu.strided_load %arg19[%c0_110, %c2_111, %c0_112, %c0_113] {strides = array<i32: 1, 2, 2, 1>} : memref<2x18x18x4xf32, #tpu.memory_space<vmem>>, vector<2x8x8x4xf32>
    %c0_114 = arith.constant 0 : index
    %c2_115 = arith.constant 2 : index
    %c1_116 = arith.constant 1 : index
    %c0_117 = arith.constant 0 : index
    %93 = tpu.strided_load %arg19[%c0_114, %c2_115, %c1_116, %c0_117] {strides = array<i32: 1, 2, 2, 1>} : memref<2x18x18x4xf32, #tpu.memory_space<vmem>>, vector<2x8x8x4xf32>
    %c0_118 = arith.constant 0 : index
    %c2_119 = arith.constant 2 : index
    %c2_120 = arith.constant 2 : index
    %c0_121 = arith.constant 0 : index
    %94 = tpu.strided_load %arg19[%c0_118, %c2_119, %c2_120, %c0_121] {strides = array<i32: 1, 2, 2, 1>} : memref<2x18x18x4xf32, #tpu.memory_space<vmem>>, vector<2x8x8x4xf32>
    %95 = tpu.concatenate %86, %87, %88, %89, %90, %91, %92, %93, %94 in 3 : vector<2x8x8x4xf32>, vector<2x8x8x4xf32>, vector<2x8x8x4xf32>, vector<2x8x8x4xf32>, vector<2x8x8x4xf32>, vector<2x8x8x4xf32>, vector<2x8x8x4xf32>, vector<2x8x8x4xf32>, vector<2x8x8x4xf32> -> vector<2x8x8x36xf32>
    %96 = vector.shape_cast %95 : vector<2x8x8x36xf32> to vector<128x36xf32>
    %97 = arith.truncf %96 : vector<128x36xf32> to vector<128x36xbf16>
    %c0_122 = arith.constant 0 : index
    %c0_123 = arith.constant 0 : index
    %98 = vector.load %arg9[%c0_122, %c0_123] : memref<36x4xbf16, #tpu.memory_space<vmem>>, vector<36x4xbf16>
    %cst_124 = arith.constant dense<0.000000e+00> : vector<128x4xf32>
    %99 = tpu.matmul %97, %98, %cst_124 {dimension_numbers = #tpu.dot_dimension_numbers<[1], [0], [0], [1], [0, 0, 1, 1], [], []>} : vector<128x36xbf16>, vector<36x4xbf16>, vector<128x4xf32> -> vector<128x4xf32>
    %c0_125 = arith.constant 0 : index
    %c0_126 = arith.constant 0 : index
    %100 = vector.load %arg10[%c0_125, %c0_126] : memref<1x4xf32, #tpu.memory_space<vmem>>, vector<1x4xf32>
    %101 = vector.broadcast %100 : vector<1x4xf32> to vector<128x4xf32>
    %102 = arith.addf %99, %101 : vector<128x4xf32>
    %cst_127 = arith.constant dense<0.000000e+00> : vector<4xf32>
    %103 = vector.multi_reduction <add>, %102, %cst_127 [0] : vector<128x4xf32> to vector<4xf32>
    %104 = vector.shape_cast %103 : vector<4xf32> to vector<1x4xf32>
    %105 = arith.mulf %102, %102 : vector<128x4xf32>
    %cst_128 = arith.constant dense<0.000000e+00> : vector<4xf32>
    %106 = vector.multi_reduction <add>, %105, %cst_128 [0] : vector<128x4xf32> to vector<4xf32>
    %107 = vector.shape_cast %106 : vector<4xf32> to vector<1x4xf32>
    %cst_129 = arith.constant 7.812500e-03 : f32
    %108 = vector.broadcast %cst_129 : f32 to vector<1x4xf32>
    %109 = arith.mulf %104, %108 : vector<1x4xf32>
    %cst_130 = arith.constant 7.812500e-03 : f32
    %110 = vector.broadcast %cst_130 : f32 to vector<1x4xf32>
    %111 = arith.mulf %107, %110 : vector<1x4xf32>
    %112 = arith.mulf %109, %109 : vector<1x4xf32>
    %113 = arith.subf %111, %112 : vector<1x4xf32>
    %cst_131 = arith.constant 0.000000e+00 : f32
    %114 = vector.broadcast %cst_131 : f32 to vector<1x4xf32>
    %115 = arith.maximumf %113, %114 : vector<1x4xf32>
    %116 = vector.broadcast %109 : vector<1x4xf32> to vector<128x4xf32>
    %117 = arith.subf %102, %116 : vector<128x4xf32>
    %c0_132 = arith.constant 0 : index
    %c0_133 = arith.constant 0 : index
    %118 = vector.load %arg11[%c0_132, %c0_133] : memref<1x4xf32, #tpu.memory_space<vmem>>, vector<1x4xf32>
    %cst_134 = arith.constant 9.99999974E-6 : f32
    %119 = vector.broadcast %cst_134 : f32 to vector<1x4xf32>
    %120 = arith.addf %115, %119 : vector<1x4xf32>
    %121 = math.rsqrt %120 : vector<1x4xf32>
    %122 = arith.mulf %118, %121 : vector<1x4xf32>
    %123 = vector.broadcast %122 : vector<1x4xf32> to vector<128x4xf32>
    %124 = arith.mulf %117, %123 : vector<128x4xf32>
    %c0_135 = arith.constant 0 : index
    %c0_136 = arith.constant 0 : index
    %125 = vector.load %arg12[%c0_135, %c0_136] : memref<1x4xf32, #tpu.memory_space<vmem>>, vector<1x4xf32>
    %126 = vector.broadcast %125 : vector<1x4xf32> to vector<128x4xf32>
    %127 = arith.addf %124, %126 : vector<128x4xf32>
    %cst_137 = arith.constant 0.000000e+00 : f32
    %128 = vector.broadcast %cst_137 : f32 to vector<128x4xf32>
    %129 = arith.maximumf %127, %128 : vector<128x4xf32>
    %130 = arith.truncf %129 : vector<128x4xf32> to vector<128x4xbf16>
    %c0_138 = arith.constant 0 : index
    %c0_139 = arith.constant 0 : index
    %131 = vector.load %arg13[%c0_138, %c0_139] : memref<4x16xbf16, #tpu.memory_space<vmem>>, vector<4x16xbf16>
    %cst_140 = arith.constant dense<0.000000e+00> : vector<128x16xf32>
    %132 = tpu.matmul %130, %131, %cst_140 {dimension_numbers = #tpu.dot_dimension_numbers<[1], [0], [0], [1], [0, 0, 1, 1], [], []>} : vector<128x4xbf16>, vector<4x16xbf16>, vector<128x16xf32> -> vector<128x16xf32>
    %c0_141 = arith.constant 0 : index
    %c0_142 = arith.constant 0 : index
    %133 = vector.load %arg14[%c0_141, %c0_142] : memref<1x16xf32, #tpu.memory_space<vmem>>, vector<1x16xf32>
    %134 = vector.broadcast %133 : vector<1x16xf32> to vector<128x16xf32>
    %135 = arith.addf %132, %134 : vector<128x16xf32>
    %cst_143 = arith.constant dense<0.000000e+00> : vector<16xf32>
    %136 = vector.multi_reduction <add>, %135, %cst_143 [0] : vector<128x16xf32> to vector<16xf32>
    %137 = vector.shape_cast %136 : vector<16xf32> to vector<1x16xf32>
    %138 = arith.mulf %135, %135 : vector<128x16xf32>
    %cst_144 = arith.constant dense<0.000000e+00> : vector<16xf32>
    %139 = vector.multi_reduction <add>, %138, %cst_144 [0] : vector<128x16xf32> to vector<16xf32>
    %140 = vector.shape_cast %139 : vector<16xf32> to vector<1x16xf32>
    %cst_145 = arith.constant 7.812500e-03 : f32
    %141 = vector.broadcast %cst_145 : f32 to vector<1x16xf32>
    %142 = arith.mulf %137, %141 : vector<1x16xf32>
    %cst_146 = arith.constant 7.812500e-03 : f32
    %143 = vector.broadcast %cst_146 : f32 to vector<1x16xf32>
    %144 = arith.mulf %140, %143 : vector<1x16xf32>
    %145 = arith.mulf %142, %142 : vector<1x16xf32>
    %146 = arith.subf %144, %145 : vector<1x16xf32>
    %cst_147 = arith.constant 0.000000e+00 : f32
    %147 = vector.broadcast %cst_147 : f32 to vector<1x16xf32>
    %148 = arith.maximumf %146, %147 : vector<1x16xf32>
    %149 = vector.broadcast %142 : vector<1x16xf32> to vector<128x16xf32>
    %150 = arith.subf %135, %149 : vector<128x16xf32>
    %c0_148 = arith.constant 0 : index
    %c0_149 = arith.constant 0 : index
    %151 = vector.load %arg15[%c0_148, %c0_149] : memref<1x16xf32, #tpu.memory_space<vmem>>, vector<1x16xf32>
    %cst_150 = arith.constant 9.99999974E-6 : f32
    %152 = vector.broadcast %cst_150 : f32 to vector<1x16xf32>
    %153 = arith.addf %148, %152 : vector<1x16xf32>
    %154 = math.rsqrt %153 : vector<1x16xf32>
    %155 = arith.mulf %151, %154 : vector<1x16xf32>
    %156 = vector.broadcast %155 : vector<1x16xf32> to vector<128x16xf32>
    %157 = arith.mulf %150, %156 : vector<128x16xf32>
    %c0_151 = arith.constant 0 : index
    %c0_152 = arith.constant 0 : index
    %158 = vector.load %arg16[%c0_151, %c0_152] : memref<1x16xf32, #tpu.memory_space<vmem>>, vector<1x16xf32>
    %159 = vector.broadcast %158 : vector<1x16xf32> to vector<128x16xf32>
    %160 = arith.addf %157, %159 : vector<128x16xf32>
    %cst_153 = arith.constant 0.000000e+00 : f32
    %161 = vector.broadcast %cst_153 : f32 to vector<128x16xf32>
    %162 = arith.maximumf %160, %161 : vector<128x16xf32>
    %163 = arith.addf %162, %47 : vector<128x16xf32>
    %cst_154 = arith.constant 0.000000e+00 : f32
    %164 = vector.broadcast %cst_154 : f32 to vector<128x16xf32>
    %165 = arith.maximumf %163, %164 : vector<128x16xf32>
    %166 = tpu.transpose %165, [1, 0] : vector<128x16xf32> -> vector<16x128xf32>
    %c0_155 = arith.constant 0 : index
    %c0_156 = arith.constant 0 : index
    %167 = vector.load %arg17[%c0_155, %c0_156] : memref<16x128xf32, #tpu.memory_space<vmem>>, vector<16x128xf32>
    tpu.vector_store %arg17[%c0_155, %c0_156], %166 {strides = array<i32>} : memref<16x128xf32, #tpu.memory_space<vmem>>, vector<16x128xf32>,
    return
  }
}

</mosaic_0001>

<llo_original>
// kernel: resnet_bottleneck_forward.1
$region0: #{resnet_bottleneck_forward.1}
  #allocation0 [shape = 'u32[]', space=smem, size = 0x4, offset = 0x4, fixed_abs, tag = 'smem constant byte address 0x4 - core index']
  #allocation1 [shape = 'u32[72,128]{1,0:T(1,128)}', space=vmem, size = 0x9000, scoped, tag = 'internal scratch']
  #allocation2 [shape = 'f32[2,18,18,8]{3,2,1,0:T(8,128)}', space=vmem, size = 0x6c000, scoped, tag = 'scratch operand']
  #allocation3 [shape = 'f32[2,18,18,4]{3,2,1,0:T(8,128)}', space=vmem, size = 0x6c000, scoped, tag = 'scratch operand']
  %s0 = inlined_call_operand.vmem [shape: f32[2,16,16,8], index: 0, kind: input, shape index: {}]
  %s1 = inlined_call_operand.vmem [shape: bf16[72,16], index: 1, kind: input, shape index: {}]
  %s2 = inlined_call_operand.vmem [shape: f32[1,16], index: 2, kind: input, shape index: {}]
  %s3 = inlined_call_operand.vmem [shape: f32[1,16], index: 3, kind: input, shape index: {}]
  %s4 = inlined_call_operand.vmem [shape: f32[1,16], index: 4, kind: input, shape index: {}]
  %s5 = inlined_call_operand.vmem [shape: bf16[8,4], index: 5, kind: input, shape index: {}]
  %s6 = inlined_call_operand.vmem [shape: f32[1,4], index: 6, kind: input, shape index: {}]
  %s7 = inlined_call_operand.vmem [shape: f32[1,4], index: 7, kind: input, shape index: {}]
  %s8 = inlined_call_operand.vmem [shape: f32[1,4], index: 8, kind: input, shape index: {}]
  %s9 = inlined_call_operand.vmem [shape: bf16[36,4], index: 9, kind: input, shape index: {}]
  %s10 = inlined_call_operand.vmem [shape: f32[1,4], index: 10, kind: input, shape index: {}]
  %s11 = inlined_call_operand.vmem [shape: f32[1,4], index: 11, kind: input, shape index: {}]
  %s12 = inlined_call_operand.vmem [shape: f32[1,4], index: 12, kind: input, shape index: {}]
  %s13 = inlined_call_operand.vmem [shape: bf16[4,16], index: 13, kind: input, shape index: {}]
  %s14 = inlined_call_operand.vmem [shape: f32[1,16], index: 14, kind: input, shape index: {}]
  %s15 = inlined_call_operand.vmem [shape: f32[1,16], index: 15, kind: input, shape index: {}]
  %s16 = inlined_call_operand.vmem [shape: f32[1,16], index: 16, kind: input, shape index: {}]
  %s17 = inlined_call_operand.vmem [shape: f32[16,128], index: 17, kind: output, shape index: {}]
  %s18 = sld [smem:[#allocation0]]
  $region78: #{resnet_bottleneck_forward.1} parent=0
    _
  %s20 = ssub.s32 1, %s18
  %s21 = scalar_select 0, %s20, %s18
  // Predicated region
  $region2: #{resnet_bottleneck_forward.1} parent=0 // pred_check
    _
  $region3: #{resnet_bottleneck_forward.1} parent=0 // pred_check_branch
    %23 = sbr.rel (0) target = $region5
  $region4: #{resnet_bottleneck_forward.1} parent=0 // pred_region
    _
  $region5: #{resnet_bottleneck_forward.1} parent=0 // pred_fallthru
    _
  // Predicated region
  $region6: #{resnet_bottleneck_forward.1} parent=0 // pred_check
    _
  $region7: #{resnet_bottleneck_forward.1} parent=0 // pred_check_branch
    %25 = sbr.rel (0) target = $region9
  $region8: #{resnet_bottleneck_forward.1} parent=0 // pred_region
    _
  $region9: #{resnet_bottleneck_forward.1} parent=0 // pred_fallthru
    _
  // Predicated region
  $region10: #{resnet_bottleneck_forward.1} parent=0 // pred_check
    _
  $region11: #{resnet_bottleneck_forward.1} parent=0 // pred_check_branch
    %27 = sbr.rel (0) target = $region13
  $region12: #{resnet_bottleneck_forward.1} parent=0 // pred_region
    _
  $region13: #{resnet_bottleneck_forward.1} parent=0 // pred_fallthru
    _
  // Predicated region
  $region14: #{resnet_bottleneck_forward.1} parent=0 // pred_check
    _
  $region15: #{resnet_bottleneck_forward.1} parent=0 // pred_check_branch
    %29 = sbr.rel (0) target = $region17
  $region16: #{resnet_bottleneck_forward.1} parent=0 // pred_region
    _
  $region17: #{resnet_bottleneck_forward.1} parent=0 // pred_fallthru
    _
  // Predicated region
  $region18: #{resnet_bottleneck_forward.1} parent=0 // pred_check
    _
  $region19: #{resnet_bottleneck_forward.1} parent=0 // pred_check_branch
    %31 = sbr.rel (0) target = $region21
  $region20: #{resnet_bottleneck_forward.1} parent=0 // pred_region
    _
  $region21: #{resnet_bottleneck_forward.1} parent=0 // pred_fallthru
    _
  // Predicated region
  $region22: #{resnet_bottleneck_forward.1} parent=0 // pred_check
    _
  $region23: #{resnet_bottleneck_forward.1} parent=0 // pred_check_branch
    %33 = sbr.rel (0) target = $region25
  $region24: #{resnet_bottleneck_forward.1} parent=0 // pred_region
    _
  $region25: #{resnet_bottleneck_forward.1} parent=0 // pred_fallthru
    _
  // Predicated region
  $region26: #{resnet_bottleneck_forward.1} parent=0 // pred_check
    _
  $region27: #{resnet_bottleneck_forward.1} parent=0 // pred_check_branch
    %35 = sbr.rel (0) target = $region29
  $region28: #{resnet_bottleneck_forward.1} parent=0 // pred_region
    _
  $region29: #{resnet_bottleneck_forward.1} parent=0 // pred_fallthru
    _
  // Predicated region
  $region30: #{resnet_bottleneck_forward.1} parent=0 // pred_check
    _
  $region31: #{resnet_bottleneck_forward.1} parent=0 // pred_check_branch
    %37 = sbr.rel (0) target = $region33
  $region32: #{resnet_bottleneck_forward.1} parent=0 // pred_region
    _
  $region33: #{resnet_bottleneck_forward.1} parent=0 // pred_fallthru
    _
  // Predicated region
  $region34: #{resnet_bottleneck_forward.1} parent=0 // pred_check
    _
  $region35: #{resnet_bottleneck_forward.1} parent=0 // pred_check_branch
    %39 = sbr.rel (0) target = $region37
  $region36: #{resnet_bottleneck_forward.1} parent=0 // pred_region
    _
  $region37: #{resnet_bottleneck_forward.1} parent=0 // pred_fallthru
    _
  // Predicated region
  $region38: #{resnet_bottleneck_forward.1} parent=0 // pred_check
    _
  $region39: #{resnet_bottleneck_forward.1} parent=0 // pred_check_branch
    %41 = sbr.rel (0) target = $region41
  $region40: #{resnet_bottleneck_forward.1} parent=0 // pred_region
    _
  $region41: #{resnet_bottleneck_forward.1} parent=0 // pred_fallthru
    _
  // Predicated region
  $region42: #{resnet_bottleneck_forward.1} parent=0 // pred_check
    _
  $region43: #{resnet_bottleneck_forward.1} parent=0 // pred_check_branch
    %43 = sbr.rel (0) target = $region45
  $region44: #{resnet_bottleneck_forward.1} parent=0 // pred_region
    _
  $region45: #{resnet_bottleneck_forward.1} parent=0 // pred_fallthru
    _
  // Predicated region
  $region46: #{resnet_bottleneck_forward.1} parent=0 // pred_check
    _
  $region47: #{resnet_bottleneck_forward.1} parent=0 // pred_check_branch
    %45 = sbr.rel (0) target = $region49
  $region48: #{resnet_bottleneck_forward.1} parent=0 // pred_region
    _
  $region49: #{resnet_bottleneck_forward.1} parent=0 // pred_fallthru
    _
  // Predicated region
  $region50: #{resnet_bottleneck_forward.1} parent=0 // pred_check
    _
  $region51: #{resnet_bottleneck_forward.1} parent=0 // pred_check_branch
    %47 = sbr.rel (0) target = $region53
  $region52: #{resnet_bottleneck_forward.1} parent=0 // pred_region
    _
  $region53: #{resnet_bottleneck_forward.1} parent=0 // pred_fallthru
    _
  // Predicated region
  $region54: #{resnet_bottleneck_forward.1} parent=0 // pred_check
    _
  $region55: #{resnet_bottleneck_forward.1} parent=0 // pred_check_branch
    %49 = sbr.rel (0) target = $region57
  $region56: #{resnet_bottleneck_forward.1} parent=0 // pred_region
    _
  $region57: #{resnet_bottleneck_forward.1} parent=0 // pred_fallthru
    _
  // Predicated region
  $region58: #{resnet_bottleneck_forward.1} parent=0 // pred_check
    _
  $region59: #{resnet_bottleneck_forward.1} parent=0 // pred_check_branch
    %51 = sbr.rel (0) target = $region61
  $region60: #{resnet_bottleneck_forward.1} parent=0 // pred_region
    _
  $region61: #{resnet_bottleneck_forward.1} parent=0 // pred_fallthru
    _
  // Predicated region
  $region62: #{resnet_bottleneck_forward.1} parent=0 // pred_check
    _
  $region63: #{resnet_bottleneck_forward.1} parent=0 // pred_check_branch
    %53 = sbr.rel (0) target = $region65
  $region64: #{resnet_bottleneck_forward.1} parent=0 // pred_region
    _
  $region65: #{resnet_bottleneck_forward.1} parent=0 // pred_fallthru
    _
  // Predicated region
  $region66: #{resnet_bottleneck_forward.1} parent=0 // pred_check
    _
  $region67: #{resnet_bottleneck_forward.1} parent=0 // pred_check_branch
    %55 = sbr.rel (0) target = $region69
  $region68: #{resnet_bottleneck_forward.1} parent=0 // pred_region
    _
  $region69: #{resnet_bottleneck_forward.1} parent=0 // pred_fallthru
    _
  %v57 = vld [vmem:[%s0] sm:$0xff]
  %v58 = vld [vmem:[%s0 + $0x8] sm:$0xff]
  %v59 = vld [vmem:[%s0 + $0x10] sm:$0xff]
  %v60 = vld [vmem:[%s0 + $0x18] sm:$0xff]
  %v61 = vld [vmem:[%s0 + $0x20] sm:$0xff]
  %v62 = vld [vmem:[%s0 + $0x28] sm:$0xff]
  %v63 = vld [vmem:[%s0 + $0x30] sm:$0xff]
  %v64 = vld [vmem:[%s0 + $0x38] sm:$0xff]
  %v65 = vld [vmem:[%s0 + $0x40] sm:$0xff]
  %v66 = vld [vmem:[%s0 + $0x48] sm:$0xff]
  %v67 = vld [vmem:[%s0 + $0x50] sm:$0xff]
  %v68 = vld [vmem:[%s0 + $0x58] sm:$0xff]
  %v69 = vld [vmem:[%s0 + $0x60] sm:$0xff]
  %v70 = vld [vmem:[%s0 + $0x68] sm:$0xff]
  %v71 = vld [vmem:[%s0 + $0x70] sm:$0xff]
  %v72 = vld [vmem:[%s0 + $0x78] sm:$0xff]
  %v73 = vld [vmem:[%s0 + $0x80] sm:$0xff]
  %v74 = vld [vmem:[%s0 + $0x88] sm:$0xff]
  %v75 = vld [vmem:[%s0 + $0x90] sm:$0xff]
  %v76 = vld [vmem:[%s0 + $0x98] sm:$0xff]
  %v77 = vld [vmem:[%s0 + $0xa0] sm:$0xff]
  %v78 = vld [vmem:[%s0 + $0xa8] sm:$0xff]
  %v79 = vld [vmem:[%s0 + $0xb0] sm:$0xff]
  %v80 = vld [vmem:[%s0 + $0xb8] sm:$0xff]
  %v81 = vld [vmem:[%s0 + $0xc0] sm:$0xff]
  %v82 = vld [vmem:[%s0 + $0xc8] sm:$0xff]
  %v83 = vld [vmem:[%s0 + $0xd0] sm:$0xff]
  %v84 = vld [vmem:[%s0 + $0xd8] sm:$0xff]
  %v85 = vld [vmem:[%s0 + $0xe0] sm:$0xff]
  %v86 = vld [vmem:[%s0 + $0xe8] sm:$0xff]
  %v87 = vld [vmem:[%s0 + $0xf0] sm:$0xff]
  %v88 = vld [vmem:[%s0 + $0xf8] sm:$0xff]
  %v89 = vld [vmem:[%s0 + $0x100] sm:$0xff]
  %v90 = vld [vmem:[%s0 + $0x108] sm:$0xff]
  %v91 = vld [vmem:[%s0 + $0x110] sm:$0xff]
  %v92 = vld [vmem:[%s0 + $0x118] sm:$0xff]
  %v93 = vld [vmem:[%s0 + $0x120] sm:$0xff]
  %v94 = vld [vmem:[%s0 + $0x128] sm:$0xff]
  %v95 = vld [vmem:[%s0 + $0x130] sm:$0xff]
  %v96 = vld [vmem:[%s0 + $0x138] sm:$0xff]
  %v97 = vld [vmem:[%s0 + $0x140] sm:$0xff]
  %v98 = vld [vmem:[%s0 + $0x148] sm:$0xff]
  %v99 = vld [vmem:[%s0 + $0x150] sm:$0xff]
  %v100 = vld [vmem:[%s0 + $0x158] sm:$0xff]
  %v101 = vld [vmem:[%s0 + $0x160] sm:$0xff]
  %v102 = vld [vmem:[%s0 + $0x168] sm:$0xff]
  %v103 = vld [vmem:[%s0 + $0x170] sm:$0xff]
  %v104 = vld [vmem:[%s0 + $0x178] sm:$0xff]
  %v105 = vld [vmem:[%s0 + $0x180] sm:$0xff]
  %v106 = vld [vmem:[%s0 + $0x188] sm:$0xff]
  %v107 = vld [vmem:[%s0 + $0x190] sm:$0xff]
  %v108 = vld [vmem:[%s0 + $0x198] sm:$0xff]
  %v109 = vld [vmem:[%s0 + $0x1a0] sm:$0xff]
  %v110 = vld [vmem:[%s0 + $0x1a8] sm:$0xff]
  %v111 = vld [vmem:[%s0 + $0x1b0] sm:$0xff]
  %v112 = vld [vmem:[%s0 + $0x1b8] sm:$0xff]
  %v113 = vld [vmem:[%s0 + $0x1c0] sm:$0xff]
  %v114 = vld [vmem:[%s0 + $0x1c8] sm:$0xff]
  %v115 = vld [vmem:[%s0 + $0x1d0] sm:$0xff]
  %v116 = vld [vmem:[%s0 + $0x1d8] sm:$0xff]
  %v117 = vld [vmem:[%s0 + $0x1e0] sm:$0xff]
  %v118 = vld [vmem:[%s0 + $0x1e8] sm:$0xff]
  %v119 = vld [vmem:[%s0 + $0x1f0] sm:$0xff]
  %v120 = vld [vmem:[%s0 + $0x1f8] sm:$0xff]
  %vm121 = vcmask 64512
  %122 = vst.msk [vmem:[#allocation2] sm:$0xff] %vm121, 0.0
  %123 = vst.msk [vmem:[#allocation2 + $0x8] sm:$0xff] %vm121, 0.0
  %vm124 = vcmask 58368
  %125 = vst.msk [vmem:[#allocation2 + $0x10] sm:$0x3] %vm124, 0.0
  %126 = vst.msk [vmem:[#allocation2 + $0x18] sm:$0xff] %vm121, 0.0
  %127 = vst.msk [vmem:[#allocation2 + $0x20] sm:$0xff] %vm121, 0.0
  %128 = vst.msk [vmem:[#allocation2 + $0x28] sm:$0x3] %vm124, 0.0
  %129 = vst.msk [vmem:[#allocation2 + $0x30] sm:$0xff] %vm121, 0.0
  %130 = vst.msk [vmem:[#allocation2 + $0x38] sm:$0xff] %vm121, 0.0
  %131 = vst.msk [vmem:[#allocation2 + $0x40] sm:$0x3] %vm124, 0.0
  %132 = vst.msk [vmem:[#allocation2 + $0x48] sm:$0xff] %vm121, 0.0
  %133 = vst.msk [vmem:[#allocation2 + $0x50] sm:$0xff] %vm121, 0.0
  %134 = vst.msk [vmem:[#allocation2 + $0x58] sm:$0x3] %vm124, 0.0
  %135 = vst.msk [vmem:[#allocation2 + $0x60] sm:$0xff] %vm121, 0.0
  %136 = vst.msk [vmem:[#allocation2 + $0x68] sm:$0xff] %vm121, 0.0
  %137 = vst.msk [vmem:[#allocation2 + $0x70] sm:$0x3] %vm124, 0.0
  %138 = vst.msk [vmem:[#allocation2 + $0x78] sm:$0xff] %vm121, 0.0
  %139 = vst.msk [vmem:[#allocation2 + $0x80] sm:$0xff] %vm121, 0.0
  %140 = vst.msk [vmem:[#allocation2 + $0x88] sm:$0x3] %vm124, 0.0
  %141 = vst.msk [vmem:[#allocation2 + $0x90] sm:$0xff] %vm121, 0.0
  %142 = vst.msk [vmem:[#allocation2 + $0x98] sm:$0xff] %vm121, 0.0
  %143 = vst.msk [vmem:[#allocation2 + $0xa0] sm:$0x3] %vm124, 0.0
  %144 = vst.msk [vmem:[#allocation2 + $0xa8] sm:$0xff] %vm121, 0.0
  %145 = vst.msk [vmem:[#allocation2 + $0xb0] sm:$0xff] %vm121, 0.0
  %146 = vst.msk [vmem:[#allocation2 + $0xb8] sm:$0x3] %vm124, 0.0
  %147 = vst.msk [vmem:[#allocation2 + $0xc0] sm:$0xff] %vm121, 0.0
  %148 = vst.msk [vmem:[#allocation2 + $0xc8] sm:$0xff] %vm121, 0.0
  %149 = vst.msk [vmem:[#allocation2 + $0xd0] sm:$0x3] %vm124, 0.0
  %150 = vst.msk [vmem:[#allocation2 + $0xd8] sm:$0xff] %vm121, 0.0
  %151 = vst.msk [vmem:[#allocation2 + $0xe0] sm:$0xff] %vm121, 0.0
  %152 = vst.msk [vmem:[#allocation2 + $0xe8] sm:$0x3] %vm124, 0.0
  %153 = vst.msk [vmem:[#allocation2 + $0xf0] sm:$0xff] %vm121, 0.0
  %154 = vst.msk [vmem:[#allocation2 + $0xf8] sm:$0xff] %vm121, 0.0
  %155 = vst.msk [vmem:[#allocation2 + $0x100] sm:$0x3] %vm124, 0.0
  %156 = vst.msk [vmem:[#allocation2 + $0x108] sm:$0xff] %vm121, 0.0
  %157 = vst.msk [vmem:[#allocation2 + $0x110] sm:$0xff] %vm121, 0.0
  %158 = vst.msk [vmem:[#allocation2 + $0x118] sm:$0x3] %vm124, 0.0
  %159 = vst.msk [vmem:[#allocation2 + $0x120] sm:$0xff] %vm121, 0.0
  %160 = vst.msk [vmem:[#allocation2 + $0x128] sm:$0xff] %vm121, 0.0
  %161 = vst.msk [vmem:[#allocation2 + $0x130] sm:$0x3] %vm124, 0.0
  %162 = vst.msk [vmem:[#allocation2 + $0x138] sm:$0xff] %vm121, 0.0
  %163 = vst.msk [vmem:[#allocation2 + $0x140] sm:$0xff] %vm121, 0.0
  %164 = vst.msk [vmem:[#allocation2 + $0x148] sm:$0x3] %vm124, 0.0
  %165 = vst.msk [vmem:[#allocation2 + $0x150] sm:$0xff] %vm121, 0.0
  %166 = vst.msk [vmem:[#allocation2 + $0x158] sm:$0xff] %vm121, 0.0
  %167 = vst.msk [vmem:[#allocation2 + $0x160] sm:$0x3] %vm124, 0.0
  %168 = vst.msk [vmem:[#allocation2 + $0x168] sm:$0xff] %vm121, 0.0
  %169 = vst.msk [vmem:[#allocation2 + $0x170] sm:$0xff] %vm121, 0.0
  %170 = vst.msk [vmem:[#allocation2 + $0x178] sm:$0x3] %vm124, 0.0
  %171 = vst.msk [vmem:[#allocation2 + $0x180] sm:$0xff] %vm121, 0.0
  %172 = vst.msk [vmem:[#allocation2 + $0x188] sm:$0xff] %vm121, 0.0
  %173 = vst.msk [vmem:[#allocation2 + $0x190] sm:$0x3] %vm124, 0.0
  %174 = vst.msk [vmem:[#allocation2 + $0x198] sm:$0xff] %vm121, 0.0
  %175 = vst.msk [vmem:[#allocation2 + $0x1a0] sm:$0xff] %vm121, 0.0
  %176 = vst.msk [vmem:[#allocation2 + $0x1a8] sm:$0x3] %vm124, 0.0
  %177 = vst.msk [vmem:[#allocation2 + $0x1b0] sm:$0xff] %vm121, 0.0
  %178 = vst.msk [vmem:[#allocation2 + $0x1b8] sm:$0xff] %vm121, 0.0
  %179 = vst.msk [vmem:[#allocation2 + $0x1c0] sm:$0x3] %vm124, 0.0
  %180 = vst.msk [vmem:[#allocation2 + $0x1c8] sm:$0xff] %vm121, 0.0
  %181 = vst.msk [vmem:[#allocation2 + $0x1d0] sm:$0xff] %vm121, 0.0
  %182 = vst.msk [vmem:[#allocation2 + $0x1d8] sm:$0x3] %vm124, 0.0
  %183 = vst.msk [vmem:[#allocation2 + $0x1e0] sm:$0xff] %vm121, 0.0
  %184 = vst.msk [vmem:[#allocation2 + $0x1e8] sm:$0xff] %vm121, 0.0
  %185 = vst.msk [vmem:[#allocation2 + $0x1f0] sm:$0x3] %vm124, 0.0
  %186 = vst.msk [vmem:[#allocation2 + $0x1f8] sm:$0xff] %vm121, 0.0
  %187 = vst.msk [vmem:[#allocation2 + $0x200] sm:$0xff] %vm121, 0.0
  %188 = vst.msk [vmem:[#allocation2 + $0x208] sm:$0x3] %vm124, 0.0
  %189 = vst.msk [vmem:[#allocation2 + $0x210] sm:$0xff] %vm121, 0.0
  %190 = vst.msk [vmem:[#allocation2 + $0x218] sm:$0xff] %vm121, 0.0
  %191 = vst.msk [vmem:[#allocation2 + $0x220] sm:$0x3] %vm124, 0.0
  %192 = vst.msk [vmem:[#allocation2 + $0x228] sm:$0xff] %vm121, 0.0
  %193 = vst.msk [vmem:[#allocation2 + $0x230] sm:$0xff] %vm121, 0.0
  %194 = vst.msk [vmem:[#allocation2 + $0x238] sm:$0x3] %vm124, 0.0
  %195 = vst.msk [vmem:[#allocation2 + $0x240] sm:$0xff] %vm121, 0.0
  %196 = vst.msk [vmem:[#allocation2 + $0x248] sm:$0xff] %vm121, 0.0
  %197 = vst.msk [vmem:[#allocation2 + $0x250] sm:$0x3] %vm124, 0.0
  %198 = vst.msk [vmem:[#allocation2 + $0x258] sm:$0xff] %vm121, 0.0
  %199 = vst.msk [vmem:[#allocation2 + $0x260] sm:$0xff] %vm121, 0.0
  %200 = vst.msk [vmem:[#allocation2 + $0x268] sm:$0x3] %vm124, 0.0
  %201 = vst.msk [vmem:[#allocation2 + $0x270] sm:$0xff] %vm121, 0.0
  %202 = vst.msk [vmem:[#allocation2 + $0x278] sm:$0xff] %vm121, 0.0
  %203 = vst.msk [vmem:[#allocation2 + $0x280] sm:$0x3] %vm124, 0.0
  %204 = vst.msk [vmem:[#allocation2 + $0x288] sm:$0xff] %vm121, 0.0
  %205 = vst.msk [vmem:[#allocation2 + $0x290] sm:$0xff] %vm121, 0.0
  %206 = vst.msk [vmem:[#allocation2 + $0x298] sm:$0x3] %vm124, 0.0
  %207 = vst.msk [vmem:[#allocation2 + $0x2a0] sm:$0xff] %vm121, 0.0
  %208 = vst.msk [vmem:[#allocation2 + $0x2a8] sm:$0xff] %vm121, 0.0
  %209 = vst.msk [vmem:[#allocation2 + $0x2b0] sm:$0x3] %vm124, 0.0
  %210 = vst.msk [vmem:[#allocation2 + $0x2b8] sm:$0xff] %vm121, 0.0
  %211 = vst.msk [vmem:[#allocation2 + $0x2c0] sm:$0xff] %vm121, 0.0
  %212 = vst.msk [vmem:[#allocation2 + $0x2c8] sm:$0x3] %vm124, 0.0
  %213 = vst.msk [vmem:[#allocation2 + $0x2d0] sm:$0xff] %vm121, 0.0
  %214 = vst.msk [vmem:[#allocation2 + $0x2d8] sm:$0xff] %vm121, 0.0
  %215 = vst.msk [vmem:[#allocation2 + $0x2e0] sm:$0x3] %vm124, 0.0
  %216 = vst.msk [vmem:[#allocation2 + $0x2e8] sm:$0xff] %vm121, 0.0
  %217 = vst.msk [vmem:[#allocation2 + $0x2f0] sm:$0xff] %vm121, 0.0
  %218 = vst.msk [vmem:[#allocation2 + $0x2f8] sm:$0x3] %vm124, 0.0
  %219 = vst.msk [vmem:[#allocation2 + $0x300] sm:$0xff] %vm121, 0.0
  %220 = vst.msk [vmem:[#allocation2 + $0x308] sm:$0xff] %vm121, 0.0
  %221 = vst.msk [vmem:[#allocation2 + $0x310] sm:$0x3] %vm124, 0.0
  %222 = vst.msk [vmem:[#allocation2 + $0x318] sm:$0xff] %vm121, 0.0
  %223 = vst.msk [vmem:[#allocation2 + $0x320] sm:$0xff] %vm121, 0.0
  %224 = vst.msk [vmem:[#allocation2 + $0x328] sm:$0x3] %vm124, 0.0
  %225 = vst.msk [vmem:[#allocation2 + $0x330] sm:$0xff] %vm121, 0.0
  %226 = vst.msk [vmem:[#allocation2 + $0x338] sm:$0xff] %vm121, 0.0
  %227 = vst.msk [vmem:[#allocation2 + $0x340] sm:$0x3] %vm124, 0.0
  %228 = vst.msk [vmem:[#allocation2 + $0x348] sm:$0xff] %vm121, 0.0
  %229 = vst.msk [vmem:[#allocation2 + $0x350] sm:$0xff] %vm121, 0.0
  %230 = vst.msk [vmem:[#allocation2 + $0x358] sm:$0x3] %vm124, 0.0
  %s231 = scalar_lea.vmem [#allocation2], 24
  %232 = vst.msk [vmem:[%s231 + $0x1] sm:$0xff] %vm121, %v57
  %233 = vst.msk [vmem:[%s231 + $0x9] sm:$0xff] %vm121, %v58
  %234 = vst.msk [vmem:[%s231 + $0x19] sm:$0xff] %vm121, %v59
  %235 = vst.msk [vmem:[%s231 + $0x21] sm:$0xff] %vm121, %v60
  %236 = vst.msk [vmem:[%s231 + $0x31] sm:$0xff] %vm121, %v61
  %237 = vst.msk [vmem:[%s231 + $0x39] sm:$0xff] %vm121, %v62
  %238 = vst.msk [vmem:[%s231 + $0x49] sm:$0xff] %vm121, %v63
  %239 = vst.msk [vmem:[%s231 + $0x51] sm:$0xff] %vm121, %v64
  %240 = vst.msk [vmem:[%s231 + $0x61] sm:$0xff] %vm121, %v65
  %241 = vst.msk [vmem:[%s231 + $0x69] sm:$0xff] %vm121, %v66
  %242 = vst.msk [vmem:[%s231 + $0x79] sm:$0xff] %vm121, %v67
  %243 = vst.msk [vmem:[%s231 + $0x81] sm:$0xff] %vm121, %v68
  %244 = vst.msk [vmem:[%s231 + $0x91] sm:$0xff] %vm121, %v69
  %245 = vst.msk [vmem:[%s231 + $0x99] sm:$0xff] %vm121, %v70
  %246 = vst.msk [vmem:[%s231 + $0xa9] sm:$0xff] %vm121, %v71
  %247 = vst.msk [vmem:[%s231 + $0xb1] sm:$0xff] %vm121, %v72
  %248 = vst.msk [vmem:[%s231 + $0xc1] sm:$0xff] %vm121, %v73
  %249 = vst.msk [vmem:[%s231 + $0xc9] sm:$0xff] %vm121, %v74
  %250 = vst.msk [vmem:[%s231 + $0xd9] sm:$0xff] %vm121, %v75
  %251 = vst.msk [vmem:[%s231 + $0xe1] sm:$0xff] %vm121, %v76
  %252 = vst.msk [vmem:[%s231 + $0xf1] sm:$0xff] %vm121, %v77
  %253 = vst.msk [vmem:[%s231 + $0xf9] sm:$0xff] %vm121, %v78
  %254 = vst.msk [vmem:[%s231 + $0x109] sm:$0xff] %vm121, %v79
  %255 = vst.msk [vmem:[%s231 + $0x111] sm:$0xff] %vm121, %v80
  %256 = vst.msk [vmem:[%s231 + $0x121] sm:$0xff] %vm121, %v81
  %257 = vst.msk [vmem:[%s231 + $0x129] sm:$0xff] %vm121, %v82
  %258 = vst.msk [vmem:[%s231 + $0x139] sm:$0xff] %vm121, %v83
  %259 = vst.msk [vmem:[%s231 + $0x141] sm:$0xff] %vm121, %v84
  %260 = vst.msk [vmem:[%s231 + $0x151] sm:$0xff] %vm121, %v85
  %261 = vst.msk [vmem:[%s231 + $0x159] sm:$0xff] %vm121, %v86
  %262 = vst.msk [vmem:[%s231 + $0x169] sm:$0xff] %vm121, %v87
  %263 = vst.msk [vmem:[%s231 + $0x171] sm:$0xff] %vm121, %v88
  %264 = vst.msk [vmem:[%s231 + $0x1b1] sm:$0xff] %vm121, %v89
  %265 = vst.msk [vmem:[%s231 + $0x1b9] sm:$0xff] %vm121, %v90
  %266 = vst.msk [vmem:[%s231 + $0x1c9] sm:$0xff] %vm121, %v91
  %267 = vst.msk [vmem:[%s231 + $0x1d1] sm:$0xff] %vm121, %v92
  %268 = vst.msk [vmem:[%s231 + $0x1e1] sm:$0xff] %vm121, %v93
  %269 = vst.msk [vmem:[%s231 + $0x1e9] sm:$0xff] %vm121, %v94
  %270 = vst.msk [vmem:[%s231 + $0x1f9] sm:$0xff] %vm121, %v95
  %271 = vst.msk [vmem:[%s231 + $0x201] sm:$0xff] %vm121, %v96
  %272 = vst.msk [vmem:[%s231 + $0x211] sm:$0xff] %vm121, %v97
  %273 = vst.msk [vmem:[%s231 + $0x219] sm:$0xff] %vm121, %v98
  %274 = vst.msk [vmem:[%s231 + $0x229] sm:$0xff] %vm121, %v99
  %275 = vst.msk [vmem:[%s231 + $0x231] sm:$0xff] %vm121, %v100
  %276 = vst.msk [vmem:[%s231 + $0x241] sm:$0xff] %vm121, %v101
  %277 = vst.msk [vmem:[%s231 + $0x249] sm:$0xff] %vm121, %v102
  %278 = vst.msk [vmem:[%s231 + $0x259] sm:$0xff] %vm121, %v103
  %279 = vst.msk [vmem:[%s231 + $0x261] sm:$0xff] %vm121, %v104
  %280 = vst.msk [vmem:[%s231 + $0x271] sm:$0xff] %vm121, %v105
  %281 = vst.msk [vmem:[%s231 + $0x279] sm:$0xff] %vm121, %v106
  %282 = vst.msk [vmem:[%s231 + $0x289] sm:$0xff] %vm121, %v107
  %283 = vst.msk [vmem:[%s231 + $0x291] sm:$0xff] %vm121, %v108
  %284 = vst.msk [vmem:[%s231 + $0x2a1] sm:$0xff] %vm121, %v109
  %285 = vst.msk [vmem:[%s231 + $0x2a9] sm:$0xff] %vm121, %v110
  %286 = vst.msk [vmem:[%s231 + $0x2b9] sm:$0xff] %vm121, %v111
  %287 = vst.msk [vmem:[%s231 + $0x2c1] sm:$0xff] %vm121, %v112
  %288 = vst.msk [vmem:[%s231 + $0x2d1] sm:$0xff] %vm121, %v113
  %289 = vst.msk [vmem:[%s231 + $0x2d9] sm:$0xff] %vm121, %v114
  %290 = vst.msk [vmem:[%s231 + $0x2e9] sm:$0xff] %vm121, %v115
  %291 = vst.msk [vmem:[%s231 + $0x2f1] sm:$0xff] %vm121, %v116
  %292 = vst.msk [vmem:[%s231 + $0x301] sm:$0xff] %vm121, %v117
  %293 = vst.msk [vmem:[%s231 + $0x309] sm:$0xff] %vm121, %v118
  %294 = vst.msk [vmem:[%s231 + $0x319] sm:$0xff] %vm121, %v119
  %295 = vst.msk [vmem:[%s231 + $0x321] sm:$0xff] %vm121, %v120
  %v296 = vld [vmem:[#allocation2] ss:$2 sm:$0xff]
  %s297 = scalar_lea.vmem [#allocation2], 48
  %v298 = vld [vmem:[%s297] ss:$2 sm:$0xff]
  %s299 = scalar_lea.vmem [#allocation2], 96
  %v300 = vld [vmem:[%s299] ss:$2 sm:$0xff]
  %s301 = scalar_lea.vmem [#allocation2], 144
  %v302 = vld [vmem:[%s301] ss:$2 sm:$0xff]
  %s303 = scalar_lea.vmem [#allocation2], 192
  %v304 = vld [vmem:[%s303] ss:$2 sm:$0xff]
  %s305 = scalar_lea.vmem [#allocation2], 240
  %v306 = vld [vmem:[%s305] ss:$2 sm:$0xff]
  %s307 = scalar_lea.vmem [#allocation2], 288
  %v308 = vld [vmem:[%s307] ss:$2 sm:$0xff]
  %s309 = scalar_lea.vmem [#allocation2], 336
  %v310 = vld [vmem:[%s309] ss:$2 sm:$0xff]
  %s311 = scalar_lea.vmem [#allocation2], 432
  %v312 = vld [vmem:[%s311] ss:$2 sm:$0xff]
  %s313 = scalar_lea.vmem [#allocation2], 480
  %v314 = vld [vmem:[%s313] ss:$2 sm:$0xff]
  %s315 = scalar_lea.vmem [#allocation2], 528
  %v316 = vld [vmem:[%s315] ss:$2 sm:$0xff]
  %s317 = scalar_lea.vmem [#allocation2], 576
  %v318 = vld [vmem:[%s317] ss:$2 sm:$0xff]
  %s319 = scalar_lea.vmem [#allocation2], 624
  %v320 = vld [vmem:[%s319] ss:$2 sm:$0xff]
  %s321 = scalar_lea.vmem [#allocation2], 672
  %v322 = vld [vmem:[%s321] ss:$2 sm:$0xff]
  %s323 = scalar_lea.vmem [#allocation2], 720
  %v324 = vld [vmem:[%s323] ss:$2 sm:$0xff]
  %s325 = scalar_lea.vmem [#allocation2], 768
  %v326 = vld [vmem:[%s325] ss:$2 sm:$0xff]
  %s327 = scalar_lea.vmem [#allocation2], 1
  %v328 = vld [vmem:[%s327] ss:$2 sm:$0xff]
  %s329 = scalar_lea.vmem [#allocation2], 49
  %v330 = vld [vmem:[%s329] ss:$2 sm:$0xff]
  %s331 = scalar_lea.vmem [#allocation2], 97
  %v332 = vld [vmem:[%s331] ss:$2 sm:$0xff]
  %s333 = scalar_lea.vmem [#allocation2], 145
  %v334 = vld [vmem:[%s333] ss:$2 sm:$0xff]
  %s335 = scalar_lea.vmem [#allocation2], 193
  %v336 = vld [vmem:[%s335] ss:$2 sm:$0xff]
  %s337 = scalar_lea.vmem [#allocation2], 241
  %v338 = vld [vmem:[%s337] ss:$2 sm:$0xff]
  %s339 = scalar_lea.vmem [#allocation2], 289
  %v340 = vld [vmem:[%s339] ss:$2 sm:$0xff]
  %s341 = scalar_lea.vmem [#allocation2], 337
  %v342 = vld [vmem:[%s341] ss:$2 sm:$0xff]
  %s343 = scalar_lea.vmem [#allocation2], 433
  %v344 = vld [vmem:[%s343] ss:$2 sm:$0xff]
  %s345 = scalar_lea.vmem [#allocation2], 481
  %v346 = vld [vmem:[%s345] ss:$2 sm:$0xff]
  %s347 = scalar_lea.vmem [#allocation2], 529
  %v348 = vld [vmem:[%s347] ss:$2 sm:$0xff]
  %s349 = scalar_lea.vmem [#allocation2], 577
  %v350 = vld [vmem:[%s349] ss:$2 sm:$0xff]
  %s351 = scalar_lea.vmem [#allocation2], 625
  %v352 = vld [vmem:[%s351] ss:$2 sm:$0xff]
  %s353 = scalar_lea.vmem [#allocation2], 673
  %v354 = vld [vmem:[%s353] ss:$2 sm:$0xff]
  %s355 = scalar_lea.vmem [#allocation2], 721
  %v356 = vld [vmem:[%s355] ss:$2 sm:$0xff]
  %s357 = scalar_lea.vmem [#allocation2], 769
  %v358 = vld [vmem:[%s357] ss:$2 sm:$0xff]
  %s359 = scalar_lea.vmem [#allocation2], 2
  %v360 = vld [vmem:[%s359] ss:$2 sm:$0xff]
  %s361 = scalar_lea.vmem [#allocation2], 50
  %v362 = vld [vmem:[%s361] ss:$2 sm:$0xff]
  %s363 = scalar_lea.vmem [#allocation2], 98
  %v364 = vld [vmem:[%s363] ss:$2 sm:$0xff]
  %s365 = scalar_lea.vmem [#allocation2], 146
  %v366 = vld [vmem:[%s365] ss:$2 sm:$0xff]
  %s367 = scalar_lea.vmem [#allocation2], 194
  %v368 = vld [vmem:[%s367] ss:$2 sm:$0xff]
  %s369 = scalar_lea.vmem [#allocation2], 242
  %v370 = vld [vmem:[%s369] ss:$2 sm:$0xff]
  %s371 = scalar_lea.vmem [#allocation2], 290
  %v372 = vld [vmem:[%s371] ss:$2 sm:$0xff]
  %s373 = scalar_lea.vmem [#allocation2], 338
  %v374 = vld [vmem:[%s373] ss:$2 sm:$0xff]
  %s375 = scalar_lea.vmem [#allocation2], 434
  %v376 = vld [vmem:[%s375] ss:$2 sm:$0xff]
  %s377 = scalar_lea.vmem [#allocation2], 482
  %v378 = vld [vmem:[%s377] ss:$2 sm:$0xff]
  %s379 = scalar_lea.vmem [#allocation2], 530
  %v380 = vld [vmem:[%s379] ss:$2 sm:$0xff]
  %s381 = scalar_lea.vmem [#allocation2], 578
  %v382 = vld [vmem:[%s381] ss:$2 sm:$0xff]
  %s383 = scalar_lea.vmem [#allocation2], 626
  %v384 = vld [vmem:[%s383] ss:$2 sm:$0xff]
  %s385 = scalar_lea.vmem [#allocation2], 674
  %v386 = vld [vmem:[%s385] ss:$2 sm:$0xff]
  %s387 = scalar_lea.vmem [#allocation2], 722
  %v388 = vld [vmem:[%s387] ss:$2 sm:$0xff]
  %s389 = scalar_lea.vmem [#allocation2], 770
  %v390 = vld [vmem:[%s389] ss:$2 sm:$0xff]
  %v391 = vld [vmem:[%s231] ss:$2 sm:$0xff]
  %s392 = scalar_lea.vmem %s231, 48 [#allocation2]
  %v393 = vld [vmem:[%s392] ss:$2 sm:$0xff]
  %s394 = scalar_lea.vmem %s231, 96 [#allocation2]
  %v395 = vld [vmem:[%s394] ss:$2 sm:$0xff]
  %s396 = scalar_lea.vmem %s231, 144 [#allocation2]
  %v397 = vld [vmem:[%s396] ss:$2 sm:$0xff]
  %s398 = scalar_lea.vmem %s231, 192 [#allocation2]
  %v399 = vld [vmem:[%s398] ss:$2 sm:$0xff]
  %s400 = scalar_lea.vmem %s231, 240 [#allocation2]
  %v401 = vld [vmem:[%s400] ss:$2 sm:$0xff]
  %s402 = scalar_lea.vmem %s231, 288 [#allocation2]
  %v403 = vld [vmem:[%s402] ss:$2 sm:$0xff]
  %s404 = scalar_lea.vmem %s231, 336 [#allocation2]
  %v405 = vld [vmem:[%s404] ss:$2 sm:$0xff]
  %s406 = scalar_lea.vmem %s231, 432 [#allocation2]
  %v407 = vld [vmem:[%s406] ss:$2 sm:$0xff]
  %s408 = scalar_lea.vmem %s231, 480 [#allocation2]
  %v409 = vld [vmem:[%s408] ss:$2 sm:$0xff]
  %s410 = scalar_lea.vmem %s231, 528 [#allocation2]
  %v411 = vld [vmem:[%s410] ss:$2 sm:$0xff]
  %s412 = scalar_lea.vmem %s231, 576 [#allocation2]
  %v413 = vld [vmem:[%s412] ss:$2 sm:$0xff]
  %s414 = scalar_lea.vmem %s231, 624 [#allocation2]
  %v415 = vld [vmem:[%s414] ss:$2 sm:$0xff]
  %s416 = scalar_lea.vmem %s231, 672 [#allocation2]
  %v417 = vld [vmem:[%s416] ss:$2 sm:$0xff]
  %s418 = scalar_lea.vmem %s231, 720 [#allocation2]
  %v419 = vld [vmem:[%s418] ss:$2 sm:$0xff]
  %s420 = scalar_lea.vmem %s231, 768 [#allocation2]
  %v421 = vld [vmem:[%s420] ss:$2 sm:$0xff]
  %s422 = scalar_lea.vmem %s231, 1 [#allocation2]
  %v423 = vld [vmem:[%s422] ss:$2 sm:$0xff]
  %s424 = scalar_lea.vmem %s231, 49 [#allocation2]
  %v425 = vld [vmem:[%s424] ss:$2 sm:$0xff]
  %s426 = scalar_lea.vmem %s231, 97 [#allocation2]
  %v427 = vld [vmem:[%s426] ss:$2 sm:$0xff]
  %s428 = scalar_lea.vmem %s231, 145 [#allocation2]
  %v429 = vld [vmem:[%s428] ss:$2 sm:$0xff]
  %s430 = scalar_lea.vmem %s231, 193 [#allocation2]
  %v431 = vld [vmem:[%s430] ss:$2 sm:$0xff]
  %s432 = scalar_lea.vmem %s231, 241 [#allocation2]
  %v433 = vld [vmem:[%s432] ss:$2 sm:$0xff]
  %s434 = scalar_lea.vmem %s231, 289 [#allocation2]
  %v435 = vld [vmem:[%s434] ss:$2 sm:$0xff]
  %s436 = scalar_lea.vmem %s231, 337 [#allocation2]
  %v437 = vld [vmem:[%s436] ss:$2 sm:$0xff]
  %s438 = scalar_lea.vmem %s231, 433 [#allocation2]
  %v439 = vld [vmem:[%s438] ss:$2 sm:$0xff]
  %s440 = scalar_lea.vmem %s231, 481 [#allocation2]
  %v441 = vld [vmem:[%s440] ss:$2 sm:$0xff]
  %s442 = scalar_lea.vmem %s231, 529 [#allocation2]
  %v443 = vld [vmem:[%s442] ss:$2 sm:$0xff]
  %s444 = scalar_lea.vmem %s231, 577 [#allocation2]
  %v445 = vld [vmem:[%s444] ss:$2 sm:$0xff]
  %s446 = scalar_lea.vmem %s231, 625 [#allocation2]
  %v447 = vld [vmem:[%s446] ss:$2 sm:$0xff]
  %s448 = scalar_lea.vmem %s231, 673 [#allocation2]
  %v449 = vld [vmem:[%s448] ss:$2 sm:$0xff]
  %s450 = scalar_lea.vmem %s231, 721 [#allocation2]
  %v451 = vld [vmem:[%s450] ss:$2 sm:$0xff]
  %s452 = scalar_lea.vmem %s231, 769 [#allocation2]
  %v453 = vld [vmem:[%s452] ss:$2 sm:$0xff]
  %s454 = scalar_lea.vmem %s231, 2 [#allocation2]
  %v455 = vld [vmem:[%s454] ss:$2 sm:$0xff]
  %s456 = scalar_lea.vmem %s231, 50 [#allocation2]
  %v457 = vld [vmem:[%s456] ss:$2 sm:$0xff]
  %s458 = scalar_lea.vmem %s231, 98 [#allocation2]
  %v459 = vld [vmem:[%s458] ss:$2 sm:$0xff]
  %s460 = scalar_lea.vmem %s231, 146 [#allocation2]
  %v461 = vld [vmem:[%s460] ss:$2 sm:$0xff]
  %s462 = scalar_lea.vmem %s231, 194 [#allocation2]
  %v463 = vld [vmem:[%s462] ss:$2 sm:$0xff]
  %s464 = scalar_lea.vmem %s231, 242 [#allocation2]
  %v465 = vld [vmem:[%s464] ss:$2 sm:$0xff]
  %s466 = scalar_lea.vmem %s231, 290 [#allocation2]
  %v467 = vld [vmem:[%s466] ss:$2 sm:$0xff]
  %s468 = scalar_lea.vmem %s231, 338 [#allocation2]
  %v469 = vld [vmem:[%s468] ss:$2 sm:$0xff]
  %s470 = scalar_lea.vmem %s231, 434 [#allocation2]
  %v471 = vld [vmem:[%s470] ss:$2 sm:$0xff]
  %s472 = scalar_lea.vmem %s231, 482 [#allocation2]
  %v473 = vld [vmem:[%s472] ss:$2 sm:$0xff]
  %s474 = scalar_lea.vmem %s231, 530 [#allocation2]
  %v475 = vld [vmem:[%s474] ss:$2 sm:$0xff]
  %s476 = scalar_lea.vmem %s231, 578 [#allocation2]
  %v477 = vld [vmem:[%s476] ss:$2 sm:$0xff]
  %s478 = scalar_lea.vmem %s231, 626 [#allocation2]
  %v479 = vld [vmem:[%s478] ss:$2 sm:$0xff]
  %s480 = scalar_lea.vmem %s231, 674 [#allocation2]
  %v481 = vld [vmem:[%s480] ss:$2 sm:$0xff]
  %s482 = scalar_lea.vmem %s231, 722 [#allocation2]
  %v483 = vld [vmem:[%s482] ss:$2 sm:$0xff]
  %s484 = scalar_lea.vmem %s231, 770 [#allocation2]
  %v485 = vld [vmem:[%s484] ss:$2 sm:$0xff]
  %s486 = scalar_lea.vmem [#allocation2], 48
  %v487 = vld [vmem:[%s486] ss:$2 sm:$0xff]
  %s488 = scalar_lea.vmem %s486, 48 [#allocation2]
  %v489 = vld [vmem:[%s488] ss:$2 sm:$0xff]
  %s490 = scalar_lea.vmem %s486, 96 [#allocation2]
  %v491 = vld [vmem:[%s490] ss:$2 sm:$0xff]
  %s492 = scalar_lea.vmem %s486, 144 [#allocation2]
  %v493 = vld [vmem:[%s492] ss:$2 sm:$0xff]
  %s494 = scalar_lea.vmem %s486, 192 [#allocation2]
  %v495 = vld [vmem:[%s494] ss:$2 sm:$0xff]
  %s496 = scalar_lea.vmem %s486, 240 [#allocation2]
  %v497 = vld [vmem:[%s496] ss:$2 sm:$0xff]
  %s498 = scalar_lea.vmem %s486, 288 [#allocation2]
  %v499 = vld [vmem:[%s498] ss:$2 sm:$0xff]
  %s500 = scalar_lea.vmem %s486, 336 [#allocation2]
  %v501 = vld [vmem:[%s500] ss:$2 sm:$0xff]
  %s502 = scalar_lea.vmem %s486, 432 [#allocation2]
  %v503 = vld [vmem:[%s502] ss:$2 sm:$0xff]
  %s504 = scalar_lea.vmem %s486, 480 [#allocation2]
  %v505 = vld [vmem:[%s504] ss:$2 sm:$0xff]
  %s506 = scalar_lea.vmem %s486, 528 [#allocation2]
  %v507 = vld [vmem:[%s506] ss:$2 sm:$0xff]
  %s508 = scalar_lea.vmem %s486, 576 [#allocation2]
  %v509 = vld [vmem:[%s508] ss:$2 sm:$0xff]
  %s510 = scalar_lea.vmem %s486, 624 [#allocation2]
  %v511 = vld [vmem:[%s510] ss:$2 sm:$0xff]
  %s512 = scalar_lea.vmem %s486, 672 [#allocation2]
  %v513 = vld [vmem:[%s512] ss:$2 sm:$0xff]
  %s514 = scalar_lea.vmem %s486, 720 [#allocation2]
  %v515 = vld [vmem:[%s514] ss:$2 sm:$0xff]
  %s516 = scalar_lea.vmem %s486, 768 [#allocation2]
  %v517 = vld [vmem:[%s516] ss:$2 sm:$0xff]
  %s518 = scalar_lea.vmem %s486, 1 [#allocation2]
  %v519 = vld [vmem:[%s518] ss:$2 sm:$0xff]
  %s520 = scalar_lea.vmem %s486, 49 [#allocation2]
  %v521 = vld [vmem:[%s520] ss:$2 sm:$0xff]
  %s522 = scalar_lea.vmem %s486, 97 [#allocation2]
  %v523 = vld [vmem:[%s522] ss:$2 sm:$0xff]
  %s524 = scalar_lea.vmem %s486, 145 [#allocation2]
  %v525 = vld [vmem:[%s524] ss:$2 sm:$0xff]
  %s526 = scalar_lea.vmem %s486, 193 [#allocation2]
  %v527 = vld [vmem:[%s526] ss:$2 sm:$0xff]
  %s528 = scalar_lea.vmem %s486, 241 [#allocation2]
  %v529 = vld [vmem:[%s528] ss:$2 sm:$0xff]
  %s530 = scalar_lea.vmem %s486, 289 [#allocation2]
  %v531 = vld [vmem:[%s530] ss:$2 sm:$0xff]
  %s532 = scalar_lea.vmem %s486, 337 [#allocation2]
  %v533 = vld [vmem:[%s532] ss:$2 sm:$0xff]
  %s534 = scalar_lea.vmem %s486, 433 [#allocation2]
  %v535 = vld [vmem:[%s534] ss:$2 sm:$0xff]
  %s536 = scalar_lea.vmem %s486, 481 [#allocation2]
  %v537 = vld [vmem:[%s536] ss:$2 sm:$0xff]
  %s538 = scalar_lea.vmem %s486, 529 [#allocation2]
  %v539 = vld [vmem:[%s538] ss:$2 sm:$0xff]
  %s540 = scalar_lea.vmem %s486, 577 [#allocation2]
  %v541 = vld [vmem:[%s540] ss:$2 sm:$0xff]
  %s542 = scalar_lea.vmem %s486, 625 [#allocation2]
  %v543 = vld [vmem:[%s542] ss:$2 sm:$0xff]
  %s544 = scalar_lea.vmem %s486, 673 [#allocation2]
  %v545 = vld [vmem:[%s544] ss:$2 sm:$0xff]
  %s546 = scalar_lea.vmem %s486, 721 [#allocation2]
  %v547 = vld [vmem:[%s546] ss:$2 sm:$0xff]
  %s548 = scalar_lea.vmem %s486, 769 [#allocation2]
  %v549 = vld [vmem:[%s548] ss:$2 sm:$0xff]
  %s550 = scalar_lea.vmem %s486, 2 [#allocation2]
  %v551 = vld [vmem:[%s550] ss:$2 sm:$0xff]
  %s552 = scalar_lea.vmem %s486, 50 [#allocation2]
  %v553 = vld [vmem:[%s552] ss:$2 sm:$0xff]
  %s554 = scalar_lea.vmem %s486, 98 [#allocation2]
  %v555 = vld [vmem:[%s554] ss:$2 sm:$0xff]
  %s556 = scalar_lea.vmem %s486, 146 [#allocation2]
  %v557 = vld [vmem:[%s556] ss:$2 sm:$0xff]
  %s558 = scalar_lea.vmem %s486, 194 [#allocation2]
  %v559 = vld [vmem:[%s558] ss:$2 sm:$0xff]
  %s560 = scalar_lea.vmem %s486, 242 [#allocation2]
  %v561 = vld [vmem:[%s560] ss:$2 sm:$0xff]
  %s562 = scalar_lea.vmem %s486, 290 [#allocation2]
  %v563 = vld [vmem:[%s562] ss:$2 sm:$0xff]
  %s564 = scalar_lea.vmem %s486, 338 [#allocation2]
  %v565 = vld [vmem:[%s564] ss:$2 sm:$0xff]
  %s566 = scalar_lea.vmem %s486, 434 [#allocation2]
  %v567 = vld [vmem:[%s566] ss:$2 sm:$0xff]
  %s568 = scalar_lea.vmem %s486, 482 [#allocation2]
  %v569 = vld [vmem:[%s568] ss:$2 sm:$0xff]
  %s570 = scalar_lea.vmem %s486, 530 [#allocation2]
  %v571 = vld [vmem:[%s570] ss:$2 sm:$0xff]
  %s572 = scalar_lea.vmem %s486, 578 [#allocation2]
  %v573 = vld [vmem:[%s572] ss:$2 sm:$0xff]
  %s574 = scalar_lea.vmem %s486, 626 [#allocation2]
  %v575 = vld [vmem:[%s574] ss:$2 sm:$0xff]
  %s576 = scalar_lea.vmem %s486, 674 [#allocation2]
  %v577 = vld [vmem:[%s576] ss:$2 sm:$0xff]
  %s578 = scalar_lea.vmem %s486, 722 [#allocation2]
  %v579 = vld [vmem:[%s578] ss:$2 sm:$0xff]
  %s580 = scalar_lea.vmem %s486, 770 [#allocation2]
  %v581 = vld [vmem:[%s580] ss:$2 sm:$0xff]
  %598 = vrot.lane.b32.xlu0 %v328, 8
  %v599 = vpop.permute.xlu0 %598
  %600 = vrot.lane.b32.xlu0 %v330, 8
  %v601 = vpop.permute.xlu0 %600
  %602 = vrot.lane.b32.xlu0 %v332, 8
  %v603 = vpop.permute.xlu0 %602
  %604 = vrot.lane.b32.xlu0 %v334, 8
  %v605 = vpop.permute.xlu0 %604
  %606 = vrot.lane.b32.xlu0 %v336, 8
  %v607 = vpop.permute.xlu0 %606
  %608 = vrot.lane.b32.xlu0 %v338, 8
  %v609 = vpop.permute.xlu0 %608
  %610 = vrot.lane.b32.xlu0 %v340, 8
  %v611 = vpop.permute.xlu0 %610
  %612 = vrot.lane.b32.xlu0 %v342, 8
  %v613 = vpop.permute.xlu0 %612
  %614 = vrot.lane.b32.xlu0 %v344, 8
  %v615 = vpop.permute.xlu0 %614
  %616 = vrot.lane.b32.xlu0 %v346, 8
  %v617 = vpop.permute.xlu0 %616
  %618 = vrot.lane.b32.xlu0 %v348, 8
  %v619 = vpop.permute.xlu0 %618
  %620 = vrot.lane.b32.xlu0 %v350, 8
  %v621 = vpop.permute.xlu0 %620
  %622 = vrot.lane.b32.xlu0 %v352, 8
  %v623 = vpop.permute.xlu0 %622
  %624 = vrot.lane.b32.xlu0 %v354, 8
  %v625 = vpop.permute.xlu0 %624
  %626 = vrot.lane.b32.xlu0 %v356, 8
  %v627 = vpop.permute.xlu0 %626
  %628 = vrot.lane.b32.xlu0 %v358, 8
  %v629 = vpop.permute.xlu0 %628
  %662 = vrot.lane.b32.xlu0 %v360, 16
  %v663 = vpop.permute.xlu0 %662
  %664 = vrot.lane.b32.xlu0 %v362, 16
  %v665 = vpop.permute.xlu0 %664
  %666 = vrot.lane.b32.xlu0 %v364, 16
  %v667 = vpop.permute.xlu0 %666
  %668 = vrot.lane.b32.xlu0 %v366, 16
  %v669 = vpop.permute.xlu0 %668
  %670 = vrot.lane.b32.xlu0 %v368, 16
  %v671 = vpop.permute.xlu0 %670
  %672 = vrot.lane.b32.xlu0 %v370, 16
  %v673 = vpop.permute.xlu0 %672
  %674 = vrot.lane.b32.xlu0 %v372, 16
  %v675 = vpop.permute.xlu0 %674
  %676 = vrot.lane.b32.xlu0 %v374, 16
  %v677 = vpop.permute.xlu0 %676
  %678 = vrot.lane.b32.xlu0 %v376, 16
  %v679 = vpop.permute.xlu0 %678
  %680 = vrot.lane.b32.xlu0 %v378, 16
  %v681 = vpop.permute.xlu0 %680
  %682 = vrot.lane.b32.xlu0 %v380, 16
  %v683 = vpop.permute.xlu0 %682
  %684 = vrot.lane.b32.xlu0 %v382, 16
  %v685 = vpop.permute.xlu0 %684
  %686 = vrot.lane.b32.xlu0 %v384, 16
  %v687 = vpop.permute.xlu0 %686
  %688 = vrot.lane.b32.xlu0 %v386, 16
  %v689 = vpop.permute.xlu0 %688
  %690 = vrot.lane.b32.xlu0 %v388, 16
  %v691 = vpop.permute.xlu0 %690
  %692 = vrot.lane.b32.xlu0 %v390, 16
  %v693 = vpop.permute.xlu0 %692
  %726 = vrot.lane.b32.xlu0 %v391, 24
  %v727 = vpop.permute.xlu0 %726
  %728 = vrot.lane.b32.xlu0 %v393, 24
  %v729 = vpop.permute.xlu0 %728
  %730 = vrot.lane.b32.xlu0 %v395, 24
  %v731 = vpop.permute.xlu0 %730
  %732 = vrot.lane.b32.xlu0 %v397, 24
  %v733 = vpop.permute.xlu0 %732
  %734 = vrot.lane.b32.xlu0 %v399, 24
  %v735 = vpop.permute.xlu0 %734
  %736 = vrot.lane.b32.xlu0 %v401, 24
  %v737 = vpop.permute.xlu0 %736
  %738 = vrot.lane.b32.xlu0 %v403, 24
  %v739 = vpop.permute.xlu0 %738
  %740 = vrot.lane.b32.xlu0 %v405, 24
  %v741 = vpop.permute.xlu0 %740
  %742 = vrot.lane.b32.xlu0 %v407, 24
  %v743 = vpop.permute.xlu0 %742
  %744 = vrot.lane.b32.xlu0 %v409, 24
  %v745 = vpop.permute.xlu0 %744
  %746 = vrot.lane.b32.xlu0 %v411, 24
  %v747 = vpop.permute.xlu0 %746
  %748 = vrot.lane.b32.xlu0 %v413, 24
  %v749 = vpop.permute.xlu0 %748
  %750 = vrot.lane.b32.xlu0 %v415, 24
  %v751 = vpop.permute.xlu0 %750
  %752 = vrot.lane.b32.xlu0 %v417, 24
  %v753 = vpop.permute.xlu0 %752
  %754 = vrot.lane.b32.xlu0 %v419, 24
  %v755 = vpop.permute.xlu0 %754
  %756 = vrot.lane.b32.xlu0 %v421, 24
  %v757 = vpop.permute.xlu0 %756
  %790 = vrot.lane.b32.xlu0 %v423, 32
  %v791 = vpop.permute.xlu0 %790
  %792 = vrot.lane.b32.xlu0 %v425, 32
  %v793 = vpop.permute.xlu0 %792
  %794 = vrot.lane.b32.xlu0 %v427, 32
  %v795 = vpop.permute.xlu0 %794
  %796 = vrot.lane.b32.xlu0 %v429, 32
  %v797 = vpop.permute.xlu0 %796
  %798 = vrot.lane.b32.xlu0 %v431, 32
  %v799 = vpop.permute.xlu0 %798
  %800 = vrot.lane.b32.xlu0 %v433, 32
  %v801 = vpop.permute.xlu0 %800
  %802 = vrot.lane.b32.xlu0 %v435, 32
  %v803 = vpop.permute.xlu0 %802
  %804 = vrot.lane.b32.xlu0 %v437, 32
  %v805 = vpop.permute.xlu0 %804
  %806 = vrot.lane.b32.xlu0 %v439, 32
  %v807 = vpop.permute.xlu0 %806
  %808 = vrot.lane.b32.xlu0 %v441, 32
  %v809 = vpop.permute.xlu0 %808
  %810 = vrot.lane.b32.xlu0 %v443, 32
  %v811 = vpop.permute.xlu0 %810
  %812 = vrot.lane.b32.xlu0 %v445, 32
  %v813 = vpop.permute.xlu0 %812
  %814 = vrot.lane.b32.xlu0 %v447, 32
  %v815 = vpop.permute.xlu0 %814
  %816 = vrot.lane.b32.xlu0 %v449, 32
  %v817 = vpop.permute.xlu0 %816
  %818 = vrot.lane.b32.xlu0 %v451, 32
  %v819 = vpop.permute.xlu0 %818
  %820 = vrot.lane.b32.xlu0 %v453, 32
  %v821 = vpop.permute.xlu0 %820
  %854 = vrot.lane.b32.xlu0 %v455, 40
  %v855 = vpop.permute.xlu0 %854
  %856 = vrot.lane.b32.xlu0 %v457, 40
  %v857 = vpop.permute.xlu0 %856
  %858 = vrot.lane.b32.xlu0 %v459, 40
  %v859 = vpop.permute.xlu0 %858
  %860 = vrot.lane.b32.xlu0 %v461, 40
  %v861 = vpop.permute.xlu0 %860
  %862 = vrot.lane.b32.xlu0 %v463, 40
  %v863 = vpop.permute.xlu0 %862
  %864 = vrot.lane.b32.xlu0 %v465, 40
  %v865 = vpop.permute.xlu0 %864
  %866 = vrot.lane.b32.xlu0 %v467, 40
  %v867 = vpop.permute.xlu0 %866
  %868 = vrot.lane.b32.xlu0 %v469, 40
  %v869 = vpop.permute.xlu0 %868
  %870 = vrot.lane.b32.xlu0 %v471, 40
  %v871 = vpop.permute.xlu0 %870
  %872 = vrot.lane.b32.xlu0 %v473, 40
  %v873 = vpop.permute.xlu0 %872
  %874 = vrot.lane.b32.xlu0 %v475, 40
  %v875 = vpop.permute.xlu0 %874
  %876 = vrot.lane.b32.xlu0 %v477, 40
  %v877 = vpop.permute.xlu0 %876
  %878 = vrot.lane.b32.xlu0 %v479, 40
  %v879 = vpop.permute.xlu0 %878
  %880 = vrot.lane.b32.xlu0 %v481, 40
  %v881 = vpop.permute.xlu0 %880
  %882 = vrot.lane.b32.xlu0 %v483, 40
  %v883 = vpop.permute.xlu0 %882
  %884 = vrot.lane.b32.xlu0 %v485, 40
  %v885 = vpop.permute.xlu0 %884
  %918 = vrot.lane.b32.xlu0 %v487, 48
  %v919 = vpop.permute.xlu0 %918
  %920 = vrot.lane.b32.xlu0 %v489, 48
  %v921 = vpop.permute.xlu0 %920
  %922 = vrot.lane.b32.xlu0 %v491, 48
  %v923 = vpop.permute.xlu0 %922
  %924 = vrot.lane.b32.xlu0 %v493, 48
  %v925 = vpop.permute.xlu0 %924
  %926 = vrot.lane.b32.xlu0 %v495, 48
  %v927 = vpop.permute.xlu0 %926
  %928 = vrot.lane.b32.xlu0 %v497, 48
  %v929 = vpop.permute.xlu0 %928
  %930 = vrot.lane.b32.xlu0 %v499, 48
  %v931 = vpop.permute.xlu0 %930
  %932 = vrot.lane.b32.xlu0 %v501, 48
  %v933 = vpop.permute.xlu0 %932
  %934 = vrot.lane.b32.xlu0 %v503, 48
  %v935 = vpop.permute.xlu0 %934
  %936 = vrot.lane.b32.xlu0 %v505, 48
  %v937 = vpop.permute.xlu0 %936
  %938 = vrot.lane.b32.xlu0 %v507, 48
  %v939 = vpop.permute.xlu0 %938
  %940 = vrot.lane.b32.xlu0 %v509, 48
  %v941 = vpop.permute.xlu0 %940
  %942 = vrot.lane.b32.xlu0 %v511, 48
  %v943 = vpop.permute.xlu0 %942
  %944 = vrot.lane.b32.xlu0 %v513, 48
  %v945 = vpop.permute.xlu0 %944
  %946 = vrot.lane.b32.xlu0 %v515, 48
  %v947 = vpop.permute.xlu0 %946
  %948 = vrot.lane.b32.xlu0 %v517, 48
  %v949 = vpop.permute.xlu0 %948
  %982 = vrot.lane.b32.xlu0 %v519, 56
  %v983 = vpop.permute.xlu0 %982
  %984 = vrot.lane.b32.xlu0 %v521, 56
  %v985 = vpop.permute.xlu0 %984
  %986 = vrot.lane.b32.xlu0 %v523, 56
  %v987 = vpop.permute.xlu0 %986
  %988 = vrot.lane.b32.xlu0 %v525, 56
  %v989 = vpop.permute.xlu0 %988
  %990 = vrot.lane.b32.xlu0 %v527, 56
  %v991 = vpop.permute.xlu0 %990
  %992 = vrot.lane.b32.xlu0 %v529, 56
  %v993 = vpop.permute.xlu0 %992
  %994 = vrot.lane.b32.xlu0 %v531, 56
  %v995 = vpop.permute.xlu0 %994
  %996 = vrot.lane.b32.xlu0 %v533, 56
  %v997 = vpop.permute.xlu0 %996
  %998 = vrot.lane.b32.xlu0 %v535, 56
  %v999 = vpop.permute.xlu0 %998
  %1000 = vrot.lane.b32.xlu0 %v537, 56
  %v1001 = vpop.permute.xlu0 %1000
  %1002 = vrot.lane.b32.xlu0 %v539, 56
  %v1003 = vpop.permute.xlu0 %1002
  %1004 = vrot.lane.b32.xlu0 %v541, 56
  %v1005 = vpop.permute.xlu0 %1004
  %1006 = vrot.lane.b32.xlu0 %v543, 56
  %v1007 = vpop.permute.xlu0 %1006
  %1008 = vrot.lane.b32.xlu0 %v545, 56
  %v1009 = vpop.permute.xlu0 %1008
  %1010 = vrot.lane.b32.xlu0 %v547, 56
  %v1011 = vpop.permute.xlu0 %1010
  %1012 = vrot.lane.b32.xlu0 %v549, 56
  %v1013 = vpop.permute.xlu0 %1012
  %1046 = vrot.lane.b32.xlu0 %v551, 64
  %v1047 = vpop.permute.xlu0 %1046
  %1048 = vrot.lane.b32.xlu0 %v553, 64
  %v1049 = vpop.permute.xlu0 %1048
  %1050 = vrot.lane.b32.xlu0 %v555, 64
  %v1051 = vpop.permute.xlu0 %1050
  %1052 = vrot.lane.b32.xlu0 %v557, 64
  %v1053 = vpop.permute.xlu0 %1052
  %1054 = vrot.lane.b32.xlu0 %v559, 64
  %v1055 = vpop.permute.xlu0 %1054
  %1056 = vrot.lane.b32.xlu0 %v561, 64
  %v1057 = vpop.permute.xlu0 %1056
  %1058 = vrot.lane.b32.xlu0 %v563, 64
  %v1059 = vpop.permute.xlu0 %1058
  %1060 = vrot.lane.b32.xlu0 %v565, 64
  %v1061 = vpop.permute.xlu0 %1060
  %1062 = vrot.lane.b32.xlu0 %v567, 64
  %v1063 = vpop.permute.xlu0 %1062
  %1064 = vrot.lane.b32.xlu0 %v569, 64
  %v1065 = vpop.permute.xlu0 %1064
  %1066 = vrot.lane.b32.xlu0 %v571, 64
  %v1067 = vpop.permute.xlu0 %1066
  %1068 = vrot.lane.b32.xlu0 %v573, 64
  %v1069 = vpop.permute.xlu0 %1068
  %1070 = vrot.lane.b32.xlu0 %v575, 64
  %v1071 = vpop.permute.xlu0 %1070
  %1072 = vrot.lane.b32.xlu0 %v577, 64
  %v1073 = vpop.permute.xlu0 %1072
  %1074 = vrot.lane.b32.xlu0 %v579, 64
  %v1075 = vpop.permute.xlu0 %1074
  %1076 = vrot.lane.b32.xlu0 %v581, 64
  %v1077 = vpop.permute.xlu0 %1076
  %v1094 = vsel %vm121, %v296, %v599
  %v1095 = vsel %vm121, %v298, %v601
  %v1096 = vsel %vm121, %v300, %v603
  %v1097 = vsel %vm121, %v302, %v605
  %v1098 = vsel %vm121, %v304, %v607
  %v1099 = vsel %vm121, %v306, %v609
  %v1100 = vsel %vm121, %v308, %v611
  %v1101 = vsel %vm121, %v310, %v613
  %v1102 = vsel %vm121, %v312, %v615
  %v1103 = vsel %vm121, %v314, %v617
  %v1104 = vsel %vm121, %v316, %v619
  %v1105 = vsel %vm121, %v318, %v621
  %v1106 = vsel %vm121, %v320, %v623
  %v1107 = vsel %vm121, %v322, %v625
  %v1108 = vsel %vm121, %v324, %v627
  %v1109 = vsel %vm121, %v326, %v629
  %vm1110 = vcmask 130048
  %v1111 = vsel %vm1110, %v1094, %v663
  %v1112 = vsel %vm1110, %v1095, %v665
  %v1113 = vsel %vm1110, %v1096, %v667
  %v1114 = vsel %vm1110, %v1097, %v669
  %v1115 = vsel %vm1110, %v1098, %v671
  %v1116 = vsel %vm1110, %v1099, %v673
  %v1117 = vsel %vm1110, %v1100, %v675
  %v1118 = vsel %vm1110, %v1101, %v677
  %v1119 = vsel %vm1110, %v1102, %v679
  %v1120 = vsel %vm1110, %v1103, %v681
  %v1121 = vsel %vm1110, %v1104, %v683
  %v1122 = vsel %vm1110, %v1105, %v685
  %v1123 = vsel %vm1110, %v1106, %v687
  %v1124 = vsel %vm1110, %v1107, %v689
  %v1125 = vsel %vm1110, %v1108, %v691
  %v1126 = vsel %vm1110, %v1109, %v693
  %vm1127 = vcmask 195584
  %v1128 = vsel %vm1127, %v1111, %v727
  %v1129 = vsel %vm1127, %v1112, %v729
  %v1130 = vsel %vm1127, %v1113, %v731
  %v1131 = vsel %vm1127, %v1114, %v733
  %v1132 = vsel %vm1127, %v1115, %v735
  %v1133 = vsel %vm1127, %v1116, %v737
  %v1134 = vsel %vm1127, %v1117, %v739
  %v1135 = vsel %vm1127, %v1118, %v741
  %v1136 = vsel %vm1127, %v1119, %v743
  %v1137 = vsel %vm1127, %v1120, %v745
  %v1138 = vsel %vm1127, %v1121, %v747
  %v1139 = vsel %vm1127, %v1122, %v749
  %v1140 = vsel %vm1127, %v1123, %v751
  %v1141 = vsel %vm1127, %v1124, %v753
  %v1142 = vsel %vm1127, %v1125, %v755
  %v1143 = vsel %vm1127, %v1126, %v757
  %vm1144 = vcmask 261120
  %v1145 = vsel %vm1144, %v1128, %v791
  %v1146 = vsel %vm1144, %v1129, %v793
  %v1147 = vsel %vm1144, %v1130, %v795
  %v1148 = vsel %vm1144, %v1131, %v797
  %v1149 = vsel %vm1144, %v1132, %v799
  %v1150 = vsel %vm1144, %v1133, %v801
  %v1151 = vsel %vm1144, %v1134, %v803
  %v1152 = vsel %vm1144, %v1135, %v805
  %v1153 = vsel %vm1144, %v1136, %v807
  %v1154 = vsel %vm1144, %v1137, %v809
  %v1155 = vsel %vm1144, %v1138, %v811
  %v1156 = vsel %vm1144, %v1139, %v813
  %v1157 = vsel %vm1144, %v1140, %v815
  %v1158 = vsel %vm1144, %v1141, %v817
  %v1159 = vsel %vm1144, %v1142, %v819
  %v1160 = vsel %vm1144, %v1143, %v821
  %vm1161 = vcmask 326656
  %v1162 = vsel %vm1161, %v1145, %v855
  %v1163 = vsel %vm1161, %v1146, %v857
  %v1164 = vsel %vm1161, %v1147, %v859
  %v1165 = vsel %vm1161, %v1148, %v861
  %v1166 = vsel %vm1161, %v1149, %v863
  %v1167 = vsel %vm1161, %v1150, %v865
  %v1168 = vsel %vm1161, %v1151, %v867
  %v1169 = vsel %vm1161, %v1152, %v869
  %v1170 = vsel %vm1161, %v1153, %v871
  %v1171 = vsel %vm1161, %v1154, %v873
  %v1172 = vsel %vm1161, %v1155, %v875
  %v1173 = vsel %vm1161, %v1156, %v877
  %v1174 = vsel %vm1161, %v1157, %v879
  %v1175 = vsel %vm1161, %v1158, %v881
  %v1176 = vsel %vm1161, %v1159, %v883
  %v1177 = vsel %vm1161, %v1160, %v885
  %vm1178 = vcmask 392192
  %v1179 = vsel %vm1178, %v1162, %v919
  %v1180 = vsel %vm1178, %v1163, %v921
  %v1181 = vsel %vm1178, %v1164, %v923
  %v1182 = vsel %vm1178, %v1165, %v925
  %v1183 = vsel %vm1178, %v1166, %v927
  %v1184 = vsel %vm1178, %v1167, %v929
  %v1185 = vsel %vm1178, %v1168, %v931
  %v1186 = vsel %vm1178, %v1169, %v933
  %v1187 = vsel %vm1178, %v1170, %v935
  %v1188 = vsel %vm1178, %v1171, %v937
  %v1189 = vsel %vm1178, %v1172, %v939
  %v1190 = vsel %vm1178, %v1173, %v941
  %v1191 = vsel %vm1178, %v1174, %v943
  %v1192 = vsel %vm1178, %v1175, %v945
  %v1193 = vsel %vm1178, %v1176, %v947
  %v1194 = vsel %vm1178, %v1177, %v949
  %vm1195 = vcmask 457728
  %v1196 = vsel %vm1195, %v1179, %v983
  %v1197 = vsel %vm1195, %v1180, %v985
  %v1198 = vsel %vm1195, %v1181, %v987
  %v1199 = vsel %vm1195, %v1182, %v989
  %v1200 = vsel %vm1195, %v1183, %v991
  %v1201 = vsel %vm1195, %v1184, %v993
  %v1202 = vsel %vm1195, %v1185, %v995
  %v1203 = vsel %vm1195, %v1186, %v997
  %v1204 = vsel %vm1195, %v1187, %v999
  %v1205 = vsel %vm1195, %v1188, %v1001
  %v1206 = vsel %vm1195, %v1189, %v1003
  %v1207 = vsel %vm1195, %v1190, %v1005
  %v1208 = vsel %vm1195, %v1191, %v1007
  %v1209 = vsel %vm1195, %v1192, %v1009
  %v1210 = vsel %vm1195, %v1193, %v1011
  %v1211 = vsel %vm1195, %v1194, %v1013
  %vm1212 = vcmask 523264
  %v1213 = vsel %vm1212, %v1196, %v1047
  %v1214 = vsel %vm1212, %v1197, %v1049
  %v1215 = vsel %vm1212, %v1198, %v1051
  %v1216 = vsel %vm1212, %v1199, %v1053
  %v1217 = vsel %vm1212, %v1200, %v1055
  %v1218 = vsel %vm1212, %v1201, %v1057
  %v1219 = vsel %vm1212, %v1202, %v1059
  %v1220 = vsel %vm1212, %v1203, %v1061
  %v1221 = vsel %vm1212, %v1204, %v1063
  %v1222 = vsel %vm1212, %v1205, %v1065
  %v1223 = vsel %vm1212, %v1206, %v1067
  %v1224 = vsel %vm1212, %v1207, %v1069
  %v1225 = vsel %vm1212, %v1208, %v1071
  %v1226 = vsel %vm1212, %v1209, %v1073
  %v1227 = vsel %vm1212, %v1210, %v1075
  %v1228 = vsel %vm1212, %v1211, %v1077
  %v1229 = vpack.c.bf16 %v1214, %v1213
  %v1230 = vpack.c.bf16 %v1216, %v1215
  %v1231 = vpack.c.bf16 %v1218, %v1217
  %v1232 = vpack.c.bf16 %v1220, %v1219
  %v1233 = vpack.c.bf16 %v1222, %v1221
  %v1234 = vpack.c.bf16 %v1224, %v1223
  %v1235 = vpack.c.bf16 %v1226, %v1225
  %v1236 = vpack.c.bf16 %v1228, %v1227
  %v1237 = vld [vmem:[%s1] sm:$0xf]
  %v1238 = vld [vmem:[%s1 + $0x4] sm:$0xf]
  %v1239 = vld [vmem:[%s1 + $0x8] sm:$0xf]
  %v1240 = vld [vmem:[%s1 + $0xc] sm:$0xf]
  %v1241 = vld [vmem:[%s1 + $0x10] sm:$0xf]
  %v1242 = vld [vmem:[%s1 + $0x14] sm:$0xf]
  %v1243 = vld [vmem:[%s1 + $0x18] sm:$0xf]
  %v1244 = vld [vmem:[%s1 + $0x1c] sm:$0xf]
  %v1245 = vld [vmem:[%s1 + $0x20] sm:$0xf]
  %v1246 = vld [vmem:[%s2] sm:$0x1]
  %v1248 = vperm.slane %v1246, 0
  %v1259 = vunpack.c.l.b16 %v1237
  %v1260 = vunpack.c.l.b16 %v1238
  %v1261 = vunpack.c.l.b16 %v1239
  %v1262 = vunpack.c.l.b16 %v1240
  %v1263 = vunpack.c.l.b16 %v1241
  %v1264 = vunpack.c.l.b16 %v1242
  %v1265 = vunpack.c.l.b16 %v1243
  %v1266 = vunpack.c.l.b16 %v1244
  %v1267 = vunpack.c.l.b16 %v1245
  %v1268 = vpack.c.b16 %v1260, %v1259
  %v1269 = vpack.c.b16 %v1262, %v1261
  %v1270 = vpack.c.b16 %v1264, %v1263
  %v1271 = vpack.c.b16 %v1266, %v1265
  %v1272 = vpack.c.b16 %v1267, %v1267
  %vm1277 = vcmask 588800
  %v1279 = vsel %vm1277, %v1229, 0
  %v1282 = vsel %vm1277, %v1230, 0
  %v1285 = vsel %vm1277, %v1231, 0
  %v1288 = vsel %vm1277, %v1232, 0
  %v1291 = vsel %vm1277, %v1233, 0
  %v1294 = vsel %vm1277, %v1234, 0
  %v1297 = vsel %vm1277, %v1235, 0
  %v1300 = vsel %vm1277, %v1236, 0
  %vm1302 = vcmask 1043456
  %v1304 = vsel %vm1302, %v1272, 0
  %1306 = vmatpush.bf16.msra.mxu0 0
  %1307 = vmatpush.bf16.msra.mxu0 0
  %1308 = vmatpush.bf16.msra.mxu0 0
  %1309 = vmatpush.bf16.msra.mxu0 %v1304
  %1310 = vmatpush.bf16.msra.mxu0 %v1271
  %1311 = vmatpush.bf16.msra.mxu0 %v1270
  %1312 = vmatpush.bf16.msra.mxu0 %v1269
  %1313 = vmatpush.bf16.msra.mxu0 %v1268
  %1314 = vmatmul.bf16.gmra.mxu0 %v1279
  %v1315 = vpop.f32.mrf.mxu0
  %v1316 = vadd.f32 %v1248, %v1315
  %v1317 = vpop.f32.mrf.mxu0
  %v1318 = vadd.f32 %v1248, %v1317
  %1319 = vmatmul.bf16.gmra.mxu0 %v1282
  %v1320 = vpop.f32.mrf.mxu0
  %v1321 = vadd.f32 %v1248, %v1320
  %v1322 = vpop.f32.mrf.mxu0
  %v1323 = vadd.f32 %v1248, %v1322
  %1324 = vmatmul.bf16.gmra.mxu0 %v1285
  %v1325 = vpop.f32.mrf.mxu0
  %v1326 = vadd.f32 %v1248, %v1325
  %v1327 = vpop.f32.mrf.mxu0
  %v1328 = vadd.f32 %v1248, %v1327
  %1329 = vmatmul.bf16.gmra.mxu0 %v1288
  %v1330 = vpop.f32.mrf.mxu0
  %v1331 = vadd.f32 %v1248, %v1330
  %v1332 = vpop.f32.mrf.mxu0
  %v1333 = vadd.f32 %v1248, %v1332
  %1334 = vmatmul.bf16.gmra.mxu0 %v1291
  %v1335 = vpop.f32.mrf.mxu0
  %v1336 = vadd.f32 %v1248, %v1335
  %v1337 = vpop.f32.mrf.mxu0
  %v1338 = vadd.f32 %v1248, %v1337
  %1339 = vmatmul.bf16.gmra.mxu0 %v1294
  %v1340 = vpop.f32.mrf.mxu0
  %v1341 = vadd.f32 %v1248, %v1340
  %v1342 = vpop.f32.mrf.mxu0
  %v1343 = vadd.f32 %v1248, %v1342
  %1344 = vmatmul.bf16.gmra.mxu0 %v1297
  %v1345 = vpop.f32.mrf.mxu0
  %v1346 = vadd.f32 %v1248, %v1345
  %v1347 = vpop.f32.mrf.mxu0
  %v1348 = vadd.f32 %v1248, %v1347
  %1349 = vmatmul.bf16.gmra.mxu0 %v1300
  %v1350 = vpop.f32.mrf.mxu0
  %v1351 = vadd.f32 %v1248, %v1350
  %v1352 = vpop.f32.mrf.mxu0
  %v1353 = vadd.f32 %v1248, %v1352
  %1354 = vdwg.mxu0
  %v1355 = vsel %vm1110, %v1316, 0.0
  %v1356 = vsel %vm1110, %v1318, 0.0
  %v1357 = vadd.f32 %v1355, %v1356
  %v1358 = vsel %vm1110, %v1321, 0.0
  %v1359 = vadd.f32 %v1357, %v1358
  %v1360 = vsel %vm1110, %v1323, 0.0
  %v1361 = vadd.f32 %v1359, %v1360
  %v1362 = vsel %vm1110, %v1326, 0.0
  %v1363 = vadd.f32 %v1361, %v1362
  %v1364 = vsel %vm1110, %v1328, 0.0
  %v1365 = vadd.f32 %v1363, %v1364
  %v1366 = vsel %vm1110, %v1331, 0.0
  %v1367 = vadd.f32 %v1365, %v1366
  %v1368 = vsel %vm1110, %v1333, 0.0
  %v1369 = vadd.f32 %v1367, %v1368
  %v1370 = vsel %vm1110, %v1336, 0.0
  %v1371 = vadd.f32 %v1369, %v1370
  %v1372 = vsel %vm1110, %v1338, 0.0
  %v1373 = vadd.f32 %v1371, %v1372
  %v1374 = vsel %vm1110, %v1341, 0.0
  %v1375 = vadd.f32 %v1373, %v1374
  %v1376 = vsel %vm1110, %v1343, 0.0
  %v1377 = vadd.f32 %v1375, %v1376
  %v1378 = vsel %vm1110, %v1346, 0.0
  %v1379 = vadd.f32 %v1377, %v1378
  %v1380 = vsel %vm1110, %v1348, 0.0
  %v1381 = vadd.f32 %v1379, %v1380
  %v1382 = vsel %vm1110, %v1351, 0.0
  %v1383 = vadd.f32 %v1381, %v1382
  %v1384 = vsel %vm1110, %v1353, 0.0
  %v1385 = vadd.f32 %v1383, %v1384
  %v1386 = vrot.slane %v1385, 4
  %v1387 = vadd.f32 %v1385, %v1386
  %v1388 = vrot.slane %v1387, 2
  %v1389 = vadd.f32 %v1387, %v1388
  %v1390 = vrot.slane %v1389, 1
  %v1391 = vadd.f32 %v1389, %v1390
  %v1392 = vmul.f32 %v1316, %v1316
  %v1393 = vmul.f32 %v1318, %v1318
  %v1394 = vmul.f32 %v1321, %v1321
  %v1395 = vmul.f32 %v1323, %v1323
  %v1396 = vmul.f32 %v1326, %v1326
  %v1397 = vmul.f32 %v1328, %v1328
  %v1398 = vmul.f32 %v1331, %v1331
  %v1399 = vmul.f32 %v1333, %v1333
  %v1400 = vmul.f32 %v1336, %v1336
  %v1401 = vmul.f32 %v1338, %v1338
  %v1402 = vmul.f32 %v1341, %v1341
  %v1403 = vmul.f32 %v1343, %v1343
  %v1404 = vmul.f32 %v1346, %v1346
  %v1405 = vmul.f32 %v1348, %v1348
  %v1406 = vmul.f32 %v1351, %v1351
  %v1407 = vmul.f32 %v1353, %v1353
  %v1408 = vsel %vm1110, %v1392, 0.0
  %v1409 = vsel %vm1110, %v1393, 0.0
  %v1410 = vadd.f32 %v1408, %v1409
  %v1411 = vsel %vm1110, %v1394, 0.0
  %v1412 = vadd.f32 %v1410, %v1411
  %v1413 = vsel %vm1110, %v1395, 0.0
  %v1414 = vadd.f32 %v1412, %v1413
  %v1415 = vsel %vm1110, %v1396, 0.0
  %v1416 = vadd.f32 %v1414, %v1415
  %v1417 = vsel %vm1110, %v1397, 0.0
  %v1418 = vadd.f32 %v1416, %v1417
  %v1419 = vsel %vm1110, %v1398, 0.0
  %v1420 = vadd.f32 %v1418, %v1419
  %v1421 = vsel %vm1110, %v1399, 0.0
  %v1422 = vadd.f32 %v1420, %v1421
  %v1423 = vsel %vm1110, %v1400, 0.0
  %v1424 = vadd.f32 %v1422, %v1423
  %v1425 = vsel %vm1110, %v1401, 0.0
  %v1426 = vadd.f32 %v1424, %v1425
  %v1427 = vsel %vm1110, %v1402, 0.0
  %v1428 = vadd.f32 %v1426, %v1427
  %v1429 = vsel %vm1110, %v1403, 0.0
  %v1430 = vadd.f32 %v1428, %v1429
  %v1431 = vsel %vm1110, %v1404, 0.0
  %v1432 = vadd.f32 %v1430, %v1431
  %v1433 = vsel %vm1110, %v1405, 0.0
  %v1434 = vadd.f32 %v1432, %v1433
  %v1435 = vsel %vm1110, %v1406, 0.0
  %v1436 = vadd.f32 %v1434, %v1435
  %v1437 = vsel %vm1110, %v1407, 0.0
  %v1438 = vadd.f32 %v1436, %v1437
  %v1439 = vrot.slane %v1438, 4
  %v1440 = vadd.f32 %v1438, %v1439
  %v1441 = vrot.slane %v1440, 2
  %v1442 = vadd.f32 %v1440, %v1441
  %v1443 = vrot.slane %v1442, 1
  %v1444 = vadd.f32 %v1442, %v1443
  %v1445 = vmul.f32 %v1391, 0.0078125
  %v1446 = vmul.f32 %v1444, 0.0078125
  %v1447 = vmul.f32 %v1445, %v1445
  %v1448 = vsub.f32 %v1446, %v1447
  %v1449 = vmax.f32 %v1448, 0.0
  %v1450 = vsub.f32 %v1316, %v1445
  %v1451 = vsub.f32 %v1318, %v1445
  %v1452 = vsub.f32 %v1321, %v1445
  %v1453 = vsub.f32 %v1323, %v1445
  %v1454 = vsub.f32 %v1326, %v1445
  %v1455 = vsub.f32 %v1328, %v1445
  %v1456 = vsub.f32 %v1331, %v1445
  %v1457 = vsub.f32 %v1333, %v1445
  %v1458 = vsub.f32 %v1336, %v1445
  %v1459 = vsub.f32 %v1338, %v1445
  %v1460 = vsub.f32 %v1341, %v1445
  %v1461 = vsub.f32 %v1343, %v1445
  %v1462 = vsub.f32 %v1346, %v1445
  %v1463 = vsub.f32 %v1348, %v1445
  %v1464 = vsub.f32 %v1351, %v1445
  %v1465 = vsub.f32 %v1353, %v1445
  %v1466 = vld [vmem:[%s3] sm:$0x1]
  %v1467 = vadd.f32 %v1449, 1e-05
  %v1468 = vrsqrt.pop %v1467
  %v1469 = vmul.f32 %v1468, %v1467
  %v1470 = vmul.f32 %v1469, %v1468
  %v1471 = vmul.f32 0.5, %v1470
  %v1472 = vsub.f32 1.5, %v1471
  %v1473 = vmul.f32 %v1468, %v1472
  %vm1474 = vweird.f32 %v1467
  %vm1475 = vweird.f32 %v1468
  %vm1476 = vmor %vm1474, %vm1475
  %v1477 = vsel %vm1476, %v1468, %v1473
  %v1478 = vmul.f32 %v1466, %v1477
  %v1480 = vperm.slane %v1478, 0
  %v1482 = vmul.f32 %v1450, %v1480
  %v1483 = vmul.f32 %v1451, %v1480
  %v1484 = vmul.f32 %v1452, %v1480
  %v1485 = vmul.f32 %v1453, %v1480
  %v1486 = vmul.f32 %v1454, %v1480
  %v1487 = vmul.f32 %v1455, %v1480
  %v1488 = vmul.f32 %v1456, %v1480
  %v1489 = vmul.f32 %v1457, %v1480
  %v1490 = vmul.f32 %v1458, %v1480
  %v1491 = vmul.f32 %v1459, %v1480
  %v1492 = vmul.f32 %v1460, %v1480
  %v1493 = vmul.f32 %v1461, %v1480
  %v1494 = vmul.f32 %v1462, %v1480
  %v1495 = vmul.f32 %v1463, %v1480
  %v1496 = vmul.f32 %v1464, %v1480
  %v1497 = vmul.f32 %v1465, %v1480
  %v1498 = vld [vmem:[%s4] sm:$0x1]
  %v1500 = vperm.slane %v1498, 0
  %v1502 = vadd.f32 %v1482, %v1500
  %v1503 = vadd.f32 %v1483, %v1500
  %v1504 = vadd.f32 %v1484, %v1500
  %v1505 = vadd.f32 %v1485, %v1500
  %v1506 = vadd.f32 %v1486, %v1500
  %v1507 = vadd.f32 %v1487, %v1500
  %v1508 = vadd.f32 %v1488, %v1500
  %v1509 = vadd.f32 %v1489, %v1500
  %v1510 = vadd.f32 %v1490, %v1500
  %v1511 = vadd.f32 %v1491, %v1500
  %v1512 = vadd.f32 %v1492, %v1500
  %v1513 = vadd.f32 %v1493, %v1500
  %v1514 = vadd.f32 %v1494, %v1500
  %v1515 = vadd.f32 %v1495, %v1500
  %v1516 = vadd.f32 %v1496, %v1500
  %v1517 = vadd.f32 %v1497, %v1500
  %v1518 = vmax.f32 %v1502, 0.0
  %v1519 = vmax.f32 %v1503, 0.0
  %v1520 = vmax.f32 %v1504, 0.0
  %v1521 = vmax.f32 %v1505, 0.0
  %v1522 = vmax.f32 %v1506, 0.0
  %v1523 = vmax.f32 %v1507, 0.0
  %v1524 = vmax.f32 %v1508, 0.0
  %v1525 = vmax.f32 %v1509, 0.0
  %v1526 = vmax.f32 %v1510, 0.0
  %v1527 = vmax.f32 %v1511, 0.0
  %v1528 = vmax.f32 %v1512, 0.0
  %v1529 = vmax.f32 %v1513, 0.0
  %v1530 = vmax.f32 %v1514, 0.0
  %v1531 = vmax.f32 %v1515, 0.0
  %v1532 = vmax.f32 %v1516, 0.0
  %v1533 = vmax.f32 %v1517, 0.0
  %v1534 = vpack.c.bf16 %v58, %v57
  %v1535 = vpack.c.bf16 %v60, %v59
  %v1536 = vpack.c.bf16 %v62, %v61
  %v1537 = vpack.c.bf16 %v64, %v63
  %v1538 = vpack.c.bf16 %v66, %v65
  %v1539 = vpack.c.bf16 %v68, %v67
  %v1540 = vpack.c.bf16 %v70, %v69
  %v1541 = vpack.c.bf16 %v72, %v71
  %v1542 = vpack.c.bf16 %v74, %v73
  %v1543 = vpack.c.bf16 %v76, %v75
  %v1544 = vpack.c.bf16 %v78, %v77
  %v1545 = vpack.c.bf16 %v80, %v79
  %v1546 = vpack.c.bf16 %v82, %v81
  %v1547 = vpack.c.bf16 %v84, %v83
  %v1548 = vpack.c.bf16 %v86, %v85
  %v1549 = vpack.c.bf16 %v88, %v87
  %v1550 = vpack.c.bf16 %v90, %v89
  %v1551 = vpack.c.bf16 %v92, %v91
  %v1552 = vpack.c.bf16 %v94, %v93
  %v1553 = vpack.c.bf16 %v96, %v95
  %v1554 = vpack.c.bf16 %v98, %v97
  %v1555 = vpack.c.bf16 %v100, %v99
  %v1556 = vpack.c.bf16 %v102, %v101
  %v1557 = vpack.c.bf16 %v104, %v103
  %v1558 = vpack.c.bf16 %v106, %v105
  %v1559 = vpack.c.bf16 %v108, %v107
  %v1560 = vpack.c.bf16 %v110, %v109
  %v1561 = vpack.c.bf16 %v112, %v111
  %v1562 = vpack.c.bf16 %v114, %v113
  %v1563 = vpack.c.bf16 %v116, %v115
  %v1564 = vpack.c.bf16 %v118, %v117
  %v1565 = vpack.c.bf16 %v120, %v119
  %v1566 = vld [vmem:[%s5] sm:$0xf]
  %v1567 = vld [vmem:[%s6] sm:$0x1]
  %v1569 = vperm.slane %v1567, 0
  %v1572 = vsel %vm121, %v1534, 0
  %v1575 = vsel %vm121, %v1535, 0
  %v1578 = vsel %vm121, %v1536, 0
  %v1581 = vsel %vm121, %v1537, 0
  %v1584 = vsel %vm121, %v1538, 0
  %v1587 = vsel %vm121, %v1539, 0
  %v1590 = vsel %vm121, %v1540, 0
  %v1593 = vsel %vm121, %v1541, 0
  %v1596 = vsel %vm121, %v1542, 0
  %v1599 = vsel %vm121, %v1543, 0
  %v1602 = vsel %vm121, %v1544, 0
  %v1605 = vsel %vm121, %v1545, 0
  %v1608 = vsel %vm121, %v1546, 0
  %v1611 = vsel %vm121, %v1547, 0
  %v1614 = vsel %vm121, %v1548, 0
  %v1617 = vsel %vm121, %v1549, 0
  %v1620 = vsel %vm121, %v1550, 0
  %v1623 = vsel %vm121, %v1551, 0
  %v1626 = vsel %vm121, %v1552, 0
  %v1629 = vsel %vm121, %v1553, 0
  %v1632 = vsel %vm121, %v1554, 0
  %v1635 = vsel %vm121, %v1555, 0
  %v1638 = vsel %vm121, %v1556, 0
  %v1641 = vsel %vm121, %v1557, 0
  %v1644 = vsel %vm121, %v1558, 0
  %v1647 = vsel %vm121, %v1559, 0
  %v1650 = vsel %vm121, %v1560, 0
  %v1653 = vsel %vm121, %v1561, 0
  %v1656 = vsel %vm121, %v1562, 0
  %v1659 = vsel %vm121, %v1563, 0
  %v1662 = vsel %vm121, %v1564, 0
  %v1665 = vsel %vm121, %v1565, 0
  %v1668 = vsel %vm1302, %v1566, 0
  %1670 = vmatpush.bf16.msra.mxu0 0
  %1671 = vmatpush.bf16.msra.mxu0 0
  %1672 = vmatpush.bf16.msra.mxu0 0
  %1673 = vmatpush.bf16.msra.mxu0 0
  %1674 = vmatpush.bf16.msra.mxu0 0
  %1675 = vmatpush.bf16.msra.mxu0 0
  %1676 = vmatpush.bf16.msra.mxu0 0
  %1677 = vmatpush.bf16.msra.mxu0 %v1668
  %1678 = vmatmul.bf16.gmra.mxu0 %v1572
  %v1679 = vpop.f32.mrf.mxu0
  %v1680 = vadd.f32 %v1569, %v1679
  %v1681 = vpop.f32.mrf.mxu0
  %v1682 = vadd.f32 %v1569, %v1681
  %1683 = vmatmul.bf16.gmra.mxu0 %v1575
  %v1684 = vpop.f32.mrf.mxu0
  %v1685 = vadd.f32 %v1569, %v1684
  %v1686 = vpop.f32.mrf.mxu0
  %v1687 = vadd.f32 %v1569, %v1686
  %1688 = vmatmul.bf16.gmra.mxu0 %v1578
  %v1689 = vpop.f32.mrf.mxu0
  %v1690 = vadd.f32 %v1569, %v1689
  %v1691 = vpop.f32.mrf.mxu0
  %v1692 = vadd.f32 %v1569, %v1691
  %1693 = vmatmul.bf16.gmra.mxu0 %v1581
  %v1694 = vpop.f32.mrf.mxu0
  %v1695 = vadd.f32 %v1569, %v1694
  %v1696 = vpop.f32.mrf.mxu0
  %v1697 = vadd.f32 %v1569, %v1696
  %1698 = vmatmul.bf16.gmra.mxu0 %v1584
  %v1699 = vpop.f32.mrf.mxu0
  %v1700 = vadd.f32 %v1569, %v1699
  %v1701 = vpop.f32.mrf.mxu0
  %v1702 = vadd.f32 %v1569, %v1701
  %1703 = vmatmul.bf16.gmra.mxu0 %v1587
  %v1704 = vpop.f32.mrf.mxu0
  %v1705 = vadd.f32 %v1569, %v1704
  %v1706 = vpop.f32.mrf.mxu0
  %v1707 = vadd.f32 %v1569, %v1706
  %1708 = vmatmul.bf16.gmra.mxu0 %v1590
  %v1709 = vpop.f32.mrf.mxu0
  %v1710 = vadd.f32 %v1569, %v1709
  %v1711 = vpop.f32.mrf.mxu0
  %v1712 = vadd.f32 %v1569, %v1711
  %1713 = vmatmul.bf16.gmra.mxu0 %v1593
  %v1714 = vpop.f32.mrf.mxu0
  %v1715 = vadd.f32 %v1569, %v1714
  %v1716 = vpop.f32.mrf.mxu0
  %v1717 = vadd.f32 %v1569, %v1716
  %1718 = vmatmul.bf16.gmra.mxu0 %v1596
  %v1719 = vpop.f32.mrf.mxu0
  %v1720 = vadd.f32 %v1569, %v1719
  %v1721 = vpop.f32.mrf.mxu0
  %v1722 = vadd.f32 %v1569, %v1721
  %1723 = vmatmul.bf16.gmra.mxu0 %v1599
  %v1724 = vpop.f32.mrf.mxu0
  %v1725 = vadd.f32 %v1569, %v1724
  %v1726 = vpop.f32.mrf.mxu0
  %v1727 = vadd.f32 %v1569, %v1726
  %1728 = vmatmul.bf16.gmra.mxu0 %v1602
  %v1729 = vpop.f32.mrf.mxu0
  %v1730 = vadd.f32 %v1569, %v1729
  %v1731 = vpop.f32.mrf.mxu0
  %v1732 = vadd.f32 %v1569, %v1731
  %1733 = vmatmul.bf16.gmra.mxu0 %v1605
  %v1734 = vpop.f32.mrf.mxu0
  %v1735 = vadd.f32 %v1569, %v1734
  %v1736 = vpop.f32.mrf.mxu0
  %v1737 = vadd.f32 %v1569, %v1736
  %1738 = vmatmul.bf16.gmra.mxu0 %v1608
  %v1739 = vpop.f32.mrf.mxu0
  %v1740 = vadd.f32 %v1569, %v1739
  %v1741 = vpop.f32.mrf.mxu0
  %v1742 = vadd.f32 %v1569, %v1741
  %1743 = vmatmul.bf16.gmra.mxu0 %v1611
  %v1744 = vpop.f32.mrf.mxu0
  %v1745 = vadd.f32 %v1569, %v1744
  %v1746 = vpop.f32.mrf.mxu0
  %v1747 = vadd.f32 %v1569, %v1746
  %1748 = vmatmul.bf16.gmra.mxu0 %v1614
  %v1749 = vpop.f32.mrf.mxu0
  %v1750 = vadd.f32 %v1569, %v1749
  %v1751 = vpop.f32.mrf.mxu0
  %v1752 = vadd.f32 %v1569, %v1751
  %1753 = vmatmul.bf16.gmra.mxu0 %v1617
  %v1754 = vpop.f32.mrf.mxu0
  %v1755 = vadd.f32 %v1569, %v1754
  %v1756 = vpop.f32.mrf.mxu0
  %v1757 = vadd.f32 %v1569, %v1756
  %1758 = vmatmul.bf16.gmra.mxu0 %v1620
  %v1759 = vpop.f32.mrf.mxu0
  %v1760 = vadd.f32 %v1569, %v1759
  %v1761 = vpop.f32.mrf.mxu0
  %v1762 = vadd.f32 %v1569, %v1761
  %1763 = vmatmul.bf16.gmra.mxu0 %v1623
  %v1764 = vpop.f32.mrf.mxu0
  %v1765 = vadd.f32 %v1569, %v1764
  %v1766 = vpop.f32.mrf.mxu0
  %v1767 = vadd.f32 %v1569, %v1766
  %1768 = vmatmul.bf16.gmra.mxu0 %v1626
  %v1769 = vpop.f32.mrf.mxu0
  %v1770 = vadd.f32 %v1569, %v1769
  %v1771 = vpop.f32.mrf.mxu0
  %v1772 = vadd.f32 %v1569, %v1771
  %1773 = vmatmul.bf16.gmra.mxu0 %v1629
  %v1774 = vpop.f32.mrf.mxu0
  %v1775 = vadd.f32 %v1569, %v1774
  %v1776 = vpop.f32.mrf.mxu0
  %v1777 = vadd.f32 %v1569, %v1776
  %1778 = vmatmul.bf16.gmra.mxu0 %v1632
  %v1779 = vpop.f32.mrf.mxu0
  %v1780 = vadd.f32 %v1569, %v1779
  %v1781 = vpop.f32.mrf.mxu0
  %v1782 = vadd.f32 %v1569, %v1781
  %1783 = vmatmul.bf16.gmra.mxu0 %v1635
  %v1784 = vpop.f32.mrf.mxu0
  %v1785 = vadd.f32 %v1569, %v1784
  %v1786 = vpop.f32.mrf.mxu0
  %v1787 = vadd.f32 %v1569, %v1786
  %1788 = vmatmul.bf16.gmra.mxu0 %v1638
  %v1789 = vpop.f32.mrf.mxu0
  %v1790 = vadd.f32 %v1569, %v1789
  %v1791 = vpop.f32.mrf.mxu0
  %v1792 = vadd.f32 %v1569, %v1791
  %1793 = vmatmul.bf16.gmra.mxu0 %v1641
  %v1794 = vpop.f32.mrf.mxu0
  %v1795 = vadd.f32 %v1569, %v1794
  %v1796 = vpop.f32.mrf.mxu0
  %v1797 = vadd.f32 %v1569, %v1796
  %1798 = vmatmul.bf16.gmra.mxu0 %v1644
  %v1799 = vpop.f32.mrf.mxu0
  %v1800 = vadd.f32 %v1569, %v1799
  %v1801 = vpop.f32.mrf.mxu0
  %v1802 = vadd.f32 %v1569, %v1801
  %1803 = vmatmul.bf16.gmra.mxu0 %v1647
  %v1804 = vpop.f32.mrf.mxu0
  %v1805 = vadd.f32 %v1569, %v1804
  %v1806 = vpop.f32.mrf.mxu0
  %v1807 = vadd.f32 %v1569, %v1806
  %1808 = vmatmul.bf16.gmra.mxu0 %v1650
  %v1809 = vpop.f32.mrf.mxu0
  %v1810 = vadd.f32 %v1569, %v1809
  %v1811 = vpop.f32.mrf.mxu0
  %v1812 = vadd.f32 %v1569, %v1811
  %1813 = vmatmul.bf16.gmra.mxu0 %v1653
  %v1814 = vpop.f32.mrf.mxu0
  %v1815 = vadd.f32 %v1569, %v1814
  %v1816 = vpop.f32.mrf.mxu0
  %v1817 = vadd.f32 %v1569, %v1816
  %1818 = vmatmul.bf16.gmra.mxu0 %v1656
  %v1819 = vpop.f32.mrf.mxu0
  %v1820 = vadd.f32 %v1569, %v1819
  %v1821 = vpop.f32.mrf.mxu0
  %v1822 = vadd.f32 %v1569, %v1821
  %1823 = vmatmul.bf16.gmra.mxu0 %v1659
  %v1824 = vpop.f32.mrf.mxu0
  %v1825 = vadd.f32 %v1569, %v1824
  %v1826 = vpop.f32.mrf.mxu0
  %v1827 = vadd.f32 %v1569, %v1826
  %1828 = vmatmul.bf16.gmra.mxu0 %v1662
  %v1829 = vpop.f32.mrf.mxu0
  %v1830 = vadd.f32 %v1569, %v1829
  %v1831 = vpop.f32.mrf.mxu0
  %v1832 = vadd.f32 %v1569, %v1831
  %1833 = vmatmul.bf16.gmra.mxu0 %v1665
  %v1834 = vpop.f32.mrf.mxu0
  %v1835 = vadd.f32 %v1569, %v1834
  %v1836 = vpop.f32.mrf.mxu0
  %v1837 = vadd.f32 %v1569, %v1836
  %1838 = vdwg.mxu0
  %vm1839 = vcmask 31744
  %v1840 = vsel %vm1839, %v1680, 0.0
  %v1841 = vsel %vm1839, %v1682, 0.0
  %v1842 = vadd.f32 %v1840, %v1841
  %v1843 = vsel %vm1839, %v1685, 0.0
  %v1844 = vadd.f32 %v1842, %v1843
  %v1845 = vsel %vm1839, %v1687, 0.0
  %v1846 = vadd.f32 %v1844, %v1845
  %v1847 = vsel %vm1839, %v1690, 0.0
  %v1848 = vadd.f32 %v1846, %v1847
  %v1849 = vsel %vm1839, %v1692, 0.0
  %v1850 = vadd.f32 %v1848, %v1849
  %v1851 = vsel %vm1839, %v1695, 0.0
  %v1852 = vadd.f32 %v1850, %v1851
  %v1853 = vsel %vm1839, %v1697, 0.0
  %v1854 = vadd.f32 %v1852, %v1853
  %v1855 = vsel %vm1839, %v1700, 0.0
  %v1856 = vadd.f32 %v1854, %v1855
  %v1857 = vsel %vm1839, %v1702, 0.0
  %v1858 = vadd.f32 %v1856, %v1857
  %v1859 = vsel %vm1839, %v1705, 0.0
  %v1860 = vadd.f32 %v1858, %v1859
  %v1861 = vsel %vm1839, %v1707, 0.0
  %v1862 = vadd.f32 %v1860, %v1861
  %v1863 = vsel %vm1839, %v1710, 0.0
  %v1864 = vadd.f32 %v1862, %v1863
  %v1865 = vsel %vm1839, %v1712, 0.0
  %v1866 = vadd.f32 %v1864, %v1865
  %v1867 = vsel %vm1839, %v1715, 0.0
  %v1868 = vadd.f32 %v1866, %v1867
  %v1869 = vsel %vm1839, %v1717, 0.0
  %v1870 = vadd.f32 %v1868, %v1869
  %v1871 = vsel %vm1839, %v1720, 0.0
  %v1872 = vadd.f32 %v1870, %v1871
  %v1873 = vsel %vm1839, %v1722, 0.0
  %v1874 = vadd.f32 %v1872, %v1873
  %v1875 = vsel %vm1839, %v1725, 0.0
  %v1876 = vadd.f32 %v1874, %v1875
  %v1877 = vsel %vm1839, %v1727, 0.0
  %v1878 = vadd.f32 %v1876, %v1877
  %v1879 = vsel %vm1839, %v1730, 0.0
  %v1880 = vadd.f32 %v1878, %v1879
  %v1881 = vsel %vm1839, %v1732, 0.0
  %v1882 = vadd.f32 %v1880, %v1881
  %v1883 = vsel %vm1839, %v1735, 0.0
  %v1884 = vadd.f32 %v1882, %v1883
  %v1885 = vsel %vm1839, %v1737, 0.0
  %v1886 = vadd.f32 %v1884, %v1885
  %v1887 = vsel %vm1839, %v1740, 0.0
  %v1888 = vadd.f32 %v1886, %v1887
  %v1889 = vsel %vm1839, %v1742, 0.0
  %v1890 = vadd.f32 %v1888, %v1889
  %v1891 = vsel %vm1839, %v1745, 0.0
  %v1892 = vadd.f32 %v1890, %v1891
  %v1893 = vsel %vm1839, %v1747, 0.0
  %v1894 = vadd.f32 %v1892, %v1893
  %v1895 = vsel %vm1839, %v1750, 0.0
  %v1896 = vadd.f32 %v1894, %v1895
  %v1897 = vsel %vm1839, %v1752, 0.0
  %v1898 = vadd.f32 %v1896, %v1897
  %v1899 = vsel %vm1839, %v1755, 0.0
  %v1900 = vadd.f32 %v1898, %v1899
  %v1901 = vsel %vm1839, %v1757, 0.0
  %v1902 = vadd.f32 %v1900, %v1901
  %v1903 = vsel %vm1839, %v1760, 0.0
  %v1904 = vadd.f32 %v1902, %v1903
  %v1905 = vsel %vm1839, %v1762, 0.0
  %v1906 = vadd.f32 %v1904, %v1905
  %v1907 = vsel %vm1839, %v1765, 0.0
  %v1908 = vadd.f32 %v1906, %v1907
  %v1909 = vsel %vm1839, %v1767, 0.0
  %v1910 = vadd.f32 %v1908, %v1909
  %v1911 = vsel %vm1839, %v1770, 0.0
  %v1912 = vadd.f32 %v1910, %v1911
  %v1913 = vsel %vm1839, %v1772, 0.0
  %v1914 = vadd.f32 %v1912, %v1913
  %v1915 = vsel %vm1839, %v1775, 0.0
  %v1916 = vadd.f32 %v1914, %v1915
  %v1917 = vsel %vm1839, %v1777, 0.0
  %v1918 = vadd.f32 %v1916, %v1917
  %v1919 = vsel %vm1839, %v1780, 0.0
  %v1920 = vadd.f32 %v1918, %v1919
  %v1921 = vsel %vm1839, %v1782, 0.0
  %v1922 = vadd.f32 %v1920, %v1921
  %v1923 = vsel %vm1839, %v1785, 0.0
  %v1924 = vadd.f32 %v1922, %v1923
  %v1925 = vsel %vm1839, %v1787, 0.0
  %v1926 = vadd.f32 %v1924, %v1925
  %v1927 = vsel %vm1839, %v1790, 0.0
  %v1928 = vadd.f32 %v1926, %v1927
  %v1929 = vsel %vm1839, %v1792, 0.0
  %v1930 = vadd.f32 %v1928, %v1929
  %v1931 = vsel %vm1839, %v1795, 0.0
  %v1932 = vadd.f32 %v1930, %v1931
  %v1933 = vsel %vm1839, %v1797, 0.0
  %v1934 = vadd.f32 %v1932, %v1933
  %v1935 = vsel %vm1839, %v1800, 0.0
  %v1936 = vadd.f32 %v1934, %v1935
  %v1937 = vsel %vm1839, %v1802, 0.0
  %v1938 = vadd.f32 %v1936, %v1937
  %v1939 = vsel %vm1839, %v1805, 0.0
  %v1940 = vadd.f32 %v1938, %v1939
  %v1941 = vsel %vm1839, %v1807, 0.0
  %v1942 = vadd.f32 %v1940, %v1941
  %v1943 = vsel %vm1839, %v1810, 0.0
  %v1944 = vadd.f32 %v1942, %v1943
  %v1945 = vsel %vm1839, %v1812, 0.0
  %v1946 = vadd.f32 %v1944, %v1945
  %v1947 = vsel %vm1839, %v1815, 0.0
  %v1948 = vadd.f32 %v1946, %v1947
  %v1949 = vsel %vm1839, %v1817, 0.0
  %v1950 = vadd.f32 %v1948, %v1949
  %v1951 = vsel %vm1839, %v1820, 0.0
  %v1952 = vadd.f32 %v1950, %v1951
  %v1953 = vsel %vm1839, %v1822, 0.0
  %v1954 = vadd.f32 %v1952, %v1953
  %v1955 = vsel %vm1839, %v1825, 0.0
  %v1956 = vadd.f32 %v1954, %v1955
  %v1957 = vsel %vm1839, %v1827, 0.0
  %v1958 = vadd.f32 %v1956, %v1957
  %v1959 = vsel %vm1839, %v1830, 0.0
  %v1960 = vadd.f32 %v1958, %v1959
  %v1961 = vsel %vm1839, %v1832, 0.0
  %v1962 = vadd.f32 %v1960, %v1961
  %v1963 = vsel %vm1839, %v1835, 0.0
  %v1964 = vadd.f32 %v1962, %v1963
  %v1965 = vsel %vm1839, %v1837, 0.0
  %v1966 = vadd.f32 %v1964, %v1965
  %v1967 = vrot.slane %v1966, 4
  %v1968 = vadd.f32 %v1966, %v1967
  %v1969 = vrot.slane %v1968, 2
  %v1970 = vadd.f32 %v1968, %v1969
  %v1971 = vrot.slane %v1970, 1
  %v1972 = vadd.f32 %v1970, %v1971
  %v1973 = vmul.f32 %v1680, %v1680
  %v1974 = vmul.f32 %v1682, %v1682
  %v1975 = vmul.f32 %v1685, %v1685
  %v1976 = vmul.f32 %v1687, %v1687
  %v1977 = vmul.f32 %v1690, %v1690
  %v1978 = vmul.f32 %v1692, %v1692
  %v1979 = vmul.f32 %v1695, %v1695
  %v1980 = vmul.f32 %v1697, %v1697
  %v1981 = vmul.f32 %v1700, %v1700
  %v1982 = vmul.f32 %v1702, %v1702
  %v1983 = vmul.f32 %v1705, %v1705
  %v1984 = vmul.f32 %v1707, %v1707
  %v1985 = vmul.f32 %v1710, %v1710
  %v1986 = vmul.f32 %v1712, %v1712
  %v1987 = vmul.f32 %v1715, %v1715
  %v1988 = vmul.f32 %v1717, %v1717
  %v1989 = vmul.f32 %v1720, %v1720
  %v1990 = vmul.f32 %v1722, %v1722
  %v1991 = vmul.f32 %v1725, %v1725
  %v1992 = vmul.f32 %v1727, %v1727
  %v1993 = vmul.f32 %v1730, %v1730
  %v1994 = vmul.f32 %v1732, %v1732
  %v1995 = vmul.f32 %v1735, %v1735
  %v1996 = vmul.f32 %v1737, %v1737
  %v1997 = vmul.f32 %v1740, %v1740
  %v1998 = vmul.f32 %v1742, %v1742
  %v1999 = vmul.f32 %v1745, %v1745
  %v2000 = vmul.f32 %v1747, %v1747
  %v2001 = vmul.f32 %v1750, %v1750
  %v2002 = vmul.f32 %v1752, %v1752
  %v2003 = vmul.f32 %v1755, %v1755
  %v2004 = vmul.f32 %v1757, %v1757
  %v2005 = vmul.f32 %v1760, %v1760
  %v2006 = vmul.f32 %v1762, %v1762
  %v2007 = vmul.f32 %v1765, %v1765
  %v2008 = vmul.f32 %v1767, %v1767
  %v2009 = vmul.f32 %v1770, %v1770
  %v2010 = vmul.f32 %v1772, %v1772
  %v2011 = vmul.f32 %v1775, %v1775
  %v2012 = vmul.f32 %v1777, %v1777
  %v2013 = vmul.f32 %v1780, %v1780
  %v2014 = vmul.f32 %v1782, %v1782
  %v2015 = vmul.f32 %v1785, %v1785
  %v2016 = vmul.f32 %v1787, %v1787
  %v2017 = vmul.f32 %v1790, %v1790
  %v2018 = vmul.f32 %v1792, %v1792
  %v2019 = vmul.f32 %v1795, %v1795
  %v2020 = vmul.f32 %v1797, %v1797
  %v2021 = vmul.f32 %v1800, %v1800
  %v2022 = vmul.f32 %v1802, %v1802
  %v2023 = vmul.f32 %v1805, %v1805
  %v2024 = vmul.f32 %v1807, %v1807
  %v2025 = vmul.f32 %v1810, %v1810
  %v2026 = vmul.f32 %v1812, %v1812
  %v2027 = vmul.f32 %v1815, %v1815
  %v2028 = vmul.f32 %v1817, %v1817
  %v2029 = vmul.f32 %v1820, %v1820
  %v2030 = vmul.f32 %v1822, %v1822
  %v2031 = vmul.f32 %v1825, %v1825
  %v2032 = vmul.f32 %v1827, %v1827
  %v2033 = vmul.f32 %v1830, %v1830
  %v2034 = vmul.f32 %v1832, %v1832
  %v2035 = vmul.f32 %v1835, %v1835
  %v2036 = vmul.f32 %v1837, %v1837
  %v2037 = vsel %vm1839, %v1973, 0.0
  %v2038 = vsel %vm1839, %v1974, 0.0
  %v2039 = vadd.f32 %v2037, %v2038
  %v2040 = vsel %vm1839, %v1975, 0.0
  %v2041 = vadd.f32 %v2039, %v2040
  %v2042 = vsel %vm1839, %v1976, 0.0
  %v2043 = vadd.f32 %v2041, %v2042
  %v2044 = vsel %vm1839, %v1977, 0.0
  %v2045 = vadd.f32 %v2043, %v2044
  %v2046 = vsel %vm1839, %v1978, 0.0
  %v2047 = vadd.f32 %v2045, %v2046
  %v2048 = vsel %vm1839, %v1979, 0.0
  %v2049 = vadd.f32 %v2047, %v2048
  %v2050 = vsel %vm1839, %v1980, 0.0
  %v2051 = vadd.f32 %v2049, %v2050
  %v2052 = vsel %vm1839, %v1981, 0.0
  %v2053 = vadd.f32 %v2051, %v2052
  %v2054 = vsel %vm1839, %v1982, 0.0
  %v2055 = vadd.f32 %v2053, %v2054
  %v2056 = vsel %vm1839, %v1983, 0.0
  %v2057 = vadd.f32 %v2055, %v2056
  %v2058 = vsel %vm1839, %v1984, 0.0
  %v2059 = vadd.f32 %v2057, %v2058
  %v2060 = vsel %vm1839, %v1985, 0.0
  %v2061 = vadd.f32 %v2059, %v2060
  %v2062 = vsel %vm1839, %v1986, 0.0
  %v2063 = vadd.f32 %v2061, %v2062
  %v2064 = vsel %vm1839, %v1987, 0.0
  %v2065 = vadd.f32 %v2063, %v2064
  %v2066 = vsel %vm1839, %v1988, 0.0
  %v2067 = vadd.f32 %v2065, %v2066
  %v2068 = vsel %vm1839, %v1989, 0.0
  %v2069 = vadd.f32 %v2067, %v2068
  %v2070 = vsel %vm1839, %v1990, 0.0
  %v2071 = vadd.f32 %v2069, %v2070
  %v2072 = vsel %vm1839, %v1991, 0.0
  %v2073 = vadd.f32 %v2071, %v2072
  %v2074 = vsel %vm1839, %v1992, 0.0
  %v2075 = vadd.f32 %v2073, %v2074
  %v2076 = vsel %vm1839, %v1993, 0.0
  %v2077 = vadd.f32 %v2075, %v2076
  %v2078 = vsel %vm1839, %v1994, 0.0
  %v2079 = vadd.f32 %v2077, %v2078
  %v2080 = vsel %vm1839, %v1995, 0.0
  %v2081 = vadd.f32 %v2079, %v2080
  %v2082 = vsel %vm1839, %v1996, 0.0
  %v2083 = vadd.f32 %v2081, %v2082
  %v2084 = vsel %vm1839, %v1997, 0.0
  %v2085 = vadd.f32 %v2083, %v2084
  %v2086 = vsel %vm1839, %v1998, 0.0
  %v2087 = vadd.f32 %v2085, %v2086
  %v2088 = vsel %vm1839, %v1999, 0.0
  %v2089 = vadd.f32 %v2087, %v2088
  %v2090 = vsel %vm1839, %v2000, 0.0
  %v2091 = vadd.f32 %v2089, %v2090
  %v2092 = vsel %vm1839, %v2001, 0.0
  %v2093 = vadd.f32 %v2091, %v2092
  %v2094 = vsel %vm1839, %v2002, 0.0
  %v2095 = vadd.f32 %v2093, %v2094
  %v2096 = vsel %vm1839, %v2003, 0.0
  %v2097 = vadd.f32 %v2095, %v2096
  %v2098 = vsel %vm1839, %v2004, 0.0
  %v2099 = vadd.f32 %v2097, %v2098
  %v2100 = vsel %vm1839, %v2005, 0.0
  %v2101 = vadd.f32 %v2099, %v2100
  %v2102 = vsel %vm1839, %v2006, 0.0
  %v2103 = vadd.f32 %v2101, %v2102
  %v2104 = vsel %vm1839, %v2007, 0.0
  %v2105 = vadd.f32 %v2103, %v2104
  %v2106 = vsel %vm1839, %v2008, 0.0
  %v2107 = vadd.f32 %v2105, %v2106
  %v2108 = vsel %vm1839, %v2009, 0.0
  %v2109 = vadd.f32 %v2107, %v2108
  %v2110 = vsel %vm1839, %v2010, 0.0
  %v2111 = vadd.f32 %v2109, %v2110
  %v2112 = vsel %vm1839, %v2011, 0.0
  %v2113 = vadd.f32 %v2111, %v2112
  %v2114 = vsel %vm1839, %v2012, 0.0
  %v2115 = vadd.f32 %v2113, %v2114
  %v2116 = vsel %vm1839, %v2013, 0.0
  %v2117 = vadd.f32 %v2115, %v2116
  %v2118 = vsel %vm1839, %v2014, 0.0
  %v2119 = vadd.f32 %v2117, %v2118
  %v2120 = vsel %vm1839, %v2015, 0.0
  %v2121 = vadd.f32 %v2119, %v2120
  %v2122 = vsel %vm1839, %v2016, 0.0
  %v2123 = vadd.f32 %v2121, %v2122
  %v2124 = vsel %vm1839, %v2017, 0.0
  %v2125 = vadd.f32 %v2123, %v2124
  %v2126 = vsel %vm1839, %v2018, 0.0
  %v2127 = vadd.f32 %v2125, %v2126
  %v2128 = vsel %vm1839, %v2019, 0.0
  %v2129 = vadd.f32 %v2127, %v2128
  %v2130 = vsel %vm1839, %v2020, 0.0
  %v2131 = vadd.f32 %v2129, %v2130
  %v2132 = vsel %vm1839, %v2021, 0.0
  %v2133 = vadd.f32 %v2131, %v2132
  %v2134 = vsel %vm1839, %v2022, 0.0
  %v2135 = vadd.f32 %v2133, %v2134
  %v2136 = vsel %vm1839, %v2023, 0.0
  %v2137 = vadd.f32 %v2135, %v2136
  %v2138 = vsel %vm1839, %v2024, 0.0
  %v2139 = vadd.f32 %v2137, %v2138
  %v2140 = vsel %vm1839, %v2025, 0.0
  %v2141 = vadd.f32 %v2139, %v2140
  %v2142 = vsel %vm1839, %v2026, 0.0
  %v2143 = vadd.f32 %v2141, %v2142
  %v2144 = vsel %vm1839, %v2027, 0.0
  %v2145 = vadd.f32 %v2143, %v2144
  %v2146 = vsel %vm1839, %v2028, 0.0
  %v2147 = vadd.f32 %v2145, %v2146
  %v2148 = vsel %vm1839, %v2029, 0.0
  %v2149 = vadd.f32 %v2147, %v2148
  %v2150 = vsel %vm1839, %v2030, 0.0
  %v2151 = vadd.f32 %v2149, %v2150
  %v2152 = vsel %vm1839, %v2031, 0.0
  %v2153 = vadd.f32 %v2151, %v2152
  %v2154 = vsel %vm1839, %v2032, 0.0
  %v2155 = vadd.f32 %v2153, %v2154
  %v2156 = vsel %vm1839, %v2033, 0.0
  %v2157 = vadd.f32 %v2155, %v2156
  %v2158 = vsel %vm1839, %v2034, 0.0
  %v2159 = vadd.f32 %v2157, %v2158
  %v2160 = vsel %vm1839, %v2035, 0.0
  %v2161 = vadd.f32 %v2159, %v2160
  %v2162 = vsel %vm1839, %v2036, 0.0
  %v2163 = vadd.f32 %v2161, %v2162
  %v2164 = vrot.slane %v2163, 4
  %v2165 = vadd.f32 %v2163, %v2164
  %v2166 = vrot.slane %v2165, 2
  %v2167 = vadd.f32 %v2165, %v2166
  %v2168 = vrot.slane %v2167, 1
  %v2169 = vadd.f32 %v2167, %v2168
  %v2170 = vmul.f32 %v1972, 0.001953125
  %v2171 = vmul.f32 %v2169, 0.001953125
  %v2172 = vmul.f32 %v2170, %v2170
  %v2173 = vsub.f32 %v2171, %v2172
  %v2174 = vmax.f32 %v2173, 0.0
  %v2175 = vsub.f32 %v1680, %v2170
  %v2176 = vsub.f32 %v1682, %v2170
  %v2177 = vsub.f32 %v1685, %v2170
  %v2178 = vsub.f32 %v1687, %v2170
  %v2179 = vsub.f32 %v1690, %v2170
  %v2180 = vsub.f32 %v1692, %v2170
  %v2181 = vsub.f32 %v1695, %v2170
  %v2182 = vsub.f32 %v1697, %v2170
  %v2183 = vsub.f32 %v1700, %v2170
  %v2184 = vsub.f32 %v1702, %v2170
  %v2185 = vsub.f32 %v1705, %v2170
  %v2186 = vsub.f32 %v1707, %v2170
  %v2187 = vsub.f32 %v1710, %v2170
  %v2188 = vsub.f32 %v1712, %v2170
  %v2189 = vsub.f32 %v1715, %v2170
  %v2190 = vsub.f32 %v1717, %v2170
  %v2191 = vsub.f32 %v1720, %v2170
  %v2192 = vsub.f32 %v1722, %v2170
  %v2193 = vsub.f32 %v1725, %v2170
  %v2194 = vsub.f32 %v1727, %v2170
  %v2195 = vsub.f32 %v1730, %v2170
  %v2196 = vsub.f32 %v1732, %v2170
  %v2197 = vsub.f32 %v1735, %v2170
  %v2198 = vsub.f32 %v1737, %v2170
  %v2199 = vsub.f32 %v1740, %v2170
  %v2200 = vsub.f32 %v1742, %v2170
  %v2201 = vsub.f32 %v1745, %v2170
  %v2202 = vsub.f32 %v1747, %v2170
  %v2203 = vsub.f32 %v1750, %v2170
  %v2204 = vsub.f32 %v1752, %v2170
  %v2205 = vsub.f32 %v1755, %v2170
  %v2206 = vsub.f32 %v1757, %v2170
  %v2207 = vsub.f32 %v1760, %v2170
  %v2208 = vsub.f32 %v1762, %v2170
  %v2209 = vsub.f32 %v1765, %v2170
  %v2210 = vsub.f32 %v1767, %v2170
  %v2211 = vsub.f32 %v1770, %v2170
  %v2212 = vsub.f32 %v1772, %v2170
  %v2213 = vsub.f32 %v1775, %v2170
  %v2214 = vsub.f32 %v1777, %v2170
  %v2215 = vsub.f32 %v1780, %v2170
  %v2216 = vsub.f32 %v1782, %v2170
  %v2217 = vsub.f32 %v1785, %v2170
  %v2218 = vsub.f32 %v1787, %v2170
  %v2219 = vsub.f32 %v1790, %v2170
  %v2220 = vsub.f32 %v1792, %v2170
  %v2221 = vsub.f32 %v1795, %v2170
  %v2222 = vsub.f32 %v1797, %v2170
  %v2223 = vsub.f32 %v1800, %v2170
  %v2224 = vsub.f32 %v1802, %v2170
  %v2225 = vsub.f32 %v1805, %v2170
  %v2226 = vsub.f32 %v1807, %v2170
  %v2227 = vsub.f32 %v1810, %v2170
  %v2228 = vsub.f32 %v1812, %v2170
  %v2229 = vsub.f32 %v1815, %v2170
  %v2230 = vsub.f32 %v1817, %v2170
  %v2231 = vsub.f32 %v1820, %v2170
  %v2232 = vsub.f32 %v1822, %v2170
  %v2233 = vsub.f32 %v1825, %v2170
  %v2234 = vsub.f32 %v1827, %v2170
  %v2235 = vsub.f32 %v1830, %v2170
  %v2236 = vsub.f32 %v1832, %v2170
  %v2237 = vsub.f32 %v1835, %v2170
  %v2238 = vsub.f32 %v1837, %v2170
  %v2239 = vld [vmem:[%s7] sm:$0x1]
  %v2240 = vadd.f32 %v2174, 1e-05
  %v2241 = vrsqrt.pop %v2240
  %v2242 = vmul.f32 %v2241, %v2240
  %v2243 = vmul.f32 %v2242, %v2241
  %v2244 = vmul.f32 0.5, %v2243
  %v2245 = vsub.f32 1.5, %v2244
  %v2246 = vmul.f32 %v2241, %v2245
  %vm2247 = vweird.f32 %v2240
  %vm2248 = vweird.f32 %v2241
  %vm2249 = vmor %vm2247, %vm2248
  %v2250 = vsel %vm2249, %v2241, %v2246
  %v2251 = vmul.f32 %v2239, %v2250
  %v2253 = vperm.slane %v2251, 0
  %v2255 = vmul.f32 %v2175, %v2253
  %v2256 = vmul.f32 %v2176, %v2253
  %v2257 = vmul.f32 %v2177, %v2253
  %v2258 = vmul.f32 %v2178, %v2253
  %v2259 = vmul.f32 %v2179, %v2253
  %v2260 = vmul.f32 %v2180, %v2253
  %v2261 = vmul.f32 %v2181, %v2253
  %v2262 = vmul.f32 %v2182, %v2253
  %v2263 = vmul.f32 %v2183, %v2253
  %v2264 = vmul.f32 %v2184, %v2253
  %v2265 = vmul.f32 %v2185, %v2253
  %v2266 = vmul.f32 %v2186, %v2253
  %v2267 = vmul.f32 %v2187, %v2253
  %v2268 = vmul.f32 %v2188, %v2253
  %v2269 = vmul.f32 %v2189, %v2253
  %v2270 = vmul.f32 %v2190, %v2253
  %v2271 = vmul.f32 %v2191, %v2253
  %v2272 = vmul.f32 %v2192, %v2253
  %v2273 = vmul.f32 %v2193, %v2253
  %v2274 = vmul.f32 %v2194, %v2253
  %v2275 = vmul.f32 %v2195, %v2253
  %v2276 = vmul.f32 %v2196, %v2253
  %v2277 = vmul.f32 %v2197, %v2253
  %v2278 = vmul.f32 %v2198, %v2253
  %v2279 = vmul.f32 %v2199, %v2253
  %v2280 = vmul.f32 %v2200, %v2253
  %v2281 = vmul.f32 %v2201, %v2253
  %v2282 = vmul.f32 %v2202, %v2253
  %v2283 = vmul.f32 %v2203, %v2253
  %v2284 = vmul.f32 %v2204, %v2253
  %v2285 = vmul.f32 %v2205, %v2253
  %v2286 = vmul.f32 %v2206, %v2253
  %v2287 = vmul.f32 %v2207, %v2253
  %v2288 = vmul.f32 %v2208, %v2253
  %v2289 = vmul.f32 %v2209, %v2253
  %v2290 = vmul.f32 %v2210, %v2253
  %v2291 = vmul.f32 %v2211, %v2253
  %v2292 = vmul.f32 %v2212, %v2253
  %v2293 = vmul.f32 %v2213, %v2253
  %v2294 = vmul.f32 %v2214, %v2253
  %v2295 = vmul.f32 %v2215, %v2253
  %v2296 = vmul.f32 %v2216, %v2253
  %v2297 = vmul.f32 %v2217, %v2253
  %v2298 = vmul.f32 %v2218, %v2253
  %v2299 = vmul.f32 %v2219, %v2253
  %v2300 = vmul.f32 %v2220, %v2253
  %v2301 = vmul.f32 %v2221, %v2253
  %v2302 = vmul.f32 %v2222, %v2253
  %v2303 = vmul.f32 %v2223, %v2253
  %v2304 = vmul.f32 %v2224, %v2253
  %v2305 = vmul.f32 %v2225, %v2253
  %v2306 = vmul.f32 %v2226, %v2253
  %v2307 = vmul.f32 %v2227, %v2253
  %v2308 = vmul.f32 %v2228, %v2253
  %v2309 = vmul.f32 %v2229, %v2253
  %v2310 = vmul.f32 %v2230, %v2253
  %v2311 = vmul.f32 %v2231, %v2253
  %v2312 = vmul.f32 %v2232, %v2253
  %v2313 = vmul.f32 %v2233, %v2253
  %v2314 = vmul.f32 %v2234, %v2253
  %v2315 = vmul.f32 %v2235, %v2253
  %v2316 = vmul.f32 %v2236, %v2253
  %v2317 = vmul.f32 %v2237, %v2253
  %v2318 = vmul.f32 %v2238, %v2253
  %v2319 = vld [vmem:[%s8] sm:$0x1]
  %v2321 = vperm.slane %v2319, 0
  %v2323 = vadd.f32 %v2255, %v2321
  %v2324 = vadd.f32 %v2256, %v2321
  %v2325 = vadd.f32 %v2257, %v2321
  %v2326 = vadd.f32 %v2258, %v2321
  %v2327 = vadd.f32 %v2259, %v2321
  %v2328 = vadd.f32 %v2260, %v2321
  %v2329 = vadd.f32 %v2261, %v2321
  %v2330 = vadd.f32 %v2262, %v2321
  %v2331 = vadd.f32 %v2263, %v2321
  %v2332 = vadd.f32 %v2264, %v2321
  %v2333 = vadd.f32 %v2265, %v2321
  %v2334 = vadd.f32 %v2266, %v2321
  %v2335 = vadd.f32 %v2267, %v2321
  %v2336 = vadd.f32 %v2268, %v2321
  %v2337 = vadd.f32 %v2269, %v2321
  %v2338 = vadd.f32 %v2270, %v2321
  %v2339 = vadd.f32 %v2271, %v2321
  %v2340 = vadd.f32 %v2272, %v2321
  %v2341 = vadd.f32 %v2273, %v2321
  %v2342 = vadd.f32 %v2274, %v2321
  %v2343 = vadd.f32 %v2275, %v2321
  %v2344 = vadd.f32 %v2276, %v2321
  %v2345 = vadd.f32 %v2277, %v2321
  %v2346 = vadd.f32 %v2278, %v2321
  %v2347 = vadd.f32 %v2279, %v2321
  %v2348 = vadd.f32 %v2280, %v2321
  %v2349 = vadd.f32 %v2281, %v2321
  %v2350 = vadd.f32 %v2282, %v2321
  %v2351 = vadd.f32 %v2283, %v2321
  %v2352 = vadd.f32 %v2284, %v2321
  %v2353 = vadd.f32 %v2285, %v2321
  %v2354 = vadd.f32 %v2286, %v2321
  %v2355 = vadd.f32 %v2287, %v2321
  %v2356 = vadd.f32 %v2288, %v2321
  %v2357 = vadd.f32 %v2289, %v2321
  %v2358 = vadd.f32 %v2290, %v2321
  %v2359 = vadd.f32 %v2291, %v2321
  %v2360 = vadd.f32 %v2292, %v2321
  %v2361 = vadd.f32 %v2293, %v2321
  %v2362 = vadd.f32 %v2294, %v2321
  %v2363 = vadd.f32 %v2295, %v2321
  %v2364 = vadd.f32 %v2296, %v2321
  %v2365 = vadd.f32 %v2297, %v2321
  %v2366 = vadd.f32 %v2298, %v2321
  %v2367 = vadd.f32 %v2299, %v2321
  %v2368 = vadd.f32 %v2300, %v2321
  %v2369 = vadd.f32 %v2301, %v2321
  %v2370 = vadd.f32 %v2302, %v2321
  %v2371 = vadd.f32 %v2303, %v2321
  %v2372 = vadd.f32 %v2304, %v2321
  %v2373 = vadd.f32 %v2305, %v2321
  %v2374 = vadd.f32 %v2306, %v2321
  %v2375 = vadd.f32 %v2307, %v2321
  %v2376 = vadd.f32 %v2308, %v2321
  %v2377 = vadd.f32 %v2309, %v2321
  %v2378 = vadd.f32 %v2310, %v2321
  %v2379 = vadd.f32 %v2311, %v2321
  %v2380 = vadd.f32 %v2312, %v2321
  %v2381 = vadd.f32 %v2313, %v2321
  %v2382 = vadd.f32 %v2314, %v2321
  %v2383 = vadd.f32 %v2315, %v2321
  %v2384 = vadd.f32 %v2316, %v2321
  %v2385 = vadd.f32 %v2317, %v2321
  %v2386 = vadd.f32 %v2318, %v2321
  %v2387 = vmax.f32 %v2323, 0.0
  %v2388 = vmax.f32 %v2324, 0.0
  %v2389 = vmax.f32 %v2325, 0.0
  %v2390 = vmax.f32 %v2326, 0.0
  %v2391 = vmax.f32 %v2327, 0.0
  %v2392 = vmax.f32 %v2328, 0.0
  %v2393 = vmax.f32 %v2329, 0.0
  %v2394 = vmax.f32 %v2330, 0.0
  %v2395 = vmax.f32 %v2331, 0.0
  %v2396 = vmax.f32 %v2332, 0.0
  %v2397 = vmax.f32 %v2333, 0.0
  %v2398 = vmax.f32 %v2334, 0.0
  %v2399 = vmax.f32 %v2335, 0.0
  %v2400 = vmax.f32 %v2336, 0.0
  %v2401 = vmax.f32 %v2337, 0.0
  %v2402 = vmax.f32 %v2338, 0.0
  %v2403 = vmax.f32 %v2339, 0.0
  %v2404 = vmax.f32 %v2340, 0.0
  %v2405 = vmax.f32 %v2341, 0.0
  %v2406 = vmax.f32 %v2342, 0.0
  %v2407 = vmax.f32 %v2343, 0.0
  %v2408 = vmax.f32 %v2344, 0.0
  %v2409 = vmax.f32 %v2345, 0.0
  %v2410 = vmax.f32 %v2346, 0.0
  %v2411 = vmax.f32 %v2347, 0.0
  %v2412 = vmax.f32 %v2348, 0.0
  %v2413 = vmax.f32 %v2349, 0.0
  %v2414 = vmax.f32 %v2350, 0.0
  %v2415 = vmax.f32 %v2351, 0.0
  %v2416 = vmax.f32 %v2352, 0.0
  %v2417 = vmax.f32 %v2353, 0.0
  %v2418 = vmax.f32 %v2354, 0.0
  %v2419 = vmax.f32 %v2355, 0.0
  %v2420 = vmax.f32 %v2356, 0.0
  %v2421 = vmax.f32 %v2357, 0.0
  %v2422 = vmax.f32 %v2358, 0.0
  %v2423 = vmax.f32 %v2359, 0.0
  %v2424 = vmax.f32 %v2360, 0.0
  %v2425 = vmax.f32 %v2361, 0.0
  %v2426 = vmax.f32 %v2362, 0.0
  %v2427 = vmax.f32 %v2363, 0.0
  %v2428 = vmax.f32 %v2364, 0.0
  %v2429 = vmax.f32 %v2365, 0.0
  %v2430 = vmax.f32 %v2366, 0.0
  %v2431 = vmax.f32 %v2367, 0.0
  %v2432 = vmax.f32 %v2368, 0.0
  %v2433 = vmax.f32 %v2369, 0.0
  %v2434 = vmax.f32 %v2370, 0.0
  %v2435 = vmax.f32 %v2371, 0.0
  %v2436 = vmax.f32 %v2372, 0.0
  %v2437 = vmax.f32 %v2373, 0.0
  %v2438 = vmax.f32 %v2374, 0.0
  %v2439 = vmax.f32 %v2375, 0.0
  %v2440 = vmax.f32 %v2376, 0.0
  %v2441 = vmax.f32 %v2377, 0.0
  %v2442 = vmax.f32 %v2378, 0.0
  %v2443 = vmax.f32 %v2379, 0.0
  %v2444 = vmax.f32 %v2380, 0.0
  %v2445 = vmax.f32 %v2381, 0.0
  %v2446 = vmax.f32 %v2382, 0.0
  %v2447 = vmax.f32 %v2383, 0.0
  %v2448 = vmax.f32 %v2384, 0.0
  %v2449 = vmax.f32 %v2385, 0.0
  %v2450 = vmax.f32 %v2386, 0.0
  %2451 = vst.msk [vmem:[#allocation3] sm:$0xff] %vm1839, 0.0
  %2452 = vst.msk [vmem:[#allocation3 + $0x8] sm:$0xff] %vm1839, 0.0
  %vm2453 = vcmask 25600
  %2454 = vst.msk [vmem:[#allocation3 + $0x10] sm:$0x3] %vm2453, 0.0
  %2455 = vst.msk [vmem:[#allocation3 + $0x18] sm:$0xff] %vm1839, 0.0
  %2456 = vst.msk [vmem:[#allocation3 + $0x20] sm:$0xff] %vm1839, 0.0
  %2457 = vst.msk [vmem:[#allocation3 + $0x28] sm:$0x3] %vm2453, 0.0
  %2458 = vst.msk [vmem:[#allocation3 + $0x30] sm:$0xff] %vm1839, 0.0
  %2459 = vst.msk [vmem:[#allocation3 + $0x38] sm:$0xff] %vm1839, 0.0
  %2460 = vst.msk [vmem:[#allocation3 + $0x40] sm:$0x3] %vm2453, 0.0
  %2461 = vst.msk [vmem:[#allocation3 + $0x48] sm:$0xff] %vm1839, 0.0
  %2462 = vst.msk [vmem:[#allocation3 + $0x50] sm:$0xff] %vm1839, 0.0
  %2463 = vst.msk [vmem:[#allocation3 + $0x58] sm:$0x3] %vm2453, 0.0
  %2464 = vst.msk [vmem:[#allocation3 + $0x60] sm:$0xff] %vm1839, 0.0
  %2465 = vst.msk [vmem:[#allocation3 + $0x68] sm:$0xff] %vm1839, 0.0
  %2466 = vst.msk [vmem:[#allocation3 + $0x70] sm:$0x3] %vm2453, 0.0
  %2467 = vst.msk [vmem:[#allocation3 + $0x78] sm:$0xff] %vm1839, 0.0
  %2468 = vst.msk [vmem:[#allocation3 + $0x80] sm:$0xff] %vm1839, 0.0
  %2469 = vst.msk [vmem:[#allocation3 + $0x88] sm:$0x3] %vm2453, 0.0
  %2470 = vst.msk [vmem:[#allocation3 + $0x90] sm:$0xff] %vm1839, 0.0
  %2471 = vst.msk [vmem:[#allocation3 + $0x98] sm:$0xff] %vm1839, 0.0
  %2472 = vst.msk [vmem:[#allocation3 + $0xa0] sm:$0x3] %vm2453, 0.0
  %2473 = vst.msk [vmem:[#allocation3 + $0xa8] sm:$0xff] %vm1839, 0.0
  %2474 = vst.msk [vmem:[#allocation3 + $0xb0] sm:$0xff] %vm1839, 0.0
  %2475 = vst.msk [vmem:[#allocation3 + $0xb8] sm:$0x3] %vm2453, 0.0
  %2476 = vst.msk [vmem:[#allocation3 + $0xc0] sm:$0xff] %vm1839, 0.0
  %2477 = vst.msk [vmem:[#allocation3 + $0xc8] sm:$0xff] %vm1839, 0.0
  %2478 = vst.msk [vmem:[#allocation3 + $0xd0] sm:$0x3] %vm2453, 0.0
  %2479 = vst.msk [vmem:[#allocation3 + $0xd8] sm:$0xff] %vm1839, 0.0
  %2480 = vst.msk [vmem:[#allocation3 + $0xe0] sm:$0xff] %vm1839, 0.0
  %2481 = vst.msk [vmem:[#allocation3 + $0xe8] sm:$0x3] %vm2453, 0.0
  %2482 = vst.msk [vmem:[#allocation3 + $0xf0] sm:$0xff] %vm1839, 0.0
  %2483 = vst.msk [vmem:[#allocation3 + $0xf8] sm:$0xff] %vm1839, 0.0
  %2484 = vst.msk [vmem:[#allocation3 + $0x100] sm:$0x3] %vm2453, 0.0
  %2485 = vst.msk [vmem:[#allocation3 + $0x108] sm:$0xff] %vm1839, 0.0
  %2486 = vst.msk [vmem:[#allocation3 + $0x110] sm:$0xff] %vm1839, 0.0
  %2487 = vst.msk [vmem:[#allocation3 + $0x118] sm:$0x3] %vm2453, 0.0
  %2488 = vst.msk [vmem:[#allocation3 + $0x120] sm:$0xff] %vm1839, 0.0
  %2489 = vst.msk [vmem:[#allocation3 + $0x128] sm:$0xff] %vm1839, 0.0
  %2490 = vst.msk [vmem:[#allocation3 + $0x130] sm:$0x3] %vm2453, 0.0
  %2491 = vst.msk [vmem:[#allocation3 + $0x138] sm:$0xff] %vm1839, 0.0
  %2492 = vst.msk [vmem:[#allocation3 + $0x140] sm:$0xff] %vm1839, 0.0
  %2493 = vst.msk [vmem:[#allocation3 + $0x148] sm:$0x3] %vm2453, 0.0
  %2494 = vst.msk [vmem:[#allocation3 + $0x150] sm:$0xff] %vm1839, 0.0
  %2495 = vst.msk [vmem:[#allocation3 + $0x158] sm:$0xff] %vm1839, 0.0
  %2496 = vst.msk [vmem:[#allocation3 + $0x160] sm:$0x3] %vm2453, 0.0
  %2497 = vst.msk [vmem:[#allocation3 + $0x168] sm:$0xff] %vm1839, 0.0
  %2498 = vst.msk [vmem:[#allocation3 + $0x170] sm:$0xff] %vm1839, 0.0
  %2499 = vst.msk [vmem:[#allocation3 + $0x178] sm:$0x3] %vm2453, 0.0
  %2500 = vst.msk [vmem:[#allocation3 + $0x180] sm:$0xff] %vm1839, 0.0
  %2501 = vst.msk [vmem:[#allocation3 + $0x188] sm:$0xff] %vm1839, 0.0
  %2502 = vst.msk [vmem:[#allocation3 + $0x190] sm:$0x3] %vm2453, 0.0
  %2503 = vst.msk [vmem:[#allocation3 + $0x198] sm:$0xff] %vm1839, 0.0
  %2504 = vst.msk [vmem:[#allocation3 + $0x1a0] sm:$0xff] %vm1839, 0.0
  %2505 = vst.msk [vmem:[#allocation3 + $0x1a8] sm:$0x3] %vm2453, 0.0
  %2506 = vst.msk [vmem:[#allocation3 + $0x1b0] sm:$0xff] %vm1839, 0.0
  %2507 = vst.msk [vmem:[#allocation3 + $0x1b8] sm:$0xff] %vm1839, 0.0
  %2508 = vst.msk [vmem:[#allocation3 + $0x1c0] sm:$0x3] %vm2453, 0.0
  %2509 = vst.msk [vmem:[#allocation3 + $0x1c8] sm:$0xff] %vm1839, 0.0
  %2510 = vst.msk [vmem:[#allocation3 + $0x1d0] sm:$0xff] %vm1839, 0.0
  %2511 = vst.msk [vmem:[#allocation3 + $0x1d8] sm:$0x3] %vm2453, 0.0
  %2512 = vst.msk [vmem:[#allocation3 + $0x1e0] sm:$0xff] %vm1839, 0.0
  %2513 = vst.msk [vmem:[#allocation3 + $0x1e8] sm:$0xff] %vm1839, 0.0
  %2514 = vst.msk [vmem:[#allocation3 + $0x1f0] sm:$0x3] %vm2453, 0.0
  %2515 = vst.msk [vmem:[#allocation3 + $0x1f8] sm:$0xff] %vm1839, 0.0
  %2516 = vst.msk [vmem:[#allocation3 + $0x200] sm:$0xff] %vm1839, 0.0
  %2517 = vst.msk [vmem:[#allocation3 + $0x208] sm:$0x3] %vm2453, 0.0
  %2518 = vst.msk [vmem:[#allocation3 + $0x210] sm:$0xff] %vm1839, 0.0
  %2519 = vst.msk [vmem:[#allocation3 + $0x218] sm:$0xff] %vm1839, 0.0
  %2520 = vst.msk [vmem:[#allocation3 + $0x220] sm:$0x3] %vm2453, 0.0
  %2521 = vst.msk [vmem:[#allocation3 + $0x228] sm:$0xff] %vm1839, 0.0
  %2522 = vst.msk [vmem:[#allocation3 + $0x230] sm:$0xff] %vm1839, 0.0
  %2523 = vst.msk [vmem:[#allocation3 + $0x238] sm:$0x3] %vm2453, 0.0
  %2524 = vst.msk [vmem:[#allocation3 + $0x240] sm:$0xff] %vm1839, 0.0
  %2525 = vst.msk [vmem:[#allocation3 + $0x248] sm:$0xff] %vm1839, 0.0
  %2526 = vst.msk [vmem:[#allocation3 + $0x250] sm:$0x3] %vm2453, 0.0
  %2527 = vst.msk [vmem:[#allocation3 + $0x258] sm:$0xff] %vm1839, 0.0
  %2528 = vst.msk [vmem:[#allocation3 + $0x260] sm:$0xff] %vm1839, 0.0
  %2529 = vst.msk [vmem:[#allocation3 + $0x268] sm:$0x3] %vm2453, 0.0
  %2530 = vst.msk [vmem:[#allocation3 + $0x270] sm:$0xff] %vm1839, 0.0
  %2531 = vst.msk [vmem:[#allocation3 + $0x278] sm:$0xff] %vm1839, 0.0
  %2532 = vst.msk [vmem:[#allocation3 + $0x280] sm:$0x3] %vm2453, 0.0
  %2533 = vst.msk [vmem:[#allocation3 + $0x288] sm:$0xff] %vm1839, 0.0
  %2534 = vst.msk [vmem:[#allocation3 + $0x290] sm:$0xff] %vm1839, 0.0
  %2535 = vst.msk [vmem:[#allocation3 + $0x298] sm:$0x3] %vm2453, 0.0
  %2536 = vst.msk [vmem:[#allocation3 + $0x2a0] sm:$0xff] %vm1839, 0.0
  %2537 = vst.msk [vmem:[#allocation3 + $0x2a8] sm:$0xff] %vm1839, 0.0
  %2538 = vst.msk [vmem:[#allocation3 + $0x2b0] sm:$0x3] %vm2453, 0.0
  %2539 = vst.msk [vmem:[#allocation3 + $0x2b8] sm:$0xff] %vm1839, 0.0
  %2540 = vst.msk [vmem:[#allocation3 + $0x2c0] sm:$0xff] %vm1839, 0.0
  %2541 = vst.msk [vmem:[#allocation3 + $0x2c8] sm:$0x3] %vm2453, 0.0
  %2542 = vst.msk [vmem:[#allocation3 + $0x2d0] sm:$0xff] %vm1839, 0.0
  %2543 = vst.msk [vmem:[#allocation3 + $0x2d8] sm:$0xff] %vm1839, 0.0
  %2544 = vst.msk [vmem:[#allocation3 + $0x2e0] sm:$0x3] %vm2453, 0.0
  %2545 = vst.msk [vmem:[#allocation3 + $0x2e8] sm:$0xff] %vm1839, 0.0
  %2546 = vst.msk [vmem:[#allocation3 + $0x2f0] sm:$0xff] %vm1839, 0.0
  %2547 = vst.msk [vmem:[#allocation3 + $0x2f8] sm:$0x3] %vm2453, 0.0
  %2548 = vst.msk [vmem:[#allocation3 + $0x300] sm:$0xff] %vm1839, 0.0
  %2549 = vst.msk [vmem:[#allocation3 + $0x308] sm:$0xff] %vm1839, 0.0
  %2550 = vst.msk [vmem:[#allocation3 + $0x310] sm:$0x3] %vm2453, 0.0
  %2551 = vst.msk [vmem:[#allocation3 + $0x318] sm:$0xff] %vm1839, 0.0
  %2552 = vst.msk [vmem:[#allocation3 + $0x320] sm:$0xff] %vm1839, 0.0
  %2553 = vst.msk [vmem:[#allocation3 + $0x328] sm:$0x3] %vm2453, 0.0
  %2554 = vst.msk [vmem:[#allocation3 + $0x330] sm:$0xff] %vm1839, 0.0
  %2555 = vst.msk [vmem:[#allocation3 + $0x338] sm:$0xff] %vm1839, 0.0
  %2556 = vst.msk [vmem:[#allocation3 + $0x340] sm:$0x3] %vm2453, 0.0
  %2557 = vst.msk [vmem:[#allocation3 + $0x348] sm:$0xff] %vm1839, 0.0
  %2558 = vst.msk [vmem:[#allocation3 + $0x350] sm:$0xff] %vm1839, 0.0
  %2559 = vst.msk [vmem:[#allocation3 + $0x358] sm:$0x3] %vm2453, 0.0
  %s2560 = scalar_lea.vmem [#allocation3], 24
  %2561 = vst.msk [vmem:[%s2560 + $0x1] sm:$0xff] %vm1839, %v2387
  %2562 = vst.msk [vmem:[%s2560 + $0x9] sm:$0xff] %vm1839, %v2388
  %2563 = vst.msk [vmem:[%s2560 + $0x19] sm:$0xff] %vm1839, %v2389
  %2564 = vst.msk [vmem:[%s2560 + $0x21] sm:$0xff] %vm1839, %v2390
  %2565 = vst.msk [vmem:[%s2560 + $0x31] sm:$0xff] %vm1839, %v2391
  %2566 = vst.msk [vmem:[%s2560 + $0x39] sm:$0xff] %vm1839, %v2392
  %2567 = vst.msk [vmem:[%s2560 + $0x49] sm:$0xff] %vm1839, %v2393
  %2568 = vst.msk [vmem:[%s2560 + $0x51] sm:$0xff] %vm1839, %v2394
  %2569 = vst.msk [vmem:[%s2560 + $0x61] sm:$0xff] %vm1839, %v2395
  %2570 = vst.msk [vmem:[%s2560 + $0x69] sm:$0xff] %vm1839, %v2396
  %2571 = vst.msk [vmem:[%s2560 + $0x79] sm:$0xff] %vm1839, %v2397
  %2572 = vst.msk [vmem:[%s2560 + $0x81] sm:$0xff] %vm1839, %v2398
  %2573 = vst.msk [vmem:[%s2560 + $0x91] sm:$0xff] %vm1839, %v2399
  %2574 = vst.msk [vmem:[%s2560 + $0x99] sm:$0xff] %vm1839, %v2400
  %2575 = vst.msk [vmem:[%s2560 + $0xa9] sm:$0xff] %vm1839, %v2401
  %2576 = vst.msk [vmem:[%s2560 + $0xb1] sm:$0xff] %vm1839, %v2402
  %2577 = vst.msk [vmem:[%s2560 + $0xc1] sm:$0xff] %vm1839, %v2403
  %2578 = vst.msk [vmem:[%s2560 + $0xc9] sm:$0xff] %vm1839, %v2404
  %2579 = vst.msk [vmem:[%s2560 + $0xd9] sm:$0xff] %vm1839, %v2405
  %2580 = vst.msk [vmem:[%s2560 + $0xe1] sm:$0xff] %vm1839, %v2406
  %2581 = vst.msk [vmem:[%s2560 + $0xf1] sm:$0xff] %vm1839, %v2407
  %2582 = vst.msk [vmem:[%s2560 + $0xf9] sm:$0xff] %vm1839, %v2408
  %2583 = vst.msk [vmem:[%s2560 + $0x109] sm:$0xff] %vm1839, %v2409
  %2584 = vst.msk [vmem:[%s2560 + $0x111] sm:$0xff] %vm1839, %v2410
  %2585 = vst.msk [vmem:[%s2560 + $0x121] sm:$0xff] %vm1839, %v2411
  %2586 = vst.msk [vmem:[%s2560 + $0x129] sm:$0xff] %vm1839, %v2412
  %2587 = vst.msk [vmem:[%s2560 + $0x139] sm:$0xff] %vm1839, %v2413
  %2588 = vst.msk [vmem:[%s2560 + $0x141] sm:$0xff] %vm1839, %v2414
  %2589 = vst.msk [vmem:[%s2560 + $0x151] sm:$0xff] %vm1839, %v2415
  %2590 = vst.msk [vmem:[%s2560 + $0x159] sm:$0xff] %vm1839, %v2416
  %2591 = vst.msk [vmem:[%s2560 + $0x169] sm:$0xff] %vm1839, %v2417
  %2592 = vst.msk [vmem:[%s2560 + $0x171] sm:$0xff] %vm1839, %v2418
  %2593 = vst.msk [vmem:[%s2560 + $0x1b1] sm:$0xff] %vm1839, %v2419
  %2594 = vst.msk [vmem:[%s2560 + $0x1b9] sm:$0xff] %vm1839, %v2420
  %2595 = vst.msk [vmem:[%s2560 + $0x1c9] sm:$0xff] %vm1839, %v2421
  %2596 = vst.msk [vmem:[%s2560 + $0x1d1] sm:$0xff] %vm1839, %v2422
  %2597 = vst.msk [vmem:[%s2560 + $0x1e1] sm:$0xff] %vm1839, %v2423
  %2598 = vst.msk [vmem:[%s2560 + $0x1e9] sm:$0xff] %vm1839, %v2424
  %2599 = vst.msk [vmem:[%s2560 + $0x1f9] sm:$0xff] %vm1839, %v2425
  %2600 = vst.msk [vmem:[%s2560 + $0x201] sm:$0xff] %vm1839, %v2426
  %2601 = vst.msk [vmem:[%s2560 + $0x211] sm:$0xff] %vm1839, %v2427
  %2602 = vst.msk [vmem:[%s2560 + $0x219] sm:$0xff] %vm1839, %v2428
  %2603 = vst.msk [vmem:[%s2560 + $0x229] sm:$0xff] %vm1839, %v2429
  %2604 = vst.msk [vmem:[%s2560 + $0x231] sm:$0xff] %vm1839, %v2430
  %2605 = vst.msk [vmem:[%s2560 + $0x241] sm:$0xff] %vm1839, %v2431
  %2606 = vst.msk [vmem:[%s2560 + $0x249] sm:$0xff] %vm1839, %v2432
  %2607 = vst.msk [vmem:[%s2560 + $0x259] sm:$0xff] %vm1839, %v2433
  %2608 = vst.msk [vmem:[%s2560 + $0x261] sm:$0xff] %vm1839, %v2434
  %2609 = vst.msk [vmem:[%s2560 + $0x271] sm:$0xff] %vm1839, %v2435
  %2610 = vst.msk [vmem:[%s2560 + $0x279] sm:$0xff] %vm1839, %v2436
  %2611 = vst.msk [vmem:[%s2560 + $0x289] sm:$0xff] %vm1839, %v2437
  %2612 = vst.msk [vmem:[%s2560 + $0x291] sm:$0xff] %vm1839, %v2438
  %2613 = vst.msk [vmem:[%s2560 + $0x2a1] sm:$0xff] %vm1839, %v2439
  %2614 = vst.msk [vmem:[%s2560 + $0x2a9] sm:$0xff] %vm1839, %v2440
  %2615 = vst.msk [vmem:[%s2560 + $0x2b9] sm:$0xff] %vm1839, %v2441
  %2616 = vst.msk [vmem:[%s2560 + $0x2c1] sm:$0xff] %vm1839, %v2442
  %2617 = vst.msk [vmem:[%s2560 + $0x2d1] sm:$0xff] %vm1839, %v2443
  %2618 = vst.msk [vmem:[%s2560 + $0x2d9] sm:$0xff] %vm1839, %v2444
  %2619 = vst.msk [vmem:[%s2560 + $0x2e9] sm:$0xff] %vm1839, %v2445
  %2620 = vst.msk [vmem:[%s2560 + $0x2f1] sm:$0xff] %vm1839, %v2446
  %2621 = vst.msk [vmem:[%s2560 + $0x301] sm:$0xff] %vm1839, %v2447
  %2622 = vst.msk [vmem:[%s2560 + $0x309] sm:$0xff] %vm1839, %v2448
  %2623 = vst.msk [vmem:[%s2560 + $0x319] sm:$0xff] %vm1839, %v2449
  %2624 = vst.msk [vmem:[%s2560 + $0x321] sm:$0xff] %vm1839, %v2450
  %v2625 = vld [vmem:[#allocation3] ss:$2 sm:$0xff]
  %s2626 = scalar_lea.vmem [#allocation3], 48
  %v2627 = vld [vmem:[%s2626] ss:$2 sm:$0xff]
  %s2628 = scalar_lea.vmem [#allocation3], 96
  %v2629 = vld [vmem:[%s2628] ss:$2 sm:$0xff]
  %s2630 = scalar_lea.vmem [#allocation3], 144
  %v2631 = vld [vmem:[%s2630] ss:$2 sm:$0xff]
  %s2632 = scalar_lea.vmem [#allocation3], 192
  %v2633 = vld [vmem:[%s2632] ss:$2 sm:$0xff]
  %s2634 = scalar_lea.vmem [#allocation3], 240
  %v2635 = vld [vmem:[%s2634] ss:$2 sm:$0xff]
  %s2636 = scalar_lea.vmem [#allocation3], 288
  %v2637 = vld [vmem:[%s2636] ss:$2 sm:$0xff]
  %s2638 = scalar_lea.vmem [#allocation3], 336
  %v2639 = vld [vmem:[%s2638] ss:$2 sm:$0xff]
  %s2640 = scalar_lea.vmem [#allocation3], 432
  %v2641 = vld [vmem:[%s2640] ss:$2 sm:$0xff]
  %s2642 = scalar_lea.vmem [#allocation3], 480
  %v2643 = vld [vmem:[%s2642] ss:$2 sm:$0xff]
  %s2644 = scalar_lea.vmem [#allocation3], 528
  %v2645 = vld [vmem:[%s2644] ss:$2 sm:$0xff]
  %s2646 = scalar_lea.vmem [#allocation3], 576
  %v2647 = vld [vmem:[%s2646] ss:$2 sm:$0xff]
  %s2648 = scalar_lea.vmem [#allocation3], 624
  %v2649 = vld [vmem:[%s2648] ss:$2 sm:$0xff]
  %s2650 = scalar_lea.vmem [#allocation3], 672
  %v2651 = vld [vmem:[%s2650] ss:$2 sm:$0xff]
  %s2652 = scalar_lea.vmem [#allocation3], 720
  %v2653 = vld [vmem:[%s2652] ss:$2 sm:$0xff]
  %s2654 = scalar_lea.vmem [#allocation3], 768
  %v2655 = vld [vmem:[%s2654] ss:$2 sm:$0xff]
  %s2656 = scalar_lea.vmem [#allocation3], 1
  %v2657 = vld [vmem:[%s2656] ss:$2 sm:$0xff]
  %s2658 = scalar_lea.vmem [#allocation3], 49
  %v2659 = vld [vmem:[%s2658] ss:$2 sm:$0xff]
  %s2660 = scalar_lea.vmem [#allocation3], 97
  %v2661 = vld [vmem:[%s2660] ss:$2 sm:$0xff]
  %s2662 = scalar_lea.vmem [#allocation3], 145
  %v2663 = vld [vmem:[%s2662] ss:$2 sm:$0xff]
  %s2664 = scalar_lea.vmem [#allocation3], 193
  %v2665 = vld [vmem:[%s2664] ss:$2 sm:$0xff]
  %s2666 = scalar_lea.vmem [#allocation3], 241
  %v2667 = vld [vmem:[%s2666] ss:$2 sm:$0xff]
  %s2668 = scalar_lea.vmem [#allocation3], 289
  %v2669 = vld [vmem:[%s2668] ss:$2 sm:$0xff]
  %s2670 = scalar_lea.vmem [#allocation3], 337
  %v2671 = vld [vmem:[%s2670] ss:$2 sm:$0xff]
  %s2672 = scalar_lea.vmem [#allocation3], 433
  %v2673 = vld [vmem:[%s2672] ss:$2 sm:$0xff]
  %s2674 = scalar_lea.vmem [#allocation3], 481
  %v2675 = vld [vmem:[%s2674] ss:$2 sm:$0xff]
  %s2676 = scalar_lea.vmem [#allocation3], 529
  %v2677 = vld [vmem:[%s2676] ss:$2 sm:$0xff]
  %s2678 = scalar_lea.vmem [#allocation3], 577
  %v2679 = vld [vmem:[%s2678] ss:$2 sm:$0xff]
  %s2680 = scalar_lea.vmem [#allocation3], 625
  %v2681 = vld [vmem:[%s2680] ss:$2 sm:$0xff]
  %s2682 = scalar_lea.vmem [#allocation3], 673
  %v2683 = vld [vmem:[%s2682] ss:$2 sm:$0xff]
  %s2684 = scalar_lea.vmem [#allocation3], 721
  %v2685 = vld [vmem:[%s2684] ss:$2 sm:$0xff]
  %s2686 = scalar_lea.vmem [#allocation3], 769
  %v2687 = vld [vmem:[%s2686] ss:$2 sm:$0xff]
  %s2688 = scalar_lea.vmem [#allocation3], 2
  %v2689 = vld [vmem:[%s2688] ss:$2 sm:$0xff]
  %s2690 = scalar_lea.vmem [#allocation3], 50
  %v2691 = vld [vmem:[%s2690] ss:$2 sm:$0xff]
  %s2692 = scalar_lea.vmem [#allocation3], 98
  %v2693 = vld [vmem:[%s2692] ss:$2 sm:$0xff]
  %s2694 = scalar_lea.vmem [#allocation3], 146
  %v2695 = vld [vmem:[%s2694] ss:$2 sm:$0xff]
  %s2696 = scalar_lea.vmem [#allocation3], 194
  %v2697 = vld [vmem:[%s2696] ss:$2 sm:$0xff]
  %s2698 = scalar_lea.vmem [#allocation3], 242
  %v2699 = vld [vmem:[%s2698] ss:$2 sm:$0xff]
  %s2700 = scalar_lea.vmem [#allocation3], 290
  %v2701 = vld [vmem:[%s2700] ss:$2 sm:$0xff]
  %s2702 = scalar_lea.vmem [#allocation3], 338
  %v2703 = vld [vmem:[%s2702] ss:$2 sm:$0xff]
  %s2704 = scalar_lea.vmem [#allocation3], 434
  %v2705 = vld [vmem:[%s2704] ss:$2 sm:$0xff]
  %s2706 = scalar_lea.vmem [#allocation3], 482
  %v2707 = vld [vmem:[%s2706] ss:$2 sm:$0xff]
  %s2708 = scalar_lea.vmem [#allocation3], 530
  %v2709 = vld [vmem:[%s2708] ss:$2 sm:$0xff]
  %s2710 = scalar_lea.vmem [#allocation3], 578
  %v2711 = vld [vmem:[%s2710] ss:$2 sm:$0xff]
  %s2712 = scalar_lea.vmem [#allocation3], 626
  %v2713 = vld [vmem:[%s2712] ss:$2 sm:$0xff]
  %s2714 = scalar_lea.vmem [#allocation3], 674
  %v2715 = vld [vmem:[%s2714] ss:$2 sm:$0xff]
  %s2716 = scalar_lea.vmem [#allocation3], 722
  %v2717 = vld [vmem:[%s2716] ss:$2 sm:$0xff]
  %s2718 = scalar_lea.vmem [#allocation3], 770
  %v2719 = vld [vmem:[%s2718] ss:$2 sm:$0xff]
  %v2720 = vld [vmem:[%s2560] ss:$2 sm:$0xff]
  %s2721 = scalar_lea.vmem %s2560, 48 [#allocation3]
  %v2722 = vld [vmem:[%s2721] ss:$2 sm:$0xff]
  %s2723 = scalar_lea.vmem %s2560, 96 [#allocation3]
  %v2724 = vld [vmem:[%s2723] ss:$2 sm:$0xff]
  %s2725 = scalar_lea.vmem %s2560, 144 [#allocation3]
  %v2726 = vld [vmem:[%s2725] ss:$2 sm:$0xff]
  %s2727 = scalar_lea.vmem %s2560, 192 [#allocation3]
  %v2728 = vld [vmem:[%s2727] ss:$2 sm:$0xff]
  %s2729 = scalar_lea.vmem %s2560, 240 [#allocation3]
  %v2730 = vld [vmem:[%s2729] ss:$2 sm:$0xff]
  %s2731 = scalar_lea.vmem %s2560, 288 [#allocation3]
  %v2732 = vld [vmem:[%s2731] ss:$2 sm:$0xff]
  %s2733 = scalar_lea.vmem %s2560, 336 [#allocation3]
  %v2734 = vld [vmem:[%s2733] ss:$2 sm:$0xff]
  %s2735 = scalar_lea.vmem %s2560, 432 [#allocation3]
  %v2736 = vld [vmem:[%s2735] ss:$2 sm:$0xff]
  %s2737 = scalar_lea.vmem %s2560, 480 [#allocation3]
  %v2738 = vld [vmem:[%s2737] ss:$2 sm:$0xff]
  %s2739 = scalar_lea.vmem %s2560, 528 [#allocation3]
  %v2740 = vld [vmem:[%s2739] ss:$2 sm:$0xff]
  %s2741 = scalar_lea.vmem %s2560, 576 [#allocation3]
  %v2742 = vld [vmem:[%s2741] ss:$2 sm:$0xff]
  %s2743 = scalar_lea.vmem %s2560, 624 [#allocation3]
  %v2744 = vld [vmem:[%s2743] ss:$2 sm:$0xff]
  %s2745 = scalar_lea.vmem %s2560, 672 [#allocation3]
  %v2746 = vld [vmem:[%s2745] ss:$2 sm:$0xff]
  %s2747 = scalar_lea.vmem %s2560, 720 [#allocation3]
  %v2748 = vld [vmem:[%s2747] ss:$2 sm:$0xff]
  %s2749 = scalar_lea.vmem %s2560, 768 [#allocation3]
  %v2750 = vld [vmem:[%s2749] ss:$2 sm:$0xff]
  %s2751 = scalar_lea.vmem %s2560, 1 [#allocation3]
  %v2752 = vld [vmem:[%s2751] ss:$2 sm:$0xff]
  %s2753 = scalar_lea.vmem %s2560, 49 [#allocation3]
  %v2754 = vld [vmem:[%s2753] ss:$2 sm:$0xff]
  %s2755 = scalar_lea.vmem %s2560, 97 [#allocation3]
  %v2756 = vld [vmem:[%s2755] ss:$2 sm:$0xff]
  %s2757 = scalar_lea.vmem %s2560, 145 [#allocation3]
  %v2758 = vld [vmem:[%s2757] ss:$2 sm:$0xff]
  %s2759 = scalar_lea.vmem %s2560, 193 [#allocation3]
  %v2760 = vld [vmem:[%s2759] ss:$2 sm:$0xff]
  %s2761 = scalar_lea.vmem %s2560, 241 [#allocation3]
  %v2762 = vld [vmem:[%s2761] ss:$2 sm:$0xff]
  %s2763 = scalar_lea.vmem %s2560, 289 [#allocation3]
  %v2764 = vld [vmem:[%s2763] ss:$2 sm:$0xff]
  %s2765 = scalar_lea.vmem %s2560, 337 [#allocation3]
  %v2766 = vld [vmem:[%s2765] ss:$2 sm:$0xff]
  %s2767 = scalar_lea.vmem %s2560, 433 [#allocation3]
  %v2768 = vld [vmem:[%s2767] ss:$2 sm:$0xff]
  %s2769 = scalar_lea.vmem %s2560, 481 [#allocation3]
  %v2770 = vld [vmem:[%s2769] ss:$2 sm:$0xff]
  %s2771 = scalar_lea.vmem %s2560, 529 [#allocation3]
  %v2772 = vld [vmem:[%s2771] ss:$2 sm:$0xff]
  %s2773 = scalar_lea.vmem %s2560, 577 [#allocation3]
  %v2774 = vld [vmem:[%s2773] ss:$2 sm:$0xff]
  %s2775 = scalar_lea.vmem %s2560, 625 [#allocation3]
  %v2776 = vld [vmem:[%s2775] ss:$2 sm:$0xff]
  %s2777 = scalar_lea.vmem %s2560, 673 [#allocation3]
  %v2778 = vld [vmem:[%s2777] ss:$2 sm:$0xff]
  %s2779 = scalar_lea.vmem %s2560, 721 [#allocation3]
  %v2780 = vld [vmem:[%s2779] ss:$2 sm:$0xff]
  %s2781 = scalar_lea.vmem %s2560, 769 [#allocation3]
  %v2782 = vld [vmem:[%s2781] ss:$2 sm:$0xff]
  %s2783 = scalar_lea.vmem %s2560, 2 [#allocation3]
  %v2784 = vld [vmem:[%s2783] ss:$2 sm:$0xff]
  %s2785 = scalar_lea.vmem %s2560, 50 [#allocation3]
  %v2786 = vld [vmem:[%s2785] ss:$2 sm:$0xff]
  %s2787 = scalar_lea.vmem %s2560, 98 [#allocation3]
  %v2788 = vld [vmem:[%s2787] ss:$2 sm:$0xff]
  %s2789 = scalar_lea.vmem %s2560, 146 [#allocation3]
  %v2790 = vld [vmem:[%s2789] ss:$2 sm:$0xff]
  %s2791 = scalar_lea.vmem %s2560, 194 [#allocation3]
  %v2792 = vld [vmem:[%s2791] ss:$2 sm:$0xff]
  %s2793 = scalar_lea.vmem %s2560, 242 [#allocation3]
  %v2794 = vld [vmem:[%s2793] ss:$2 sm:$0xff]
  %s2795 = scalar_lea.vmem %s2560, 290 [#allocation3]
  %v2796 = vld [vmem:[%s2795] ss:$2 sm:$0xff]
  %s2797 = scalar_lea.vmem %s2560, 338 [#allocation3]
  %v2798 = vld [vmem:[%s2797] ss:$2 sm:$0xff]
  %s2799 = scalar_lea.vmem %s2560, 434 [#allocation3]
  %v2800 = vld [vmem:[%s2799] ss:$2 sm:$0xff]
  %s2801 = scalar_lea.vmem %s2560, 482 [#allocation3]
  %v2802 = vld [vmem:[%s2801] ss:$2 sm:$0xff]
  %s2803 = scalar_lea.vmem %s2560, 530 [#allocation3]
  %v2804 = vld [vmem:[%s2803] ss:$2 sm:$0xff]
  %s2805 = scalar_lea.vmem %s2560, 578 [#allocation3]
  %v2806 = vld [vmem:[%s2805] ss:$2 sm:$0xff]
  %s2807 = scalar_lea.vmem %s2560, 626 [#allocation3]
  %v2808 = vld [vmem:[%s2807] ss:$2 sm:$0xff]
  %s2809 = scalar_lea.vmem %s2560, 674 [#allocation3]
  %v2810 = vld [vmem:[%s2809] ss:$2 sm:$0xff]
  %s2811 = scalar_lea.vmem %s2560, 722 [#allocation3]
  %v2812 = vld [vmem:[%s2811] ss:$2 sm:$0xff]
  %s2813 = scalar_lea.vmem %s2560, 770 [#allocation3]
  %v2814 = vld [vmem:[%s2813] ss:$2 sm:$0xff]
  %s2815 = scalar_lea.vmem [#allocation3], 48
  %v2816 = vld [vmem:[%s2815] ss:$2 sm:$0xff]
  %s2817 = scalar_lea.vmem %s2815, 48 [#allocation3]
  %v2818 = vld [vmem:[%s2817] ss:$2 sm:$0xff]
  %s2819 = scalar_lea.vmem %s2815, 96 [#allocation3]
  %v2820 = vld [vmem:[%s2819] ss:$2 sm:$0xff]
  %s2821 = scalar_lea.vmem %s2815, 144 [#allocation3]
  %v2822 = vld [vmem:[%s2821] ss:$2 sm:$0xff]
  %s2823 = scalar_lea.vmem %s2815, 192 [#allocation3]
  %v2824 = vld [vmem:[%s2823] ss:$2 sm:$0xff]
  %s2825 = scalar_lea.vmem %s2815, 240 [#allocation3]
  %v2826 = vld [vmem:[%s2825] ss:$2 sm:$0xff]
  %s2827 = scalar_lea.vmem %s2815, 288 [#allocation3]
  %v2828 = vld [vmem:[%s2827] ss:$2 sm:$0xff]
  %s2829 = scalar_lea.vmem %s2815, 336 [#allocation3]
  %v2830 = vld [vmem:[%s2829] ss:$2 sm:$0xff]
  %s2831 = scalar_lea.vmem %s2815, 432 [#allocation3]
  %v2832 = vld [vmem:[%s2831] ss:$2 sm:$0xff]
  %s2833 = scalar_lea.vmem %s2815, 480 [#allocation3]
  %v2834 = vld [vmem:[%s2833] ss:$2 sm:$0xff]
  %s2835 = scalar_lea.vmem %s2815, 528 [#allocation3]
  %v2836 = vld [vmem:[%s2835] ss:$2 sm:$0xff]
  %s2837 = scalar_lea.vmem %s2815, 576 [#allocation3]
  %v2838 = vld [vmem:[%s2837] ss:$2 sm:$0xff]
  %s2839 = scalar_lea.vmem %s2815, 624 [#allocation3]
  %v2840 = vld [vmem:[%s2839] ss:$2 sm:$0xff]
  %s2841 = scalar_lea.vmem %s2815, 672 [#allocation3]
  %v2842 = vld [vmem:[%s2841] ss:$2 sm:$0xff]
  %s2843 = scalar_lea.vmem %s2815, 720 [#allocation3]
  %v2844 = vld [vmem:[%s2843] ss:$2 sm:$0xff]
  %s2845 = scalar_lea.vmem %s2815, 768 [#allocation3]
  %v2846 = vld [vmem:[%s2845] ss:$2 sm:$0xff]
  %s2847 = scalar_lea.vmem %s2815, 1 [#allocation3]
  %v2848 = vld [vmem:[%s2847] ss:$2 sm:$0xff]
  %s2849 = scalar_lea.vmem %s2815, 49 [#allocation3]
  %v2850 = vld [vmem:[%s2849] ss:$2 sm:$0xff]
  %s2851 = scalar_lea.vmem %s2815, 97 [#allocation3]
  %v2852 = vld [vmem:[%s2851] ss:$2 sm:$0xff]
  %s2853 = scalar_lea.vmem %s2815, 145 [#allocation3]
  %v2854 = vld [vmem:[%s2853] ss:$2 sm:$0xff]
  %s2855 = scalar_lea.vmem %s2815, 193 [#allocation3]
  %v2856 = vld [vmem:[%s2855] ss:$2 sm:$0xff]
  %s2857 = scalar_lea.vmem %s2815, 241 [#allocation3]
  %v2858 = vld [vmem:[%s2857] ss:$2 sm:$0xff]
  %s2859 = scalar_lea.vmem %s2815, 289 [#allocation3]
  %v2860 = vld [vmem:[%s2859] ss:$2 sm:$0xff]
  %s2861 = scalar_lea.vmem %s2815, 337 [#allocation3]
  %v2862 = vld [vmem:[%s2861] ss:$2 sm:$0xff]
  %s2863 = scalar_lea.vmem %s2815, 433 [#allocation3]
  %v2864 = vld [vmem:[%s2863] ss:$2 sm:$0xff]
  %s2865 = scalar_lea.vmem %s2815, 481 [#allocation3]
  %v2866 = vld [vmem:[%s2865] ss:$2 sm:$0xff]
  %s2867 = scalar_lea.vmem %s2815, 529 [#allocation3]
  %v2868 = vld [vmem:[%s2867] ss:$2 sm:$0xff]
  %s2869 = scalar_lea.vmem %s2815, 577 [#allocation3]
  %v2870 = vld [vmem:[%s2869] ss:$2 sm:$0xff]
  %s2871 = scalar_lea.vmem %s2815, 625 [#allocation3]
  %v2872 = vld [vmem:[%s2871] ss:$2 sm:$0xff]
  %s2873 = scalar_lea.vmem %s2815, 673 [#allocation3]
  %v2874 = vld [vmem:[%s2873] ss:$2 sm:$0xff]
  %s2875 = scalar_lea.vmem %s2815, 721 [#allocation3]
  %v2876 = vld [vmem:[%s2875] ss:$2 sm:$0xff]
  %s2877 = scalar_lea.vmem %s2815, 769 [#allocation3]
  %v2878 = vld [vmem:[%s2877] ss:$2 sm:$0xff]
  %s2879 = scalar_lea.vmem %s2815, 2 [#allocation3]
  %v2880 = vld [vmem:[%s2879] ss:$2 sm:$0xff]
  %s2881 = scalar_lea.vmem %s2815, 50 [#allocation3]
  %v2882 = vld [vmem:[%s2881] ss:$2 sm:$0xff]
  %s2883 = scalar_lea.vmem %s2815, 98 [#allocation3]
  %v2884 = vld [vmem:[%s2883] ss:$2 sm:$0xff]
  %s2885 = scalar_lea.vmem %s2815, 146 [#allocation3]
  %v2886 = vld [vmem:[%s2885] ss:$2 sm:$0xff]
  %s2887 = scalar_lea.vmem %s2815, 194 [#allocation3]
  %v2888 = vld [vmem:[%s2887] ss:$2 sm:$0xff]
  %s2889 = scalar_lea.vmem %s2815, 242 [#allocation3]
  %v2890 = vld [vmem:[%s2889] ss:$2 sm:$0xff]
  %s2891 = scalar_lea.vmem %s2815, 290 [#allocation3]
  %v2892 = vld [vmem:[%s2891] ss:$2 sm:$0xff]
  %s2893 = scalar_lea.vmem %s2815, 338 [#allocation3]
  %v2894 = vld [vmem:[%s2893] ss:$2 sm:$0xff]
  %s2895 = scalar_lea.vmem %s2815, 434 [#allocation3]
  %v2896 = vld [vmem:[%s2895] ss:$2 sm:$0xff]
  %s2897 = scalar_lea.vmem %s2815, 482 [#allocation3]
  %v2898 = vld [vmem:[%s2897] ss:$2 sm:$0xff]
  %s2899 = scalar_lea.vmem %s2815, 530 [#allocation3]
  %v2900 = vld [vmem:[%s2899] ss:$2 sm:$0xff]
  %s2901 = scalar_lea.vmem %s2815, 578 [#allocation3]
  %v2902 = vld [vmem:[%s2901] ss:$2 sm:$0xff]
  %s2903 = scalar_lea.vmem %s2815, 626 [#allocation3]
  %v2904 = vld [vmem:[%s2903] ss:$2 sm:$0xff]
  %s2905 = scalar_lea.vmem %s2815, 674 [#allocation3]
  %v2906 = vld [vmem:[%s2905] ss:$2 sm:$0xff]
  %s2907 = scalar_lea.vmem %s2815, 722 [#allocation3]
  %v2908 = vld [vmem:[%s2907] ss:$2 sm:$0xff]
  %s2909 = scalar_lea.vmem %s2815, 770 [#allocation3]
  %v2910 = vld [vmem:[%s2909] ss:$2 sm:$0xff]
  %2927 = vrot.lane.b32.xlu0 %v2657, 4
  %v2928 = vpop.permute.xlu0 %2927
  %2929 = vrot.lane.b32.xlu0 %v2659, 4
  %v2930 = vpop.permute.xlu0 %2929
  %2931 = vrot.lane.b32.xlu0 %v2661, 4
  %v2932 = vpop.permute.xlu0 %2931
  %2933 = vrot.lane.b32.xlu0 %v2663, 4
  %v2934 = vpop.permute.xlu0 %2933
  %2935 = vrot.lane.b32.xlu0 %v2665, 4
  %v2936 = vpop.permute.xlu0 %2935
  %2937 = vrot.lane.b32.xlu0 %v2667, 4
  %v2938 = vpop.permute.xlu0 %2937
  %2939 = vrot.lane.b32.xlu0 %v2669, 4
  %v2940 = vpop.permute.xlu0 %2939
  %2941 = vrot.lane.b32.xlu0 %v2671, 4
  %v2942 = vpop.permute.xlu0 %2941
  %2943 = vrot.lane.b32.xlu0 %v2673, 4
  %v2944 = vpop.permute.xlu0 %2943
  %2945 = vrot.lane.b32.xlu0 %v2675, 4
  %v2946 = vpop.permute.xlu0 %2945
  %2947 = vrot.lane.b32.xlu0 %v2677, 4
  %v2948 = vpop.permute.xlu0 %2947
  %2949 = vrot.lane.b32.xlu0 %v2679, 4
  %v2950 = vpop.permute.xlu0 %2949
  %2951 = vrot.lane.b32.xlu0 %v2681, 4
  %v2952 = vpop.permute.xlu0 %2951
  %2953 = vrot.lane.b32.xlu0 %v2683, 4
  %v2954 = vpop.permute.xlu0 %2953
  %2955 = vrot.lane.b32.xlu0 %v2685, 4
  %v2956 = vpop.permute.xlu0 %2955
  %2957 = vrot.lane.b32.xlu0 %v2687, 4
  %v2958 = vpop.permute.xlu0 %2957
  %2991 = vrot.lane.b32.xlu0 %v2689, 8
  %v2992 = vpop.permute.xlu0 %2991
  %2993 = vrot.lane.b32.xlu0 %v2691, 8
  %v2994 = vpop.permute.xlu0 %2993
  %2995 = vrot.lane.b32.xlu0 %v2693, 8
  %v2996 = vpop.permute.xlu0 %2995
  %2997 = vrot.lane.b32.xlu0 %v2695, 8
  %v2998 = vpop.permute.xlu0 %2997
  %2999 = vrot.lane.b32.xlu0 %v2697, 8
  %v3000 = vpop.permute.xlu0 %2999
  %3001 = vrot.lane.b32.xlu0 %v2699, 8
  %v3002 = vpop.permute.xlu0 %3001
  %3003 = vrot.lane.b32.xlu0 %v2701, 8
  %v3004 = vpop.permute.xlu0 %3003
  %3005 = vrot.lane.b32.xlu0 %v2703, 8
  %v3006 = vpop.permute.xlu0 %3005
  %3007 = vrot.lane.b32.xlu0 %v2705, 8
  %v3008 = vpop.permute.xlu0 %3007
  %3009 = vrot.lane.b32.xlu0 %v2707, 8
  %v3010 = vpop.permute.xlu0 %3009
  %3011 = vrot.lane.b32.xlu0 %v2709, 8
  %v3012 = vpop.permute.xlu0 %3011
  %3013 = vrot.lane.b32.xlu0 %v2711, 8
  %v3014 = vpop.permute.xlu0 %3013
  %3015 = vrot.lane.b32.xlu0 %v2713, 8
  %v3016 = vpop.permute.xlu0 %3015
  %3017 = vrot.lane.b32.xlu0 %v2715, 8
  %v3018 = vpop.permute.xlu0 %3017
  %3019 = vrot.lane.b32.xlu0 %v2717, 8
  %v3020 = vpop.permute.xlu0 %3019
  %3021 = vrot.lane.b32.xlu0 %v2719, 8
  %v3022 = vpop.permute.xlu0 %3021
  %3055 = vrot.lane.b32.xlu0 %v2720, 12
  %v3056 = vpop.permute.xlu0 %3055
  %3057 = vrot.lane.b32.xlu0 %v2722, 12
  %v3058 = vpop.permute.xlu0 %3057
  %3059 = vrot.lane.b32.xlu0 %v2724, 12
  %v3060 = vpop.permute.xlu0 %3059
  %3061 = vrot.lane.b32.xlu0 %v2726, 12
  %v3062 = vpop.permute.xlu0 %3061
  %3063 = vrot.lane.b32.xlu0 %v2728, 12
  %v3064 = vpop.permute.xlu0 %3063
  %3065 = vrot.lane.b32.xlu0 %v2730, 12
  %v3066 = vpop.permute.xlu0 %3065
  %3067 = vrot.lane.b32.xlu0 %v2732, 12
  %v3068 = vpop.permute.xlu0 %3067
  %3069 = vrot.lane.b32.xlu0 %v2734, 12
  %v3070 = vpop.permute.xlu0 %3069
  %3071 = vrot.lane.b32.xlu0 %v2736, 12
  %v3072 = vpop.permute.xlu0 %3071
  %3073 = vrot.lane.b32.xlu0 %v2738, 12
  %v3074 = vpop.permute.xlu0 %3073
  %3075 = vrot.lane.b32.xlu0 %v2740, 12
  %v3076 = vpop.permute.xlu0 %3075
  %3077 = vrot.lane.b32.xlu0 %v2742, 12
  %v3078 = vpop.permute.xlu0 %3077
  %3079 = vrot.lane.b32.xlu0 %v2744, 12
  %v3080 = vpop.permute.xlu0 %3079
  %3081 = vrot.lane.b32.xlu0 %v2746, 12
  %v3082 = vpop.permute.xlu0 %3081
  %3083 = vrot.lane.b32.xlu0 %v2748, 12
  %v3084 = vpop.permute.xlu0 %3083
  %3085 = vrot.lane.b32.xlu0 %v2750, 12
  %v3086 = vpop.permute.xlu0 %3085
  %3119 = vrot.lane.b32.xlu0 %v2752, 16
  %v3120 = vpop.permute.xlu0 %3119
  %3121 = vrot.lane.b32.xlu0 %v2754, 16
  %v3122 = vpop.permute.xlu0 %3121
  %3123 = vrot.lane.b32.xlu0 %v2756, 16
  %v3124 = vpop.permute.xlu0 %3123
  %3125 = vrot.lane.b32.xlu0 %v2758, 16
  %v3126 = vpop.permute.xlu0 %3125
  %3127 = vrot.lane.b32.xlu0 %v2760, 16
  %v3128 = vpop.permute.xlu0 %3127
  %3129 = vrot.lane.b32.xlu0 %v2762, 16
  %v3130 = vpop.permute.xlu0 %3129
  %3131 = vrot.lane.b32.xlu0 %v2764, 16
  %v3132 = vpop.permute.xlu0 %3131
  %3133 = vrot.lane.b32.xlu0 %v2766, 16
  %v3134 = vpop.permute.xlu0 %3133
  %3135 = vrot.lane.b32.xlu0 %v2768, 16
  %v3136 = vpop.permute.xlu0 %3135
  %3137 = vrot.lane.b32.xlu0 %v2770, 16
  %v3138 = vpop.permute.xlu0 %3137
  %3139 = vrot.lane.b32.xlu0 %v2772, 16
  %v3140 = vpop.permute.xlu0 %3139
  %3141 = vrot.lane.b32.xlu0 %v2774, 16
  %v3142 = vpop.permute.xlu0 %3141
  %3143 = vrot.lane.b32.xlu0 %v2776, 16
  %v3144 = vpop.permute.xlu0 %3143
  %3145 = vrot.lane.b32.xlu0 %v2778, 16
  %v3146 = vpop.permute.xlu0 %3145
  %3147 = vrot.lane.b32.xlu0 %v2780, 16
  %v3148 = vpop.permute.xlu0 %3147
  %3149 = vrot.lane.b32.xlu0 %v2782, 16
  %v3150 = vpop.permute.xlu0 %3149
  %3183 = vrot.lane.b32.xlu0 %v2784, 20
  %v3184 = vpop.permute.xlu0 %3183
  %3185 = vrot.lane.b32.xlu0 %v2786, 20
  %v3186 = vpop.permute.xlu0 %3185
  %3187 = vrot.lane.b32.xlu0 %v2788, 20
  %v3188 = vpop.permute.xlu0 %3187
  %3189 = vrot.lane.b32.xlu0 %v2790, 20
  %v3190 = vpop.permute.xlu0 %3189
  %3191 = vrot.lane.b32.xlu0 %v2792, 20
  %v3192 = vpop.permute.xlu0 %3191
  %3193 = vrot.lane.b32.xlu0 %v2794, 20
  %v3194 = vpop.permute.xlu0 %3193
  %3195 = vrot.lane.b32.xlu0 %v2796, 20
  %v3196 = vpop.permute.xlu0 %3195
  %3197 = vrot.lane.b32.xlu0 %v2798, 20
  %v3198 = vpop.permute.xlu0 %3197
  %3199 = vrot.lane.b32.xlu0 %v2800, 20
  %v3200 = vpop.permute.xlu0 %3199
  %3201 = vrot.lane.b32.xlu0 %v2802, 20
  %v3202 = vpop.permute.xlu0 %3201
  %3203 = vrot.lane.b32.xlu0 %v2804, 20
  %v3204 = vpop.permute.xlu0 %3203
  %3205 = vrot.lane.b32.xlu0 %v2806, 20
  %v3206 = vpop.permute.xlu0 %3205
  %3207 = vrot.lane.b32.xlu0 %v2808, 20
  %v3208 = vpop.permute.xlu0 %3207
  %3209 = vrot.lane.b32.xlu0 %v2810, 20
  %v3210 = vpop.permute.xlu0 %3209
  %3211 = vrot.lane.b32.xlu0 %v2812, 20
  %v3212 = vpop.permute.xlu0 %3211
  %3213 = vrot.lane.b32.xlu0 %v2814, 20
  %v3214 = vpop.permute.xlu0 %3213
  %3247 = vrot.lane.b32.xlu0 %v2816, 24
  %v3248 = vpop.permute.xlu0 %3247
  %3249 = vrot.lane.b32.xlu0 %v2818, 24
  %v3250 = vpop.permute.xlu0 %3249
  %3251 = vrot.lane.b32.xlu0 %v2820, 24
  %v3252 = vpop.permute.xlu0 %3251
  %3253 = vrot.lane.b32.xlu0 %v2822, 24
  %v3254 = vpop.permute.xlu0 %3253
  %3255 = vrot.lane.b32.xlu0 %v2824, 24
  %v3256 = vpop.permute.xlu0 %3255
  %3257 = vrot.lane.b32.xlu0 %v2826, 24
  %v3258 = vpop.permute.xlu0 %3257
  %3259 = vrot.lane.b32.xlu0 %v2828, 24
  %v3260 = vpop.permute.xlu0 %3259
  %3261 = vrot.lane.b32.xlu0 %v2830, 24
  %v3262 = vpop.permute.xlu0 %3261
  %3263 = vrot.lane.b32.xlu0 %v2832, 24
  %v3264 = vpop.permute.xlu0 %3263
  %3265 = vrot.lane.b32.xlu0 %v2834, 24
  %v3266 = vpop.permute.xlu0 %3265
  %3267 = vrot.lane.b32.xlu0 %v2836, 24
  %v3268 = vpop.permute.xlu0 %3267
  %3269 = vrot.lane.b32.xlu0 %v2838, 24
  %v3270 = vpop.permute.xlu0 %3269
  %3271 = vrot.lane.b32.xlu0 %v2840, 24
  %v3272 = vpop.permute.xlu0 %3271
  %3273 = vrot.lane.b32.xlu0 %v2842, 24
  %v3274 = vpop.permute.xlu0 %3273
  %3275 = vrot.lane.b32.xlu0 %v2844, 24
  %v3276 = vpop.permute.xlu0 %3275
  %3277 = vrot.lane.b32.xlu0 %v2846, 24
  %v3278 = vpop.permute.xlu0 %3277
  %3311 = vrot.lane.b32.xlu0 %v2848, 28
  %v3312 = vpop.permute.xlu0 %3311
  %3313 = vrot.lane.b32.xlu0 %v2850, 28
  %v3314 = vpop.permute.xlu0 %3313
  %3315 = vrot.lane.b32.xlu0 %v2852, 28
  %v3316 = vpop.permute.xlu0 %3315
  %3317 = vrot.lane.b32.xlu0 %v2854, 28
  %v3318 = vpop.permute.xlu0 %3317
  %3319 = vrot.lane.b32.xlu0 %v2856, 28
  %v3320 = vpop.permute.xlu0 %3319
  %3321 = vrot.lane.b32.xlu0 %v2858, 28
  %v3322 = vpop.permute.xlu0 %3321
  %3323 = vrot.lane.b32.xlu0 %v2860, 28
  %v3324 = vpop.permute.xlu0 %3323
  %3325 = vrot.lane.b32.xlu0 %v2862, 28
  %v3326 = vpop.permute.xlu0 %3325
  %3327 = vrot.lane.b32.xlu0 %v2864, 28
  %v3328 = vpop.permute.xlu0 %3327
  %3329 = vrot.lane.b32.xlu0 %v2866, 28
  %v3330 = vpop.permute.xlu0 %3329
  %3331 = vrot.lane.b32.xlu0 %v2868, 28
  %v3332 = vpop.permute.xlu0 %3331
  %3333 = vrot.lane.b32.xlu0 %v2870, 28
  %v3334 = vpop.permute.xlu0 %3333
  %3335 = vrot.lane.b32.xlu0 %v2872, 28
  %v3336 = vpop.permute.xlu0 %3335
  %3337 = vrot.lane.b32.xlu0 %v2874, 28
  %v3338 = vpop.permute.xlu0 %3337
  %3339 = vrot.lane.b32.xlu0 %v2876, 28
  %v3340 = vpop.permute.xlu0 %3339
  %3341 = vrot.lane.b32.xlu0 %v2878, 28
  %v3342 = vpop.permute.xlu0 %3341
  %3375 = vrot.lane.b32.xlu0 %v2880, 32
  %v3376 = vpop.permute.xlu0 %3375
  %3377 = vrot.lane.b32.xlu0 %v2882, 32
  %v3378 = vpop.permute.xlu0 %3377
  %3379 = vrot.lane.b32.xlu0 %v2884, 32
  %v3380 = vpop.permute.xlu0 %3379
  %3381 = vrot.lane.b32.xlu0 %v2886, 32
  %v3382 = vpop.permute.xlu0 %3381
  %3383 = vrot.lane.b32.xlu0 %v2888, 32
  %v3384 = vpop.permute.xlu0 %3383
  %3385 = vrot.lane.b32.xlu0 %v2890, 32
  %v3386 = vpop.permute.xlu0 %3385
  %3387 = vrot.lane.b32.xlu0 %v2892, 32
  %v3388 = vpop.permute.xlu0 %3387
  %3389 = vrot.lane.b32.xlu0 %v2894, 32
  %v3390 = vpop.permute.xlu0 %3389
  %3391 = vrot.lane.b32.xlu0 %v2896, 32
  %v3392 = vpop.permute.xlu0 %3391
  %3393 = vrot.lane.b32.xlu0 %v2898, 32
  %v3394 = vpop.permute.xlu0 %3393
  %3395 = vrot.lane.b32.xlu0 %v2900, 32
  %v3396 = vpop.permute.xlu0 %3395
  %3397 = vrot.lane.b32.xlu0 %v2902, 32
  %v3398 = vpop.permute.xlu0 %3397
  %3399 = vrot.lane.b32.xlu0 %v2904, 32
  %v3400 = vpop.permute.xlu0 %3399
  %3401 = vrot.lane.b32.xlu0 %v2906, 32
  %v3402 = vpop.permute.xlu0 %3401
  %3403 = vrot.lane.b32.xlu0 %v2908, 32
  %v3404 = vpop.permute.xlu0 %3403
  %3405 = vrot.lane.b32.xlu0 %v2910, 32
  %v3406 = vpop.permute.xlu0 %3405
  %v3423 = vsel %vm1839, %v2625, %v2928
  %v3424 = vsel %vm1839, %v2627, %v2930
  %v3425 = vsel %vm1839, %v2629, %v2932
  %v3426 = vsel %vm1839, %v2631, %v2934
  %v3427 = vsel %vm1839, %v2633, %v2936
  %v3428 = vsel %vm1839, %v2635, %v2938
  %v3429 = vsel %vm1839, %v2637, %v2940
  %v3430 = vsel %vm1839, %v2639, %v2942
  %v3431 = vsel %vm1839, %v2641, %v2944
  %v3432 = vsel %vm1839, %v2643, %v2946
  %v3433 = vsel %vm1839, %v2645, %v2948
  %v3434 = vsel %vm1839, %v2647, %v2950
  %v3435 = vsel %vm1839, %v2649, %v2952
  %v3436 = vsel %vm1839, %v2651, %v2954
  %v3437 = vsel %vm1839, %v2653, %v2956
  %v3438 = vsel %vm1839, %v2655, %v2958
  %v3439 = vsel %vm121, %v3423, %v2992
  %v3440 = vsel %vm121, %v3424, %v2994
  %v3441 = vsel %vm121, %v3425, %v2996
  %v3442 = vsel %vm121, %v3426, %v2998
  %v3443 = vsel %vm121, %v3427, %v3000
  %v3444 = vsel %vm121, %v3428, %v3002
  %v3445 = vsel %vm121, %v3429, %v3004
  %v3446 = vsel %vm121, %v3430, %v3006
  %v3447 = vsel %vm121, %v3431, %v3008
  %v3448 = vsel %vm121, %v3432, %v3010
  %v3449 = vsel %vm121, %v3433, %v3012
  %v3450 = vsel %vm121, %v3434, %v3014
  %v3451 = vsel %vm121, %v3435, %v3016
  %v3452 = vsel %vm121, %v3436, %v3018
  %v3453 = vsel %vm121, %v3437, %v3020
  %v3454 = vsel %vm121, %v3438, %v3022
  %vm3455 = vcmask 97280
  %v3456 = vsel %vm3455, %v3439, %v3056
  %v3457 = vsel %vm3455, %v3440, %v3058
  %v3458 = vsel %vm3455, %v3441, %v3060
  %v3459 = vsel %vm3455, %v3442, %v3062
  %v3460 = vsel %vm3455, %v3443, %v3064
  %v3461 = vsel %vm3455, %v3444, %v3066
  %v3462 = vsel %vm3455, %v3445, %v3068
  %v3463 = vsel %vm3455, %v3446, %v3070
  %v3464 = vsel %vm3455, %v3447, %v3072
  %v3465 = vsel %vm3455, %v3448, %v3074
  %v3466 = vsel %vm3455, %v3449, %v3076
  %v3467 = vsel %vm3455, %v3450, %v3078
  %v3468 = vsel %vm3455, %v3451, %v3080
  %v3469 = vsel %vm3455, %v3452, %v3082
  %v3470 = vsel %vm3455, %v3453, %v3084
  %v3471 = vsel %vm3455, %v3454, %v3086
  %v3472 = vsel %vm1110, %v3456, %v3120
  %v3473 = vsel %vm1110, %v3457, %v3122
  %v3474 = vsel %vm1110, %v3458, %v3124
  %v3475 = vsel %vm1110, %v3459, %v3126
  %v3476 = vsel %vm1110, %v3460, %v3128
  %v3477 = vsel %vm1110, %v3461, %v3130
  %v3478 = vsel %vm1110, %v3462, %v3132
  %v3479 = vsel %vm1110, %v3463, %v3134
  %v3480 = vsel %vm1110, %v3464, %v3136
  %v3481 = vsel %vm1110, %v3465, %v3138
  %v3482 = vsel %vm1110, %v3466, %v3140
  %v3483 = vsel %vm1110, %v3467, %v3142
  %v3484 = vsel %vm1110, %v3468, %v3144
  %v3485 = vsel %vm1110, %v3469, %v3146
  %v3486 = vsel %vm1110, %v3470, %v3148
  %v3487 = vsel %vm1110, %v3471, %v3150
  %vm3488 = vcmask 162816
  %v3489 = vsel %vm3488, %v3472, %v3184
  %v3490 = vsel %vm3488, %v3473, %v3186
  %v3491 = vsel %vm3488, %v3474, %v3188
  %v3492 = vsel %vm3488, %v3475, %v3190
  %v3493 = vsel %vm3488, %v3476, %v3192
  %v3494 = vsel %vm3488, %v3477, %v3194
  %v3495 = vsel %vm3488, %v3478, %v3196
  %v3496 = vsel %vm3488, %v3479, %v3198
  %v3497 = vsel %vm3488, %v3480, %v3200
  %v3498 = vsel %vm3488, %v3481, %v3202
  %v3499 = vsel %vm3488, %v3482, %v3204
  %v3500 = vsel %vm3488, %v3483, %v3206
  %v3501 = vsel %vm3488, %v3484, %v3208
  %v3502 = vsel %vm3488, %v3485, %v3210
  %v3503 = vsel %vm3488, %v3486, %v3212
  %v3504 = vsel %vm3488, %v3487, %v3214
  %v3505 = vsel %vm1127, %v3489, %v3248
  %v3506 = vsel %vm1127, %v3490, %v3250
  %v3507 = vsel %vm1127, %v3491, %v3252
  %v3508 = vsel %vm1127, %v3492, %v3254
  %v3509 = vsel %vm1127, %v3493, %v3256
  %v3510 = vsel %vm1127, %v3494, %v3258
  %v3511 = vsel %vm1127, %v3495, %v3260
  %v3512 = vsel %vm1127, %v3496, %v3262
  %v3513 = vsel %vm1127, %v3497, %v3264
  %v3514 = vsel %vm1127, %v3498, %v3266
  %v3515 = vsel %vm1127, %v3499, %v3268
  %v3516 = vsel %vm1127, %v3500, %v3270
  %v3517 = vsel %vm1127, %v3501, %v3272
  %v3518 = vsel %vm1127, %v3502, %v3274
  %v3519 = vsel %vm1127, %v3503, %v3276
  %v3520 = vsel %vm1127, %v3504, %v3278
  %vm3521 = vcmask 228352
  %v3522 = vsel %vm3521, %v3505, %v3312
  %v3523 = vsel %vm3521, %v3506, %v3314
  %v3524 = vsel %vm3521, %v3507, %v3316
  %v3525 = vsel %vm3521, %v3508, %v3318
  %v3526 = vsel %vm3521, %v3509, %v3320
  %v3527 = vsel %vm3521, %v3510, %v3322
  %v3528 = vsel %vm3521, %v3511, %v3324
  %v3529 = vsel %vm3521, %v3512, %v3326
  %v3530 = vsel %vm3521, %v3513, %v3328
  %v3531 = vsel %vm3521, %v3514, %v3330
  %v3532 = vsel %vm3521, %v3515, %v3332
  %v3533 = vsel %vm3521, %v3516, %v3334
  %v3534 = vsel %vm3521, %v3517, %v3336
  %v3535 = vsel %vm3521, %v3518, %v3338
  %v3536 = vsel %vm3521, %v3519, %v3340
  %v3537 = vsel %vm3521, %v3520, %v3342
  %v3538 = vsel %vm1144, %v3522, %v3376
  %v3539 = vsel %vm1144, %v3523, %v3378
  %v3540 = vsel %vm1144, %v3524, %v3380
  %v3541 = vsel %vm1144, %v3525, %v3382
  %v3542 = vsel %vm1144, %v3526, %v3384
  %v3543 = vsel %vm1144, %v3527, %v3386
  %v3544 = vsel %vm1144, %v3528, %v3388
  %v3545 = vsel %vm1144, %v3529, %v3390
  %v3546 = vsel %vm1144, %v3530, %v3392
  %v3547 = vsel %vm1144, %v3531, %v3394
  %v3548 = vsel %vm1144, %v3532, %v3396
  %v3549 = vsel %vm1144, %v3533, %v3398
  %v3550 = vsel %vm1144, %v3534, %v3400
  %v3551 = vsel %vm1144, %v3535, %v3402
  %v3552 = vsel %vm1144, %v3536, %v3404
  %v3553 = vsel %vm1144, %v3537, %v3406
  %v3554 = vpack.c.bf16 %v3539, %v3538
  %v3555 = vpack.c.bf16 %v3541, %v3540
  %v3556 = vpack.c.bf16 %v3543, %v3542
  %v3557 = vpack.c.bf16 %v3545, %v3544
  %v3558 = vpack.c.bf16 %v3547, %v3546
  %v3559 = vpack.c.bf16 %v3549, %v3548
  %v3560 = vpack.c.bf16 %v3551, %v3550
  %v3561 = vpack.c.bf16 %v3553, %v3552
  %v3562 = vld [vmem:[%s9] sm:$0xf]
  %v3563 = vld [vmem:[%s9 + $0x4] sm:$0xf]
  %v3564 = vld [vmem:[%s9 + $0x8] sm:$0xf]
  %v3565 = vld [vmem:[%s9 + $0xc] sm:$0xf]
  %v3566 = vld [vmem:[%s9 + $0x10] sm:$0x3]
  %v3567 = vld [vmem:[%s10] sm:$0x1]
  %v3569 = vperm.slane %v3567, 0
  %v3576 = vunpack.c.l.b16 %v3562
  %v3577 = vunpack.c.l.b16 %v3563
  %v3578 = vunpack.c.l.b16 %v3564
  %v3579 = vunpack.c.l.b16 %v3565
  %v3580 = vunpack.c.l.b16 %v3566
  %v3581 = vpack.c.b16 %v3577, %v3576
  %v3582 = vpack.c.b16 %v3579, %v3578
  %v3583 = vpack.c.b16 %v3580, %v3580
  %vm3586 = vcmask 293888
  %v3588 = vsel %vm3586, %v3554, 0
  %v3591 = vsel %vm3586, %v3555, 0
  %v3594 = vsel %vm3586, %v3556, 0
  %v3597 = vsel %vm3586, %v3557, 0
  %v3600 = vsel %vm3586, %v3558, 0
  %v3603 = vsel %vm3586, %v3559, 0
  %v3606 = vsel %vm3586, %v3560, 0
  %v3609 = vsel %vm3586, %v3561, 0
  %vm3611 = vcmask 1041408
  %v3613 = vsel %vm3611, %v3583, 0
  %3615 = vmatpush.bf16.msra.mxu0 0
  %3616 = vmatpush.bf16.msra.mxu0 0
  %3617 = vmatpush.bf16.msra.mxu0 0
  %3618 = vmatpush.bf16.msra.mxu0 0
  %3619 = vmatpush.bf16.msra.mxu0 0
  %3620 = vmatpush.bf16.msra.mxu0 %v3613
  %3621 = vmatpush.bf16.msra.mxu0 %v3582
  %3622 = vmatpush.bf16.msra.mxu0 %v3581
  %3623 = vmatmul.bf16.gmra.mxu0 %v3588
  %v3624 = vpop.f32.mrf.mxu0
  %v3625 = vadd.f32 %v3569, %v3624
  %v3626 = vpop.f32.mrf.mxu0
  %v3627 = vadd.f32 %v3569, %v3626
  %3628 = vmatmul.bf16.gmra.mxu0 %v3591
  %v3629 = vpop.f32.mrf.mxu0
  %v3630 = vadd.f32 %v3569, %v3629
  %v3631 = vpop.f32.mrf.mxu0
  %v3632 = vadd.f32 %v3569, %v3631
  %3633 = vmatmul.bf16.gmra.mxu0 %v3594
  %v3634 = vpop.f32.mrf.mxu0
  %v3635 = vadd.f32 %v3569, %v3634
  %v3636 = vpop.f32.mrf.mxu0
  %v3637 = vadd.f32 %v3569, %v3636
  %3638 = vmatmul.bf16.gmra.mxu0 %v3597
  %v3639 = vpop.f32.mrf.mxu0
  %v3640 = vadd.f32 %v3569, %v3639
  %v3641 = vpop.f32.mrf.mxu0
  %v3642 = vadd.f32 %v3569, %v3641
  %3643 = vmatmul.bf16.gmra.mxu0 %v3600
  %v3644 = vpop.f32.mrf.mxu0
  %v3645 = vadd.f32 %v3569, %v3644
  %v3646 = vpop.f32.mrf.mxu0
  %v3647 = vadd.f32 %v3569, %v3646
  %3648 = vmatmul.bf16.gmra.mxu0 %v3603
  %v3649 = vpop.f32.mrf.mxu0
  %v3650 = vadd.f32 %v3569, %v3649
  %v3651 = vpop.f32.mrf.mxu0
  %v3652 = vadd.f32 %v3569, %v3651
  %3653 = vmatmul.bf16.gmra.mxu0 %v3606
  %v3654 = vpop.f32.mrf.mxu0
  %v3655 = vadd.f32 %v3569, %v3654
  %v3656 = vpop.f32.mrf.mxu0
  %v3657 = vadd.f32 %v3569, %v3656
  %3658 = vmatmul.bf16.gmra.mxu0 %v3609
  %v3659 = vpop.f32.mrf.mxu0
  %v3660 = vadd.f32 %v3569, %v3659
  %v3661 = vpop.f32.mrf.mxu0
  %v3662 = vadd.f32 %v3569, %v3661
  %3663 = vdwg.mxu0
  %v3664 = vsel %vm1839, %v3625, 0.0
  %v3665 = vsel %vm1839, %v3627, 0.0
  %v3666 = vadd.f32 %v3664, %v3665
  %v3667 = vsel %vm1839, %v3630, 0.0
  %v3668 = vadd.f32 %v3666, %v3667
  %v3669 = vsel %vm1839, %v3632, 0.0
  %v3670 = vadd.f32 %v3668, %v3669
  %v3671 = vsel %vm1839, %v3635, 0.0
  %v3672 = vadd.f32 %v3670, %v3671
  %v3673 = vsel %vm1839, %v3637, 0.0
  %v3674 = vadd.f32 %v3672, %v3673
  %v3675 = vsel %vm1839, %v3640, 0.0
  %v3676 = vadd.f32 %v3674, %v3675
  %v3677 = vsel %vm1839, %v3642, 0.0
  %v3678 = vadd.f32 %v3676, %v3677
  %v3679 = vsel %vm1839, %v3645, 0.0
  %v3680 = vadd.f32 %v3678, %v3679
  %v3681 = vsel %vm1839, %v3647, 0.0
  %v3682 = vadd.f32 %v3680, %v3681
  %v3683 = vsel %vm1839, %v3650, 0.0
  %v3684 = vadd.f32 %v3682, %v3683
  %v3685 = vsel %vm1839, %v3652, 0.0
  %v3686 = vadd.f32 %v3684, %v3685
  %v3687 = vsel %vm1839, %v3655, 0.0
  %v3688 = vadd.f32 %v3686, %v3687
  %v3689 = vsel %vm1839, %v3657, 0.0
  %v3690 = vadd.f32 %v3688, %v3689
  %v3691 = vsel %vm1839, %v3660, 0.0
  %v3692 = vadd.f32 %v3690, %v3691
  %v3693 = vsel %vm1839, %v3662, 0.0
  %v3694 = vadd.f32 %v3692, %v3693
  %v3695 = vrot.slane %v3694, 4
  %v3696 = vadd.f32 %v3694, %v3695
  %v3697 = vrot.slane %v3696, 2
  %v3698 = vadd.f32 %v3696, %v3697
  %v3699 = vrot.slane %v3698, 1
  %v3700 = vadd.f32 %v3698, %v3699
  %v3701 = vmul.f32 %v3625, %v3625
  %v3702 = vmul.f32 %v3627, %v3627
  %v3703 = vmul.f32 %v3630, %v3630
  %v3704 = vmul.f32 %v3632, %v3632
  %v3705 = vmul.f32 %v3635, %v3635
  %v3706 = vmul.f32 %v3637, %v3637
  %v3707 = vmul.f32 %v3640, %v3640
  %v3708 = vmul.f32 %v3642, %v3642
  %v3709 = vmul.f32 %v3645, %v3645
  %v3710 = vmul.f32 %v3647, %v3647
  %v3711 = vmul.f32 %v3650, %v3650
  %v3712 = vmul.f32 %v3652, %v3652
  %v3713 = vmul.f32 %v3655, %v3655
  %v3714 = vmul.f32 %v3657, %v3657
  %v3715 = vmul.f32 %v3660, %v3660
  %v3716 = vmul.f32 %v3662, %v3662
  %v3717 = vsel %vm1839, %v3701, 0.0
  %v3718 = vsel %vm1839, %v3702, 0.0
  %v3719 = vadd.f32 %v3717, %v3718
  %v3720 = vsel %vm1839, %v3703, 0.0
  %v3721 = vadd.f32 %v3719, %v3720
  %v3722 = vsel %vm1839, %v3704, 0.0
  %v3723 = vadd.f32 %v3721, %v3722
  %v3724 = vsel %vm1839, %v3705, 0.0
  %v3725 = vadd.f32 %v3723, %v3724
  %v3726 = vsel %vm1839, %v3706, 0.0
  %v3727 = vadd.f32 %v3725, %v3726
  %v3728 = vsel %vm1839, %v3707, 0.0
  %v3729 = vadd.f32 %v3727, %v3728
  %v3730 = vsel %vm1839, %v3708, 0.0
  %v3731 = vadd.f32 %v3729, %v3730
  %v3732 = vsel %vm1839, %v3709, 0.0
  %v3733 = vadd.f32 %v3731, %v3732
  %v3734 = vsel %vm1839, %v3710, 0.0
  %v3735 = vadd.f32 %v3733, %v3734
  %v3736 = vsel %vm1839, %v3711, 0.0
  %v3737 = vadd.f32 %v3735, %v3736
  %v3738 = vsel %vm1839, %v3712, 0.0
  %v3739 = vadd.f32 %v3737, %v3738
  %v3740 = vsel %vm1839, %v3713, 0.0
  %v3741 = vadd.f32 %v3739, %v3740
  %v3742 = vsel %vm1839, %v3714, 0.0
  %v3743 = vadd.f32 %v3741, %v3742
  %v3744 = vsel %vm1839, %v3715, 0.0
  %v3745 = vadd.f32 %v3743, %v3744
  %v3746 = vsel %vm1839, %v3716, 0.0
  %v3747 = vadd.f32 %v3745, %v3746
  %v3748 = vrot.slane %v3747, 4
  %v3749 = vadd.f32 %v3747, %v3748
  %v3750 = vrot.slane %v3749, 2
  %v3751 = vadd.f32 %v3749, %v3750
  %v3752 = vrot.slane %v3751, 1
  %v3753 = vadd.f32 %v3751, %v3752
  %v3754 = vmul.f32 %v3700, 0.0078125
  %v3755 = vmul.f32 %v3753, 0.0078125
  %v3756 = vmul.f32 %v3754, %v3754
  %v3757 = vsub.f32 %v3755, %v3756
  %v3758 = vmax.f32 %v3757, 0.0
  %v3759 = vsub.f32 %v3625, %v3754
  %v3760 = vsub.f32 %v3627, %v3754
  %v3761 = vsub.f32 %v3630, %v3754
  %v3762 = vsub.f32 %v3632, %v3754
  %v3763 = vsub.f32 %v3635, %v3754
  %v3764 = vsub.f32 %v3637, %v3754
  %v3765 = vsub.f32 %v3640, %v3754
  %v3766 = vsub.f32 %v3642, %v3754
  %v3767 = vsub.f32 %v3645, %v3754
  %v3768 = vsub.f32 %v3647, %v3754
  %v3769 = vsub.f32 %v3650, %v3754
  %v3770 = vsub.f32 %v3652, %v3754
  %v3771 = vsub.f32 %v3655, %v3754
  %v3772 = vsub.f32 %v3657, %v3754
  %v3773 = vsub.f32 %v3660, %v3754
  %v3774 = vsub.f32 %v3662, %v3754
  %v3775 = vld [vmem:[%s11] sm:$0x1]
  %v3776 = vadd.f32 %v3758, 1e-05
  %v3777 = vrsqrt.pop %v3776
  %v3778 = vmul.f32 %v3777, %v3776
  %v3779 = vmul.f32 %v3778, %v3777
  %v3780 = vmul.f32 0.5, %v3779
  %v3781 = vsub.f32 1.5, %v3780
  %v3782 = vmul.f32 %v3777, %v3781
  %vm3783 = vweird.f32 %v3776
  %vm3784 = vweird.f32 %v3777
  %vm3785 = vmor %vm3783, %vm3784
  %v3786 = vsel %vm3785, %v3777, %v3782
  %v3787 = vmul.f32 %v3775, %v3786
  %v3789 = vperm.slane %v3787, 0
  %v3791 = vmul.f32 %v3759, %v3789
  %v3792 = vmul.f32 %v3760, %v3789
  %v3793 = vmul.f32 %v3761, %v3789
  %v3794 = vmul.f32 %v3762, %v3789
  %v3795 = vmul.f32 %v3763, %v3789
  %v3796 = vmul.f32 %v3764, %v3789
  %v3797 = vmul.f32 %v3765, %v3789
  %v3798 = vmul.f32 %v3766, %v3789
  %v3799 = vmul.f32 %v3767, %v3789
  %v3800 = vmul.f32 %v3768, %v3789
  %v3801 = vmul.f32 %v3769, %v3789
  %v3802 = vmul.f32 %v3770, %v3789
  %v3803 = vmul.f32 %v3771, %v3789
  %v3804 = vmul.f32 %v3772, %v3789
  %v3805 = vmul.f32 %v3773, %v3789
  %v3806 = vmul.f32 %v3774, %v3789
  %v3807 = vld [vmem:[%s12] sm:$0x1]
  %v3809 = vperm.slane %v3807, 0
  %v3811 = vadd.f32 %v3791, %v3809
  %v3812 = vadd.f32 %v3792, %v3809
  %v3813 = vadd.f32 %v3793, %v3809
  %v3814 = vadd.f32 %v3794, %v3809
  %v3815 = vadd.f32 %v3795, %v3809
  %v3816 = vadd.f32 %v3796, %v3809
  %v3817 = vadd.f32 %v3797, %v3809
  %v3818 = vadd.f32 %v3798, %v3809
  %v3819 = vadd.f32 %v3799, %v3809
  %v3820 = vadd.f32 %v3800, %v3809
  %v3821 = vadd.f32 %v3801, %v3809
  %v3822 = vadd.f32 %v3802, %v3809
  %v3823 = vadd.f32 %v3803, %v3809
  %v3824 = vadd.f32 %v3804, %v3809
  %v3825 = vadd.f32 %v3805, %v3809
  %v3826 = vadd.f32 %v3806, %v3809
  %v3827 = vmax.f32 %v3811, 0.0
  %v3828 = vmax.f32 %v3812, 0.0
  %v3829 = vmax.f32 %v3813, 0.0
  %v3830 = vmax.f32 %v3814, 0.0
  %v3831 = vmax.f32 %v3815, 0.0
  %v3832 = vmax.f32 %v3816, 0.0
  %v3833 = vmax.f32 %v3817, 0.0
  %v3834 = vmax.f32 %v3818, 0.0
  %v3835 = vmax.f32 %v3819, 0.0
  %v3836 = vmax.f32 %v3820, 0.0
  %v3837 = vmax.f32 %v3821, 0.0
  %v3838 = vmax.f32 %v3822, 0.0
  %v3839 = vmax.f32 %v3823, 0.0
  %v3840 = vmax.f32 %v3824, 0.0
  %v3841 = vmax.f32 %v3825, 0.0
  %v3842 = vmax.f32 %v3826, 0.0
  %v3843 = vpack.c.bf16 %v3828, %v3827
  %v3844 = vpack.c.bf16 %v3830, %v3829
  %v3845 = vpack.c.bf16 %v3832, %v3831
  %v3846 = vpack.c.bf16 %v3834, %v3833
  %v3847 = vpack.c.bf16 %v3836, %v3835
  %v3848 = vpack.c.bf16 %v3838, %v3837
  %v3849 = vpack.c.bf16 %v3840, %v3839
  %v3850 = vpack.c.bf16 %v3842, %v3841
  %v3851 = vld [vmem:[%s13] sm:$0x3]
  %v3852 = vld [vmem:[%s14] sm:$0x1]
  %v3854 = vperm.slane %v3852, 0
  %v3857 = vsel %vm1839, %v3843, 0
  %v3860 = vsel %vm1839, %v3844, 0
  %v3863 = vsel %vm1839, %v3845, 0
  %v3866 = vsel %vm1839, %v3846, 0
  %v3869 = vsel %vm1839, %v3847, 0
  %v3872 = vsel %vm1839, %v3848, 0
  %v3875 = vsel %vm1839, %v3849, 0
  %v3878 = vsel %vm1839, %v3850, 0
  %v3881 = vsel %vm3611, %v3851, 0
  %3883 = vmatpush.bf16.msra.mxu0 0
  %3884 = vmatpush.bf16.msra.mxu0 0
  %3885 = vmatpush.bf16.msra.mxu0 0
  %3886 = vmatpush.bf16.msra.mxu0 0
  %3887 = vmatpush.bf16.msra.mxu0 0
  %3888 = vmatpush.bf16.msra.mxu0 0
  %3889 = vmatpush.bf16.msra.mxu0 0
  %3890 = vmatpush.bf16.msra.mxu0 %v3881
  %3891 = vmatmul.bf16.gmra.mxu0 %v3857
  %v3892 = vpop.f32.mrf.mxu0
  %v3893 = vadd.f32 %v3854, %v3892
  %v3894 = vpop.f32.mrf.mxu0
  %v3895 = vadd.f32 %v3854, %v3894
  %3896 = vmatmul.bf16.gmra.mxu0 %v3860
  %v3897 = vpop.f32.mrf.mxu0
  %v3898 = vadd.f32 %v3854, %v3897
  %v3899 = vpop.f32.mrf.mxu0
  %v3900 = vadd.f32 %v3854, %v3899
  %3901 = vmatmul.bf16.gmra.mxu0 %v3863
  %v3902 = vpop.f32.mrf.mxu0
  %v3903 = vadd.f32 %v3854, %v3902
  %v3904 = vpop.f32.mrf.mxu0
  %v3905 = vadd.f32 %v3854, %v3904
  %3906 = vmatmul.bf16.gmra.mxu0 %v3866
  %v3907 = vpop.f32.mrf.mxu0
  %v3908 = vadd.f32 %v3854, %v3907
  %v3909 = vpop.f32.mrf.mxu0
  %v3910 = vadd.f32 %v3854, %v3909
  %3911 = vmatmul.bf16.gmra.mxu0 %v3869
  %v3912 = vpop.f32.mrf.mxu0
  %v3913 = vadd.f32 %v3854, %v3912
  %v3914 = vpop.f32.mrf.mxu0
  %v3915 = vadd.f32 %v3854, %v3914
  %3916 = vmatmul.bf16.gmra.mxu0 %v3872
  %v3917 = vpop.f32.mrf.mxu0
  %v3918 = vadd.f32 %v3854, %v3917
  %v3919 = vpop.f32.mrf.mxu0
  %v3920 = vadd.f32 %v3854, %v3919
  %3921 = vmatmul.bf16.gmra.mxu0 %v3875
  %v3922 = vpop.f32.mrf.mxu0
  %v3923 = vadd.f32 %v3854, %v3922
  %v3924 = vpop.f32.mrf.mxu0
  %v3925 = vadd.f32 %v3854, %v3924
  %3926 = vmatmul.bf16.gmra.mxu0 %v3878
  %v3927 = vpop.f32.mrf.mxu0
  %v3928 = vadd.f32 %v3854, %v3927
  %v3929 = vpop.f32.mrf.mxu0
  %v3930 = vadd.f32 %v3854, %v3929
  %3931 = vdwg.mxu0
  %v3932 = vsel %vm1110, %v3893, 0.0
  %v3933 = vsel %vm1110, %v3895, 0.0
  %v3934 = vadd.f32 %v3932, %v3933
  %v3935 = vsel %vm1110, %v3898, 0.0
  %v3936 = vadd.f32 %v3934, %v3935
  %v3937 = vsel %vm1110, %v3900, 0.0
  %v3938 = vadd.f32 %v3936, %v3937
  %v3939 = vsel %vm1110, %v3903, 0.0
  %v3940 = vadd.f32 %v3938, %v3939
  %v3941 = vsel %vm1110, %v3905, 0.0
  %v3942 = vadd.f32 %v3940, %v3941
  %v3943 = vsel %vm1110, %v3908, 0.0
  %v3944 = vadd.f32 %v3942, %v3943
  %v3945 = vsel %vm1110, %v3910, 0.0
  %v3946 = vadd.f32 %v3944, %v3945
  %v3947 = vsel %vm1110, %v3913, 0.0
  %v3948 = vadd.f32 %v3946, %v3947
  %v3949 = vsel %vm1110, %v3915, 0.0
  %v3950 = vadd.f32 %v3948, %v3949
  %v3951 = vsel %vm1110, %v3918, 0.0
  %v3952 = vadd.f32 %v3950, %v3951
  %v3953 = vsel %vm1110, %v3920, 0.0
  %v3954 = vadd.f32 %v3952, %v3953
  %v3955 = vsel %vm1110, %v3923, 0.0
  %v3956 = vadd.f32 %v3954, %v3955
  %v3957 = vsel %vm1110, %v3925, 0.0
  %v3958 = vadd.f32 %v3956, %v3957
  %v3959 = vsel %vm1110, %v3928, 0.0
  %v3960 = vadd.f32 %v3958, %v3959
  %v3961 = vsel %vm1110, %v3930, 0.0
  %v3962 = vadd.f32 %v3960, %v3961
  %v3963 = vrot.slane %v3962, 4
  %v3964 = vadd.f32 %v3962, %v3963
  %v3965 = vrot.slane %v3964, 2
  %v3966 = vadd.f32 %v3964, %v3965
  %v3967 = vrot.slane %v3966, 1
  %v3968 = vadd.f32 %v3966, %v3967
  %v3969 = vmul.f32 %v3893, %v3893
  %v3970 = vmul.f32 %v3895, %v3895
  %v3971 = vmul.f32 %v3898, %v3898
  %v3972 = vmul.f32 %v3900, %v3900
  %v3973 = vmul.f32 %v3903, %v3903
  %v3974 = vmul.f32 %v3905, %v3905
  %v3975 = vmul.f32 %v3908, %v3908
  %v3976 = vmul.f32 %v3910, %v3910
  %v3977 = vmul.f32 %v3913, %v3913
  %v3978 = vmul.f32 %v3915, %v3915
  %v3979 = vmul.f32 %v3918, %v3918
  %v3980 = vmul.f32 %v3920, %v3920
  %v3981 = vmul.f32 %v3923, %v3923
  %v3982 = vmul.f32 %v3925, %v3925
  %v3983 = vmul.f32 %v3928, %v3928
  %v3984 = vmul.f32 %v3930, %v3930
  %v3985 = vsel %vm1110, %v3969, 0.0
  %v3986 = vsel %vm1110, %v3970, 0.0
  %v3987 = vadd.f32 %v3985, %v3986
  %v3988 = vsel %vm1110, %v3971, 0.0
  %v3989 = vadd.f32 %v3987, %v3988
  %v3990 = vsel %vm1110, %v3972, 0.0
  %v3991 = vadd.f32 %v3989, %v3990
  %v3992 = vsel %vm1110, %v3973, 0.0
  %v3993 = vadd.f32 %v3991, %v3992
  %v3994 = vsel %vm1110, %v3974, 0.0
  %v3995 = vadd.f32 %v3993, %v3994
  %v3996 = vsel %vm1110, %v3975, 0.0
  %v3997 = vadd.f32 %v3995, %v3996
  %v3998 = vsel %vm1110, %v3976, 0.0
  %v3999 = vadd.f32 %v3997, %v3998
  %v4000 = vsel %vm1110, %v3977, 0.0
  %v4001 = vadd.f32 %v3999, %v4000
  %v4002 = vsel %vm1110, %v3978, 0.0
  %v4003 = vadd.f32 %v4001, %v4002
  %v4004 = vsel %vm1110, %v3979, 0.0
  %v4005 = vadd.f32 %v4003, %v4004
  %v4006 = vsel %vm1110, %v3980, 0.0
  %v4007 = vadd.f32 %v4005, %v4006
  %v4008 = vsel %vm1110, %v3981, 0.0
  %v4009 = vadd.f32 %v4007, %v4008
  %v4010 = vsel %vm1110, %v3982, 0.0
  %v4011 = vadd.f32 %v4009, %v4010
  %v4012 = vsel %vm1110, %v3983, 0.0
  %v4013 = vadd.f32 %v4011, %v4012
  %v4014 = vsel %vm1110, %v3984, 0.0
  %v4015 = vadd.f32 %v4013, %v4014
  %v4016 = vrot.slane %v4015, 4
  %v4017 = vadd.f32 %v4015, %v4016
  %v4018 = vrot.slane %v4017, 2
  %v4019 = vadd.f32 %v4017, %v4018
  %v4020 = vrot.slane %v4019, 1
  %v4021 = vadd.f32 %v4019, %v4020
  %v4022 = vmul.f32 %v3968, 0.0078125
  %v4023 = vmul.f32 %v4021, 0.0078125
  %v4024 = vmul.f32 %v4022, %v4022
  %v4025 = vsub.f32 %v4023, %v4024
  %v4026 = vmax.f32 %v4025, 0.0
  %v4027 = vsub.f32 %v3893, %v4022
  %v4028 = vsub.f32 %v3895, %v4022
  %v4029 = vsub.f32 %v3898, %v4022
  %v4030 = vsub.f32 %v3900, %v4022
  %v4031 = vsub.f32 %v3903, %v4022
  %v4032 = vsub.f32 %v3905, %v4022
  %v4033 = vsub.f32 %v3908, %v4022
  %v4034 = vsub.f32 %v3910, %v4022
  %v4035 = vsub.f32 %v3913, %v4022
  %v4036 = vsub.f32 %v3915, %v4022
  %v4037 = vsub.f32 %v3918, %v4022
  %v4038 = vsub.f32 %v3920, %v4022
  %v4039 = vsub.f32 %v3923, %v4022
  %v4040 = vsub.f32 %v3925, %v4022
  %v4041 = vsub.f32 %v3928, %v4022
  %v4042 = vsub.f32 %v3930, %v4022
  %v4043 = vld [vmem:[%s15] sm:$0x1]
  %v4044 = vadd.f32 %v4026, 1e-05
  %v4045 = vrsqrt.pop %v4044
  %v4046 = vmul.f32 %v4045, %v4044
  %v4047 = vmul.f32 %v4046, %v4045
  %v4048 = vmul.f32 0.5, %v4047
  %v4049 = vsub.f32 1.5, %v4048
  %v4050 = vmul.f32 %v4045, %v4049
  %vm4051 = vweird.f32 %v4044
  %vm4052 = vweird.f32 %v4045
  %vm4053 = vmor %vm4051, %vm4052
  %v4054 = vsel %vm4053, %v4045, %v4050
  %v4055 = vmul.f32 %v4043, %v4054
  %v4057 = vperm.slane %v4055, 0
  %v4059 = vmul.f32 %v4027, %v4057
  %v4060 = vmul.f32 %v4028, %v4057
  %v4061 = vmul.f32 %v4029, %v4057
  %v4062 = vmul.f32 %v4030, %v4057
  %v4063 = vmul.f32 %v4031, %v4057
  %v4064 = vmul.f32 %v4032, %v4057
  %v4065 = vmul.f32 %v4033, %v4057
  %v4066 = vmul.f32 %v4034, %v4057
  %v4067 = vmul.f32 %v4035, %v4057
  %v4068 = vmul.f32 %v4036, %v4057
  %v4069 = vmul.f32 %v4037, %v4057
  %v4070 = vmul.f32 %v4038, %v4057
  %v4071 = vmul.f32 %v4039, %v4057
  %v4072 = vmul.f32 %v4040, %v4057
  %v4073 = vmul.f32 %v4041, %v4057
  %v4074 = vmul.f32 %v4042, %v4057
  %v4075 = vld [vmem:[%s16] sm:$0x1]
  %v4077 = vperm.slane %v4075, 0
  %v4079 = vadd.f32 %v4059, %v4077
  %v4080 = vadd.f32 %v4060, %v4077
  %v4081 = vadd.f32 %v4061, %v4077
  %v4082 = vadd.f32 %v4062, %v4077
  %v4083 = vadd.f32 %v4063, %v4077
  %v4084 = vadd.f32 %v4064, %v4077
  %v4085 = vadd.f32 %v4065, %v4077
  %v4086 = vadd.f32 %v4066, %v4077
  %v4087 = vadd.f32 %v4067, %v4077
  %v4088 = vadd.f32 %v4068, %v4077
  %v4089 = vadd.f32 %v4069, %v4077
  %v4090 = vadd.f32 %v4070, %v4077
  %v4091 = vadd.f32 %v4071, %v4077
  %v4092 = vadd.f32 %v4072, %v4077
  %v4093 = vadd.f32 %v4073, %v4077
  %v4094 = vadd.f32 %v4074, %v4077
  %v4095 = vmax.f32 %v4079, 0.0
  %v4096 = vmax.f32 %v4080, 0.0
  %v4097 = vmax.f32 %v4081, 0.0
  %v4098 = vmax.f32 %v4082, 0.0
  %v4099 = vmax.f32 %v4083, 0.0
  %v4100 = vmax.f32 %v4084, 0.0
  %v4101 = vmax.f32 %v4085, 0.0
  %v4102 = vmax.f32 %v4086, 0.0
  %v4103 = vmax.f32 %v4087, 0.0
  %v4104 = vmax.f32 %v4088, 0.0
  %v4105 = vmax.f32 %v4089, 0.0
  %v4106 = vmax.f32 %v4090, 0.0
  %v4107 = vmax.f32 %v4091, 0.0
  %v4108 = vmax.f32 %v4092, 0.0
  %v4109 = vmax.f32 %v4093, 0.0
  %v4110 = vmax.f32 %v4094, 0.0
  %v4111 = vadd.f32 %v4095, %v1518
  %v4112 = vadd.f32 %v4096, %v1519
  %v4113 = vadd.f32 %v4097, %v1520
  %v4114 = vadd.f32 %v4098, %v1521
  %v4115 = vadd.f32 %v4099, %v1522
  %v4116 = vadd.f32 %v4100, %v1523
  %v4117 = vadd.f32 %v4101, %v1524
  %v4118 = vadd.f32 %v4102, %v1525
  %v4119 = vadd.f32 %v4103, %v1526
  %v4120 = vadd.f32 %v4104, %v1527
  %v4121 = vadd.f32 %v4105, %v1528
  %v4122 = vadd.f32 %v4106, %v1529
  %v4123 = vadd.f32 %v4107, %v1530
  %v4124 = vadd.f32 %v4108, %v1531
  %v4125 = vadd.f32 %v4109, %v1532
  %v4126 = vadd.f32 %v4110, %v1533
  %v4127 = vmax.f32 %v4111, 0.0
  %v4128 = vmax.f32 %v4112, 0.0
  %v4129 = vmax.f32 %v4113, 0.0
  %v4130 = vmax.f32 %v4114, 0.0
  %v4131 = vmax.f32 %v4115, 0.0
  %v4132 = vmax.f32 %v4116, 0.0
  %v4133 = vmax.f32 %v4117, 0.0
  %v4134 = vmax.f32 %v4118, 0.0
  %v4135 = vmax.f32 %v4119, 0.0
  %v4136 = vmax.f32 %v4120, 0.0
  %v4137 = vmax.f32 %v4121, 0.0
  %v4138 = vmax.f32 %v4122, 0.0
  %v4139 = vmax.f32 %v4123, 0.0
  %v4140 = vmax.f32 %v4124, 0.0
  %v4141 = vmax.f32 %v4125, 0.0
  %v4142 = vmax.f32 %v4126, 0.0
  %4143 = vxpose.xlu0.b32.start [1/16] %v4127, 128
  %4144 = vxpose.xlu0.b32.cont [2/16] %v4128, 128
  %4145 = vxpose.xlu0.b32.cont [3/16] %v4129, 128
  %4146 = vxpose.xlu0.b32.cont [4/16] %v4130, 128
  %4147 = vxpose.xlu0.b32.cont [5/16] %v4131, 128
  %4148 = vxpose.xlu0.b32.cont [6/16] %v4132, 128
  %4149 = vxpose.xlu0.b32.cont [7/16] %v4133, 128
  %4150 = vxpose.xlu0.b32.cont [8/16] %v4134, 128
  %4151 = vxpose.xlu0.b32.cont [9/16] %v4135, 128
  %4152 = vxpose.xlu0.b32.cont [10/16] %v4136, 128
  %4153 = vxpose.xlu0.b32.cont [11/16] %v4137, 128
  %4154 = vxpose.xlu0.b32.cont [12/16] %v4138, 128
  %4155 = vxpose.xlu0.b32.cont [13/16] %v4139, 128
  %4156 = vxpose.xlu0.b32.cont [14/16] %v4140, 128
  %4157 = vxpose.xlu0.b32.cont [15/16] %v4141, 128
  %4158 = vxpose.xlu0.b32.end [16/16] %v4142, 128
  %v4159 = vpop.trf.xlu0
  %v4160 = vpop.trf.xlu0
  %v4161 = vpop.trf.xlu0
  %v4162 = vpop.trf.xlu0
  %v4163 = vpop.trf.xlu0
  %v4164 = vpop.trf.xlu0
  %v4165 = vpop.trf.xlu0
  %v4166 = vpop.trf.xlu0
  %v4167 = vpop.trf.xlu0
  %v4168 = vpop.trf.xlu0
  %v4169 = vpop.trf.xlu0
  %v4170 = vpop.trf.xlu0
  %v4171 = vpop.trf.xlu0
  %v4172 = vpop.trf.xlu0
  %v4173 = vpop.trf.xlu0
  %v4174 = vpop.trf.xlu0
  %4175 = vst [vmem:[%s17] sm:$0xff] %v4159
  %4176 = vst [vmem:[%s17 + $0x8] sm:$0xff] %v4160
  // Predicated region
  $region70: #{resnet_bottleneck_forward.1} parent=0 // pred_check
    _
  $region71: #{resnet_bottleneck_forward.1} parent=0 // pred_check_branch
    %4178 = sbr.rel (0) target = $region73
  $region72: #{resnet_bottleneck_forward.1} parent=0 // pred_region
    _
  $region73: #{resnet_bottleneck_forward.1} parent=0 // pred_fallthru
    _
  // Predicated region
  $region74: #{resnet_bottleneck_forward.1} parent=0 // pred_check
    _
  $region75: #{resnet_bottleneck_forward.1} parent=0 // pred_check_branch
    %4180 = sbr.rel (0) target = $region77
  $region76: #{resnet_bottleneck_forward.1} parent=0 // pred_region
    _
  $region77: #{resnet_bottleneck_forward.1} parent=0 // pred_fallthru
    _

</llo_original>
